<compile_context>
chip_gen: v7x
topology: tpu7x:2x2x1
jax: 0.10.0
libtpu: 0.0.40
codegen_flags: <defaults>
</compile_context>

<pallas_src>
import jax
import jax.numpy as jnp
from jax import lax
from jax.experimental import pallas as pl
from jax.experimental.pallas import tpu as pltpu

EPS = 1e-5          # torch.nn.GroupNorm default eps
NEG_SLOPE = 0.2     # LeakyReLU(0.2)
_HP = lax.Precision.HIGHEST


def get_num_groups(num_channels):
    # TODO(synk): get_num_groups is not defined in the provided source; use a
    # deterministic choice (~C/4) that always divides the channel count.
    g = max(1, num_channels // 4)
    while num_channels % g != 0:
        g -= 1
    return g


# ----------------------------------------------------------------------------
# In-kernel building block: GroupNorm (two-pass centered variance) +
# LeakyReLU(0.2), channel-major (C, S).  `proj` is the (C, C) 0/1 same-group
# indicator matrix, so proj @ (per-channel sums) gives per-group sums
# broadcast back onto channel rows.
# ----------------------------------------------------------------------------
def _gn_lrelu(h, proj, gamma, beta, inv_cnt):
    row_sum = jnp.sum(h, axis=1, keepdims=True)                          # (C, 1)
    mean_c = jnp.dot(proj, row_sum, preferred_element_type=jnp.float32,
                     precision=_HP) * inv_cnt                            # (C, 1)
    centered = h - mean_c
    row_sq = jnp.sum(centered * centered, axis=1, keepdims=True)         # (C, 1)
    var_c = jnp.dot(proj, row_sq, preferred_element_type=jnp.float32,
                    precision=_HP) * inv_cnt                             # (C, 1)
    y = centered * lax.rsqrt(var_c + EPS) * gamma + beta
    return jnp.where(y > 0, y, NEG_SLOPE * y)


def _build_kernel(S, HW, W, inv1, inv2, inv3):
    def kernel(x_ref, p1_ref, g1_ref, b1_ref, w1_ref,
               p2_ref, g2_ref, b2_ref, w2s_ref, mask_ref,
               p3_ref, g3_ref, b3_ref, w3_ref,
               out_ref):
        x = x_ref[0]                                                     # (C, S)

        # ---- GN1 -> LReLU -> 1x1x1 conv (C -> F1), bf16 in / f32 acc -------
        a0 = _gn_lrelu(x, p1_ref[...], g1_ref[...], b1_ref[...], inv1)
        h1 = jnp.dot(w1_ref[...], a0.astype(jnp.bfloat16),
                     preferred_element_type=jnp.float32)                 # (F1, S)

        # ---- GN2 -> LReLU ---------------------------------------------------
        a1 = _gn_lrelu(h1, p2_ref[...], g2_ref[...], b2_ref[...], inv2)

        # ---- 3x3x3 'SAME' conv (F1 -> F2): 27 rolled + masked taps stacked
        # on the sublane axis, then ONE MXU matmul (F2, 27*F1) @ (27*F1, S).
        # The per-tap mask zeroes out-of-bounds neighbours (including circular
        # wrap-around introduced by the roll).
        taps = []
        for kd in range(3):
            for kh in range(3):
                for kw in range(3):
                    t = kd * 9 + kh * 3 + kw
                    off = (kd - 1) * HW + (kh - 1) * W + (kw - 1)
                    shifted = a1 if off == 0 else pltpu.roll(a1, (-off) % S, axis=1)
                    taps.append((shifted * mask_ref[t]).astype(jnp.bfloat16))
        stacked = jnp.concatenate(taps, axis=0)                          # (27*F1, S)
        h2 = jnp.dot(w2s_ref[...], stacked,
                     preferred_element_type=jnp.float32)                 # (F2, S)

        # ---- GN3 -> LReLU -> 1x1x1 conv (F2 -> C) + residual ----------------
        a2 = _gn_lrelu(h2, p3_ref[...], g3_ref[...], b3_ref[...], inv3)
        h3 = jnp.dot(w3_ref[...], a2.astype(jnp.bfloat16),
                     preferred_element_type=jnp.float32)                 # (C, S)
        out_ref[0] = x + h3

    return kernel


def _make_tap_masks(D, H, W):
    """(27, 1, S) f32 validity masks for the 27 conv taps (static metadata)."""
    s = jnp.arange(D * H * W)
    d = s // (H * W)
    h = (s // W) % H
    w = s % W
    rows = []
    for kd in range(3):
        for kh in range(3):
            for kw in range(3):
                od, oh, ow = kd - 1, kh - 1, kw - 1
                ok = ((d + od >= 0) & (d + od < D) &
                      (h + oh >= 0) & (h + oh < H) &
                      (w + ow >= 0) & (w + ow < W))
                rows.append(ok)
    return jnp.stack(rows).astype(jnp.float32).reshape(27, 1, D * H * W)


def _param_spec(p):
    nd = p.ndim
    return pl.BlockSpec(p.shape, lambda n, _nd=nd: (0,) * _nd)


def res_block3d_forward(x_ncdhw, params):
    """ResBlock3d forward; input/output are PyTorch-style NCDHW (float32)."""
    N, C, D, H, W = x_ncdhw.shape
    S = D * H * W
    F1 = params["w1t"].shape[0]
    F2 = params["w3t"].shape[1]
    G1, G2, G3 = get_num_groups(C), get_num_groups(F1), get_num_groups(F2)
    inv1 = 1.0 / ((C // G1) * S)
    inv2 = 1.0 / ((F1 // G2) * S)
    inv3 = 1.0 / ((F2 // G3) * S)

    masks = _make_tap_masks(D, H, W)
    kernel = _build_kernel(S, H * W, W, inv1, inv2, inv3)

    # bf16 weights for the MXU (cast once host-side, halves their DMA).
    w1b = params["w1t"].astype(jnp.bfloat16)                             # (F1, C)
    w3b = params["w3t"].astype(jnp.bfloat16)                             # (C, F2)
    # Tap-major flat conv weight: column t*F1 + f1 == w2[:, f1, kd, kh, kw].
    w2s = jnp.transpose(params["w2"], (0, 2, 3, 4, 1)).reshape(F2, 27 * F1)
    w2s = w2s.astype(jnp.bfloat16)                                       # (F2, 27*F1)

    # TODO(synk): for large volumes (per-sample activations approaching the VMEM
    # budget, esp. v7x's 64 MiB) this per-sample block must become an S-tiled
    # grid with halo exchange and a two-pass (stats, then normalize) GroupNorm.
    extras = [params["P1"], params["g1"], params["b1"], w1b,
              params["P2"], params["g2"], params["b2"], w2s, masks,
              params["P3"], params["g3"], params["b3"], w3b]

    x_flat = x_ncdhw.reshape(N, C, S)            # channel-major, spatial on lanes
    out_flat = pl.pallas_call(
        kernel,
        out_shape=jax.ShapeDtypeStruct((N, C, S), jnp.float32),
        grid=(N,),
        in_specs=[pl.BlockSpec((1, C, S), lambda n: (n, 0, 0))]
                 + [_param_spec(e) for e in extras],
        out_specs=pl.BlockSpec((1, C, S), lambda n: (n, 0, 0)),
        compiler_params=pltpu.CompilerParams(dimension_semantics=("parallel",)),
    )(x_flat, *extras)
    return out_flat.reshape(N, C, D, H, W)


# ----------------------------------------------------------------------------
# Deterministic parameter init (synthetic; Conv3d bias=False since group_norm=True)
# ----------------------------------------------------------------------------
def init_params(key, C, F1, F2):
    ks = jax.random.split(key, 9)
    G1, G2, G3 = get_num_groups(C), get_num_groups(F1), get_num_groups(F2)

    def proj(c, g):
        gid = jnp.arange(c) // (c // g)
        return (gid[:, None] == gid[None, :]).astype(jnp.float32)   # same-group 0/1

    return dict(
        g1=0.5 + jax.random.uniform(ks[0], (C, 1), jnp.float32),
        b1=0.1 * jax.random.normal(ks[1], (C, 1), jnp.float32),
        w1t=0.2 * jax.random.normal(ks[2], (F1, C), jnp.float32),           # (out, in)
        g2=0.5 + jax.random.uniform(ks[3], (F1, 1), jnp.float32),
        b2=0.1 * jax.random.normal(ks[4], (F1, 1), jnp.float32),
        w2=0.1 * jax.random.normal(ks[5], (F2, F1, 3, 3, 3), jnp.float32),  # OIDHW
        g3=0.5 + jax.random.uniform(ks[6], (F2, 1), jnp.float32),
        b3=0.1 * jax.random.normal(ks[7], (F2, 1), jnp.float32),
        w3t=0.2 * jax.random.normal(ks[8], (C, F2), jnp.float32),           # (out, in)
        P1=proj(C, G1), P2=proj(F1, G2), P3=proj(F2, G3),
    )


# ----------------------------------------------------------------------------
# Pure-JAX reference (mirrors PyTorch semantics) for correctness checking
# ----------------------------------------------------------------------------
def reference_forward(x, p):
    N, C, D, H, W = x.shape
    F1 = p["w1t"].shape[0]
    F2 = p["w3t"].shape[1]
    G1, G2, G3 = get_num_groups(C), get_num_groups(F1), get_num_groups(F2)

    def gn(h, G, gamma, beta):
        n, c = h.shape[:2]
        hg = h.reshape(n, G, -1)
        mean = hg.mean(axis=2, keepdims=True)
        var = ((hg - mean) ** 2).mean(axis=2, keepdims=True)
        hn = ((hg - mean) / jnp.sqrt(var + EPS)).reshape(h.shape)
        return hn * gamma.reshape(1, c, 1, 1, 1) + beta.reshape(1, c, 1, 1, 1)

    lrelu = lambda t: jnp.where(t > 0, t, NEG_SLOPE * t)

    a0 = lrelu(gn(x, G1, p["g1"], p["b1"]))
    h1 = jnp.einsum("ncdhw,fc->nfdhw", a0, p["w1t"], precision=_HP)
    a1 = lrelu(gn(h1, G2, p["g2"], p["b2"]))
    h2 = lax.conv_general_dilated(
        a1, p["w2"], window_strides=(1, 1, 1),
        padding=((1, 1), (1, 1), (1, 1)),
        dimension_numbers=("NCDHW", "OIDHW", "NCDHW"), precision=_HP)
    a2 = lrelu(gn(h2, G3, p["g3"], p["b3"]))
    h3 = jnp.einsum("nfdhw,cf->ncdhw", a2, p["w3t"], precision=_HP)
    return x + h3


if __name__ == "__main__":
    key = jax.random.PRNGKey(0)
    kx, kp = jax.random.split(key)

    N, C, D, H, W = 2, 8, 8, 8, 8        # small NCDHW input; S = 512 (lane-dense)
    F1, F2 = 16, 8                       # num_filters = [16, 8]

    x = jax.random.normal(kx, (N, C, D, H, W), dtype=jnp.float32)
    params = init_params(kp, C, F1, F2)

    out = jax.block_until_ready(res_block3d_forward(x, params))
    ref = jax.block_until_ready(reference_forward(x, params))

    assert out.shape == x.shape, (out.shape, x.shape)
    max_err = float(jnp.max(jnp.abs(out - ref)))
    mean_err = float(jnp.mean(jnp.abs(out - ref)))
    # bf16 MXU inputs (f32 accumulation) -> looser tolerance than pure f32.
    assert max_err < 5e-2 and mean_err < 1e-2, (max_err, mean_err)
    print("KERNEL_OK")
</pallas_src>

<mosaic_0001>
module attributes {stable_mosaic.version = 11 : i64} {
  func.func @kernel(%arg0: i32, %arg1: memref<1x8x512xf32, #tpu.memory_space<vmem>>, %arg2: memref<8x8xf32, #tpu.memory_space<vmem>>, %arg3: memref<8x1xf32, #tpu.memory_space<vmem>>, %arg4: memref<8x1xf32, #tpu.memory_space<vmem>>, %arg5: memref<16x8xbf16, #tpu.memory_space<vmem>>, %arg6: memref<16x16xf32, #tpu.memory_space<vmem>>, %arg7: memref<16x1xf32, #tpu.memory_space<vmem>>, %arg8: memref<16x1xf32, #tpu.memory_space<vmem>>, %arg9: memref<8x432xbf16, #tpu.memory_space<vmem>>, %arg10: memref<27x1x512xf32, #tpu.memory_space<vmem>>, %arg11: memref<8x8xf32, #tpu.memory_space<vmem>>, %arg12: memref<8x1xf32, #tpu.memory_space<vmem>>, %arg13: memref<8x1xf32, #tpu.memory_space<vmem>>, %arg14: memref<8x8xbf16, #tpu.memory_space<vmem>>, %arg15: memref<1x8x512xf32, #tpu.memory_space<vmem>>) attributes {dimension_semantics = [#tpu.dimension_semantics<parallel>], iteration_bounds = array<i64: 2>, scalar_prefetch = 0 : i64, scratch_operands = 0 : i64, tpu.core_type = #tpu.core_type<tc>, window_params = [{transform_indices = @transform_0, window_bounds = array<i64: 1, 8, 512>}, {pipeline_mode = #tpu.pipeline_mode<synchronous>, transform_indices = @transform_1, window_bounds = array<i64: 8, 8>}, {pipeline_mode = #tpu.pipeline_mode<synchronous>, transform_indices = @transform_2, window_bounds = array<i64: 8, 1>}, {pipeline_mode = #tpu.pipeline_mode<synchronous>, transform_indices = @transform_3, window_bounds = array<i64: 8, 1>}, {pipeline_mode = #tpu.pipeline_mode<synchronous>, transform_indices = @transform_4, window_bounds = array<i64: 16, 8>}, {pipeline_mode = #tpu.pipeline_mode<synchronous>, transform_indices = @transform_5, window_bounds = array<i64: 16, 16>}, {pipeline_mode = #tpu.pipeline_mode<synchronous>, transform_indices = @transform_6, window_bounds = array<i64: 16, 1>}, {pipeline_mode = #tpu.pipeline_mode<synchronous>, transform_indices = @transform_7, window_bounds = array<i64: 16, 1>}, {pipeline_mode = #tpu.pipeline_mode<synchronous>, transform_indices = @transform_8, window_bounds = array<i64: 8, 432>}, {pipeline_mode = #tpu.pipeline_mode<synchronous>, transform_indices = @transform_9, window_bounds = array<i64: 27, 1, 512>}, {pipeline_mode = #tpu.pipeline_mode<synchronous>, transform_indices = @transform_10, window_bounds = array<i64: 8, 8>}, {pipeline_mode = #tpu.pipeline_mode<synchronous>, transform_indices = @transform_11, window_bounds = array<i64: 8, 1>}, {pipeline_mode = #tpu.pipeline_mode<synchronous>, transform_indices = @transform_12, window_bounds = array<i64: 8, 1>}, {pipeline_mode = #tpu.pipeline_mode<synchronous>, transform_indices = @transform_13, window_bounds = array<i64: 8, 8>}, {transform_indices = @transform_14, window_bounds = array<i64: 1, 8, 512>}]} {
    %c0 = arith.constant 0 : index
    %c0_0 = arith.constant 0 : index
    %c0_1 = arith.constant 0 : index
    %0 = vector.load %arg1[%c0, %c0_0, %c0_1] : memref<1x8x512xf32, #tpu.memory_space<vmem>>, vector<1x8x512xf32>
    %1 = vector.shape_cast %0 : vector<1x8x512xf32> to vector<8x512xf32>
    %c0_2 = arith.constant 0 : index
    %c0_3 = arith.constant 0 : index
    %2 = vector.load %arg2[%c0_2, %c0_3] : memref<8x8xf32, #tpu.memory_space<vmem>>, vector<8x8xf32>
    %c0_4 = arith.constant 0 : index
    %c0_5 = arith.constant 0 : index
    %3 = vector.load %arg3[%c0_4, %c0_5] : memref<8x1xf32, #tpu.memory_space<vmem>>, vector<8x1xf32>
    %c0_6 = arith.constant 0 : index
    %c0_7 = arith.constant 0 : index
    %4 = vector.load %arg4[%c0_6, %c0_7] : memref<8x1xf32, #tpu.memory_space<vmem>>, vector<8x1xf32>
    %cst = arith.constant dense<0.000000e+00> : vector<8xf32>
    %5 = vector.multi_reduction <add>, %1, %cst [1] : vector<8x512xf32> to vector<8xf32>
    %6 = vector.shape_cast %5 : vector<8xf32> to vector<8x1xf32>
    %cst_8 = arith.constant dense<0.000000e+00> : vector<8x1xf32>
    %7 = tpu.matmul %2, %6, %cst_8 {dimension_numbers = #tpu.dot_dimension_numbers<[1], [0], [0], [1], [0, 0, 1, 1], [], []>, precision = #tpu.contract_precision<fp32>} : vector<8x8xf32>, vector<8x1xf32>, vector<8x1xf32> -> vector<8x1xf32>
    %cst_9 = arith.constant 4.8828125E-4 : f32
    %8 = vector.broadcast %cst_9 : f32 to vector<8x1xf32>
    %9 = arith.mulf %7, %8 : vector<8x1xf32>
    %10 = vector.broadcast %9 : vector<8x1xf32> to vector<8x512xf32>
    %11 = arith.subf %1, %10 : vector<8x512xf32>
    %12 = arith.mulf %11, %11 : vector<8x512xf32>
    %cst_10 = arith.constant dense<0.000000e+00> : vector<8xf32>
    %13 = vector.multi_reduction <add>, %12, %cst_10 [1] : vector<8x512xf32> to vector<8xf32>
    %14 = vector.shape_cast %13 : vector<8xf32> to vector<8x1xf32>
    %cst_11 = arith.constant dense<0.000000e+00> : vector<8x1xf32>
    %15 = tpu.matmul %2, %14, %cst_11 {dimension_numbers = #tpu.dot_dimension_numbers<[1], [0], [0], [1], [0, 0, 1, 1], [], []>, precision = #tpu.contract_precision<fp32>} : vector<8x8xf32>, vector<8x1xf32>, vector<8x1xf32> -> vector<8x1xf32>
    %cst_12 = arith.constant 4.8828125E-4 : f32
    %16 = vector.broadcast %cst_12 : f32 to vector<8x1xf32>
    %17 = arith.mulf %15, %16 : vector<8x1xf32>
    %cst_13 = arith.constant 9.99999974E-6 : f32
    %18 = vector.broadcast %cst_13 : f32 to vector<8x1xf32>
    %19 = arith.addf %17, %18 : vector<8x1xf32>
    %20 = math.rsqrt %19 : vector<8x1xf32>
    %21 = vector.broadcast %20 : vector<8x1xf32> to vector<8x512xf32>
    %22 = arith.mulf %11, %21 : vector<8x512xf32>
    %23 = vector.broadcast %3 : vector<8x1xf32> to vector<8x512xf32>
    %24 = arith.mulf %22, %23 : vector<8x512xf32>
    %25 = vector.broadcast %4 : vector<8x1xf32> to vector<8x512xf32>
    %26 = arith.addf %24, %25 : vector<8x512xf32>
    %cst_14 = arith.constant 0.000000e+00 : f32
    %27 = vector.broadcast %cst_14 : f32 to vector<8x512xf32>
    %28 = arith.cmpf ogt, %26, %27 : vector<8x512xf32>
    %cst_15 = arith.constant 2.000000e-01 : f32
    %29 = vector.broadcast %cst_15 : f32 to vector<8x512xf32>
    %30 = arith.mulf %29, %26 : vector<8x512xf32>
    %31 = arith.select %28, %26, %30 : vector<8x512xi1>, vector<8x512xf32>
    %c0_16 = arith.constant 0 : index
    %c0_17 = arith.constant 0 : index
    %32 = vector.load %arg5[%c0_16, %c0_17] : memref<16x8xbf16, #tpu.memory_space<vmem>>, vector<16x8xbf16>
    %33 = arith.truncf %31 : vector<8x512xf32> to vector<8x512xbf16>
    %cst_18 = arith.constant dense<0.000000e+00> : vector<16x512xf32>
    %34 = tpu.matmul %32, %33, %cst_18 {dimension_numbers = #tpu.dot_dimension_numbers<[1], [0], [0], [1], [0, 0, 1, 1], [], []>} : vector<16x8xbf16>, vector<8x512xbf16>, vector<16x512xf32> -> vector<16x512xf32>
    %c0_19 = arith.constant 0 : index
    %c0_20 = arith.constant 0 : index
    %35 = vector.load %arg6[%c0_19, %c0_20] : memref<16x16xf32, #tpu.memory_space<vmem>>, vector<16x16xf32>
    %c0_21 = arith.constant 0 : index
    %c0_22 = arith.constant 0 : index
    %36 = vector.load %arg7[%c0_21, %c0_22] : memref<16x1xf32, #tpu.memory_space<vmem>>, vector<16x1xf32>
    %c0_23 = arith.constant 0 : index
    %c0_24 = arith.constant 0 : index
    %37 = vector.load %arg8[%c0_23, %c0_24] : memref<16x1xf32, #tpu.memory_space<vmem>>, vector<16x1xf32>
    %cst_25 = arith.constant dense<0.000000e+00> : vector<16xf32>
    %38 = vector.multi_reduction <add>, %34, %cst_25 [1] : vector<16x512xf32> to vector<16xf32>
    %39 = vector.shape_cast %38 : vector<16xf32> to vector<16x1xf32>
    %cst_26 = arith.constant dense<0.000000e+00> : vector<16x1xf32>
    %40 = tpu.matmul %35, %39, %cst_26 {dimension_numbers = #tpu.dot_dimension_numbers<[1], [0], [0], [1], [0, 0, 1, 1], [], []>, precision = #tpu.contract_precision<fp32>} : vector<16x16xf32>, vector<16x1xf32>, vector<16x1xf32> -> vector<16x1xf32>
    %cst_27 = arith.constant 4.8828125E-4 : f32
    %41 = vector.broadcast %cst_27 : f32 to vector<16x1xf32>
    %42 = arith.mulf %40, %41 : vector<16x1xf32>
    %43 = vector.broadcast %42 : vector<16x1xf32> to vector<16x512xf32>
    %44 = arith.subf %34, %43 : vector<16x512xf32>
    %45 = arith.mulf %44, %44 : vector<16x512xf32>
    %cst_28 = arith.constant dense<0.000000e+00> : vector<16xf32>
    %46 = vector.multi_reduction <add>, %45, %cst_28 [1] : vector<16x512xf32> to vector<16xf32>
    %47 = vector.shape_cast %46 : vector<16xf32> to vector<16x1xf32>
    %cst_29 = arith.constant dense<0.000000e+00> : vector<16x1xf32>
    %48 = tpu.matmul %35, %47, %cst_29 {dimension_numbers = #tpu.dot_dimension_numbers<[1], [0], [0], [1], [0, 0, 1, 1], [], []>, precision = #tpu.contract_precision<fp32>} : vector<16x16xf32>, vector<16x1xf32>, vector<16x1xf32> -> vector<16x1xf32>
    %cst_30 = arith.constant 4.8828125E-4 : f32
    %49 = vector.broadcast %cst_30 : f32 to vector<16x1xf32>
    %50 = arith.mulf %48, %49 : vector<16x1xf32>
    %cst_31 = arith.constant 9.99999974E-6 : f32
    %51 = vector.broadcast %cst_31 : f32 to vector<16x1xf32>
    %52 = arith.addf %50, %51 : vector<16x1xf32>
    %53 = math.rsqrt %52 : vector<16x1xf32>
    %54 = vector.broadcast %53 : vector<16x1xf32> to vector<16x512xf32>
    %55 = arith.mulf %44, %54 : vector<16x512xf32>
    %56 = vector.broadcast %36 : vector<16x1xf32> to vector<16x512xf32>
    %57 = arith.mulf %55, %56 : vector<16x512xf32>
    %58 = vector.broadcast %37 : vector<16x1xf32> to vector<16x512xf32>
    %59 = arith.addf %57, %58 : vector<16x512xf32>
    %cst_32 = arith.constant 0.000000e+00 : f32
    %60 = vector.broadcast %cst_32 : f32 to vector<16x512xf32>
    %61 = arith.cmpf ogt, %59, %60 : vector<16x512xf32>
    %cst_33 = arith.constant 2.000000e-01 : f32
    %62 = vector.broadcast %cst_33 : f32 to vector<16x512xf32>
    %63 = arith.mulf %62, %59 : vector<16x512xf32>
    %64 = arith.select %61, %59, %63 : vector<16x512xi1>, vector<16x512xf32>
    %c73_i32 = arith.constant 73 : i32
    %65 = tpu.dynamic_rotate %64 by %c73_i32 dim 1 : vector<16x512xf32>, i32 -> vector<16x512xf32>
    %c0_34 = arith.constant 0 : index
    %c0_35 = arith.constant 0 : index
    %c0_36 = arith.constant 0 : index
    %66 = vector.load %arg10[%c0_34, %c0_35, %c0_36] : memref<27x1x512xf32, #tpu.memory_space<vmem>>, vector<1x1x512xf32>
    %67 = vector.shape_cast %66 : vector<1x1x512xf32> to vector<1x512xf32>
    %68 = vector.broadcast %67 : vector<1x512xf32> to vector<16x512xf32>
    %69 = arith.mulf %65, %68 : vector<16x512xf32>
    %70 = arith.truncf %69 : vector<16x512xf32> to vector<16x512xbf16>
    %c72_i32 = arith.constant 72 : i32
    %71 = tpu.dynamic_rotate %64 by %c72_i32 dim 1 : vector<16x512xf32>, i32 -> vector<16x512xf32>
    %c1 = arith.constant 1 : index
    %c0_37 = arith.constant 0 : index
    %c0_38 = arith.constant 0 : index
    %72 = vector.load %arg10[%c1, %c0_37, %c0_38] : memref<27x1x512xf32, #tpu.memory_space<vmem>>, vector<1x1x512xf32>
    %73 = vector.shape_cast %72 : vector<1x1x512xf32> to vector<1x512xf32>
    %74 = vector.broadcast %73 : vector<1x512xf32> to vector<16x512xf32>
    %75 = arith.mulf %71, %74 : vector<16x512xf32>
    %76 = arith.truncf %75 : vector<16x512xf32> to vector<16x512xbf16>
    %c71_i32 = arith.constant 71 : i32
    %77 = tpu.dynamic_rotate %64 by %c71_i32 dim 1 : vector<16x512xf32>, i32 -> vector<16x512xf32>
    %c2 = arith.constant 2 : index
    %c0_39 = arith.constant 0 : index
    %c0_40 = arith.constant 0 : index
    %78 = vector.load %arg10[%c2, %c0_39, %c0_40] : memref<27x1x512xf32, #tpu.memory_space<vmem>>, vector<1x1x512xf32>
    %79 = vector.shape_cast %78 : vector<1x1x512xf32> to vector<1x512xf32>
    %80 = vector.broadcast %79 : vector<1x512xf32> to vector<16x512xf32>
    %81 = arith.mulf %77, %80 : vector<16x512xf32>
    %82 = arith.truncf %81 : vector<16x512xf32> to vector<16x512xbf16>
    %c65_i32 = arith.constant 65 : i32
    %83 = tpu.dynamic_rotate %64 by %c65_i32 dim 1 : vector<16x512xf32>, i32 -> vector<16x512xf32>
    %c3 = arith.constant 3 : index
    %c0_41 = arith.constant 0 : index
    %c0_42 = arith.constant 0 : index
    %84 = vector.load %arg10[%c3, %c0_41, %c0_42] : memref<27x1x512xf32, #tpu.memory_space<vmem>>, vector<1x1x512xf32>
    %85 = vector.shape_cast %84 : vector<1x1x512xf32> to vector<1x512xf32>
    %86 = vector.broadcast %85 : vector<1x512xf32> to vector<16x512xf32>
    %87 = arith.mulf %83, %86 : vector<16x512xf32>
    %88 = arith.truncf %87 : vector<16x512xf32> to vector<16x512xbf16>
    %c64_i32 = arith.constant 64 : i32
    %89 = tpu.dynamic_rotate %64 by %c64_i32 dim 1 : vector<16x512xf32>, i32 -> vector<16x512xf32>
    %c4 = arith.constant 4 : index
    %c0_43 = arith.constant 0 : index
    %c0_44 = arith.constant 0 : index
    %90 = vector.load %arg10[%c4, %c0_43, %c0_44] : memref<27x1x512xf32, #tpu.memory_space<vmem>>, vector<1x1x512xf32>
    %91 = vector.shape_cast %90 : vector<1x1x512xf32> to vector<1x512xf32>
    %92 = vector.broadcast %91 : vector<1x512xf32> to vector<16x512xf32>
    %93 = arith.mulf %89, %92 : vector<16x512xf32>
    %94 = arith.truncf %93 : vector<16x512xf32> to vector<16x512xbf16>
    %c63_i32 = arith.constant 63 : i32
    %95 = tpu.dynamic_rotate %64 by %c63_i32 dim 1 : vector<16x512xf32>, i32 -> vector<16x512xf32>
    %c5 = arith.constant 5 : index
    %c0_45 = arith.constant 0 : index
    %c0_46 = arith.constant 0 : index
    %96 = vector.load %arg10[%c5, %c0_45, %c0_46] : memref<27x1x512xf32, #tpu.memory_space<vmem>>, vector<1x1x512xf32>
    %97 = vector.shape_cast %96 : vector<1x1x512xf32> to vector<1x512xf32>
    %98 = vector.broadcast %97 : vector<1x512xf32> to vector<16x512xf32>
    %99 = arith.mulf %95, %98 : vector<16x512xf32>
    %100 = arith.truncf %99 : vector<16x512xf32> to vector<16x512xbf16>
    %c57_i32 = arith.constant 57 : i32
    %101 = tpu.dynamic_rotate %64 by %c57_i32 dim 1 : vector<16x512xf32>, i32 -> vector<16x512xf32>
    %c6 = arith.constant 6 : index
    %c0_47 = arith.constant 0 : index
    %c0_48 = arith.constant 0 : index
    %102 = vector.load %arg10[%c6, %c0_47, %c0_48] : memref<27x1x512xf32, #tpu.memory_space<vmem>>, vector<1x1x512xf32>
    %103 = vector.shape_cast %102 : vector<1x1x512xf32> to vector<1x512xf32>
    %104 = vector.broadcast %103 : vector<1x512xf32> to vector<16x512xf32>
    %105 = arith.mulf %101, %104 : vector<16x512xf32>
    %106 = arith.truncf %105 : vector<16x512xf32> to vector<16x512xbf16>
    %c56_i32 = arith.constant 56 : i32
    %107 = tpu.dynamic_rotate %64 by %c56_i32 dim 1 : vector<16x512xf32>, i32 -> vector<16x512xf32>
    %c7 = arith.constant 7 : index
    %c0_49 = arith.constant 0 : index
    %c0_50 = arith.constant 0 : index
    %108 = vector.load %arg10[%c7, %c0_49, %c0_50] : memref<27x1x512xf32, #tpu.memory_space<vmem>>, vector<1x1x512xf32>
    %109 = vector.shape_cast %108 : vector<1x1x512xf32> to vector<1x512xf32>
    %110 = vector.broadcast %109 : vector<1x512xf32> to vector<16x512xf32>
    %111 = arith.mulf %107, %110 : vector<16x512xf32>
    %112 = arith.truncf %111 : vector<16x512xf32> to vector<16x512xbf16>
    %c55_i32 = arith.constant 55 : i32
    %113 = tpu.dynamic_rotate %64 by %c55_i32 dim 1 : vector<16x512xf32>, i32 -> vector<16x512xf32>
    %c8 = arith.constant 8 : index
    %c0_51 = arith.constant 0 : index
    %c0_52 = arith.constant 0 : index
    %114 = vector.load %arg10[%c8, %c0_51, %c0_52] : memref<27x1x512xf32, #tpu.memory_space<vmem>>, vector<1x1x512xf32>
    %115 = vector.shape_cast %114 : vector<1x1x512xf32> to vector<1x512xf32>
    %116 = vector.broadcast %115 : vector<1x512xf32> to vector<16x512xf32>
    %117 = arith.mulf %113, %116 : vector<16x512xf32>
    %118 = arith.truncf %117 : vector<16x512xf32> to vector<16x512xbf16>
    %c9_i32 = arith.constant 9 : i32
    %119 = tpu.dynamic_rotate %64 by %c9_i32 dim 1 : vector<16x512xf32>, i32 -> vector<16x512xf32>
    %c9 = arith.constant 9 : index
    %c0_53 = arith.constant 0 : index
    %c0_54 = arith.constant 0 : index
    %120 = vector.load %arg10[%c9, %c0_53, %c0_54] : memref<27x1x512xf32, #tpu.memory_space<vmem>>, vector<1x1x512xf32>
    %121 = vector.shape_cast %120 : vector<1x1x512xf32> to vector<1x512xf32>
    %122 = vector.broadcast %121 : vector<1x512xf32> to vector<16x512xf32>
    %123 = arith.mulf %119, %122 : vector<16x512xf32>
    %124 = arith.truncf %123 : vector<16x512xf32> to vector<16x512xbf16>
    %c8_i32 = arith.constant 8 : i32
    %125 = tpu.dynamic_rotate %64 by %c8_i32 dim 1 : vector<16x512xf32>, i32 -> vector<16x512xf32>
    %c10 = arith.constant 10 : index
    %c0_55 = arith.constant 0 : index
    %c0_56 = arith.constant 0 : index
    %126 = vector.load %arg10[%c10, %c0_55, %c0_56] : memref<27x1x512xf32, #tpu.memory_space<vmem>>, vector<1x1x512xf32>
    %127 = vector.shape_cast %126 : vector<1x1x512xf32> to vector<1x512xf32>
    %128 = vector.broadcast %127 : vector<1x512xf32> to vector<16x512xf32>
    %129 = arith.mulf %125, %128 : vector<16x512xf32>
    %130 = arith.truncf %129 : vector<16x512xf32> to vector<16x512xbf16>
    %c7_i32 = arith.constant 7 : i32
    %131 = tpu.dynamic_rotate %64 by %c7_i32 dim 1 : vector<16x512xf32>, i32 -> vector<16x512xf32>
    %c11 = arith.constant 11 : index
    %c0_57 = arith.constant 0 : index
    %c0_58 = arith.constant 0 : index
    %132 = vector.load %arg10[%c11, %c0_57, %c0_58] : memref<27x1x512xf32, #tpu.memory_space<vmem>>, vector<1x1x512xf32>
    %133 = vector.shape_cast %132 : vector<1x1x512xf32> to vector<1x512xf32>
    %134 = vector.broadcast %133 : vector<1x512xf32> to vector<16x512xf32>
    %135 = arith.mulf %131, %134 : vector<16x512xf32>
    %136 = arith.truncf %135 : vector<16x512xf32> to vector<16x512xbf16>
    %c1_i32 = arith.constant 1 : i32
    %137 = tpu.dynamic_rotate %64 by %c1_i32 dim 1 : vector<16x512xf32>, i32 -> vector<16x512xf32>
    %c12 = arith.constant 12 : index
    %c0_59 = arith.constant 0 : index
    %c0_60 = arith.constant 0 : index
    %138 = vector.load %arg10[%c12, %c0_59, %c0_60] : memref<27x1x512xf32, #tpu.memory_space<vmem>>, vector<1x1x512xf32>
    %139 = vector.shape_cast %138 : vector<1x1x512xf32> to vector<1x512xf32>
    %140 = vector.broadcast %139 : vector<1x512xf32> to vector<16x512xf32>
    %141 = arith.mulf %137, %140 : vector<16x512xf32>
    %142 = arith.truncf %141 : vector<16x512xf32> to vector<16x512xbf16>
    %c13 = arith.constant 13 : index
    %c0_61 = arith.constant 0 : index
    %c0_62 = arith.constant 0 : index
    %143 = vector.load %arg10[%c13, %c0_61, %c0_62] : memref<27x1x512xf32, #tpu.memory_space<vmem>>, vector<1x1x512xf32>
    %144 = vector.shape_cast %143 : vector<1x1x512xf32> to vector<1x512xf32>
    %145 = vector.broadcast %144 : vector<1x512xf32> to vector<16x512xf32>
    %146 = arith.mulf %64, %145 : vector<16x512xf32>
    %147 = arith.truncf %146 : vector<16x512xf32> to vector<16x512xbf16>
    %c511_i32 = arith.constant 511 : i32
    %148 = tpu.dynamic_rotate %64 by %c511_i32 dim 1 : vector<16x512xf32>, i32 -> vector<16x512xf32>
    %c14 = arith.constant 14 : index
    %c0_63 = arith.constant 0 : index
    %c0_64 = arith.constant 0 : index
    %149 = vector.load %arg10[%c14, %c0_63, %c0_64] : memref<27x1x512xf32, #tpu.memory_space<vmem>>, vector<1x1x512xf32>
    %150 = vector.shape_cast %149 : vector<1x1x512xf32> to vector<1x512xf32>
    %151 = vector.broadcast %150 : vector<1x512xf32> to vector<16x512xf32>
    %152 = arith.mulf %148, %151 : vector<16x512xf32>
    %153 = arith.truncf %152 : vector<16x512xf32> to vector<16x512xbf16>
    %c505_i32 = arith.constant 505 : i32
    %154 = tpu.dynamic_rotate %64 by %c505_i32 dim 1 : vector<16x512xf32>, i32 -> vector<16x512xf32>
    %c15 = arith.constant 15 : index
    %c0_65 = arith.constant 0 : index
    %c0_66 = arith.constant 0 : index
    %155 = vector.load %arg10[%c15, %c0_65, %c0_66] : memref<27x1x512xf32, #tpu.memory_space<vmem>>, vector<1x1x512xf32>
    %156 = vector.shape_cast %155 : vector<1x1x512xf32> to vector<1x512xf32>
    %157 = vector.broadcast %156 : vector<1x512xf32> to vector<16x512xf32>
    %158 = arith.mulf %154, %157 : vector<16x512xf32>
    %159 = arith.truncf %158 : vector<16x512xf32> to vector<16x512xbf16>
    %c504_i32 = arith.constant 504 : i32
    %160 = tpu.dynamic_rotate %64 by %c504_i32 dim 1 : vector<16x512xf32>, i32 -> vector<16x512xf32>
    %c16 = arith.constant 16 : index
    %c0_67 = arith.constant 0 : index
    %c0_68 = arith.constant 0 : index
    %161 = vector.load %arg10[%c16, %c0_67, %c0_68] : memref<27x1x512xf32, #tpu.memory_space<vmem>>, vector<1x1x512xf32>
    %162 = vector.shape_cast %161 : vector<1x1x512xf32> to vector<1x512xf32>
    %163 = vector.broadcast %162 : vector<1x512xf32> to vector<16x512xf32>
    %164 = arith.mulf %160, %163 : vector<16x512xf32>
    %165 = arith.truncf %164 : vector<16x512xf32> to vector<16x512xbf16>
    %c503_i32 = arith.constant 503 : i32
    %166 = tpu.dynamic_rotate %64 by %c503_i32 dim 1 : vector<16x512xf32>, i32 -> vector<16x512xf32>
    %c17 = arith.constant 17 : index
    %c0_69 = arith.constant 0 : index
    %c0_70 = arith.constant 0 : index
    %167 = vector.load %arg10[%c17, %c0_69, %c0_70] : memref<27x1x512xf32, #tpu.memory_space<vmem>>, vector<1x1x512xf32>
    %168 = vector.shape_cast %167 : vector<1x1x512xf32> to vector<1x512xf32>
    %169 = vector.broadcast %168 : vector<1x512xf32> to vector<16x512xf32>
    %170 = arith.mulf %166, %169 : vector<16x512xf32>
    %171 = arith.truncf %170 : vector<16x512xf32> to vector<16x512xbf16>
    %c457_i32 = arith.constant 457 : i32
    %172 = tpu.dynamic_rotate %64 by %c457_i32 dim 1 : vector<16x512xf32>, i32 -> vector<16x512xf32>
    %c18 = arith.constant 18 : index
    %c0_71 = arith.constant 0 : index
    %c0_72 = arith.constant 0 : index
    %173 = vector.load %arg10[%c18, %c0_71, %c0_72] : memref<27x1x512xf32, #tpu.memory_space<vmem>>, vector<1x1x512xf32>
    %174 = vector.shape_cast %173 : vector<1x1x512xf32> to vector<1x512xf32>
    %175 = vector.broadcast %174 : vector<1x512xf32> to vector<16x512xf32>
    %176 = arith.mulf %172, %175 : vector<16x512xf32>
    %177 = arith.truncf %176 : vector<16x512xf32> to vector<16x512xbf16>
    %c456_i32 = arith.constant 456 : i32
    %178 = tpu.dynamic_rotate %64 by %c456_i32 dim 1 : vector<16x512xf32>, i32 -> vector<16x512xf32>
    %c19 = arith.constant 19 : index
    %c0_73 = arith.constant 0 : index
    %c0_74 = arith.constant 0 : index
    %179 = vector.load %arg10[%c19, %c0_73, %c0_74] : memref<27x1x512xf32, #tpu.memory_space<vmem>>, vector<1x1x512xf32>
    %180 = vector.shape_cast %179 : vector<1x1x512xf32> to vector<1x512xf32>
    %181 = vector.broadcast %180 : vector<1x512xf32> to vector<16x512xf32>
    %182 = arith.mulf %178, %181 : vector<16x512xf32>
    %183 = arith.truncf %182 : vector<16x512xf32> to vector<16x512xbf16>
    %c455_i32 = arith.constant 455 : i32
    %184 = tpu.dynamic_rotate %64 by %c455_i32 dim 1 : vector<16x512xf32>, i32 -> vector<16x512xf32>
    %c20 = arith.constant 20 : index
    %c0_75 = arith.constant 0 : index
    %c0_76 = arith.constant 0 : index
    %185 = vector.load %arg10[%c20, %c0_75, %c0_76] : memref<27x1x512xf32, #tpu.memory_space<vmem>>, vector<1x1x512xf32>
    %186 = vector.shape_cast %185 : vector<1x1x512xf32> to vector<1x512xf32>
    %187 = vector.broadcast %186 : vector<1x512xf32> to vector<16x512xf32>
    %188 = arith.mulf %184, %187 : vector<16x512xf32>
    %189 = arith.truncf %188 : vector<16x512xf32> to vector<16x512xbf16>
    %c449_i32 = arith.constant 449 : i32
    %190 = tpu.dynamic_rotate %64 by %c449_i32 dim 1 : vector<16x512xf32>, i32 -> vector<16x512xf32>
    %c21 = arith.constant 21 : index
    %c0_77 = arith.constant 0 : index
    %c0_78 = arith.constant 0 : index
    %191 = vector.load %arg10[%c21, %c0_77, %c0_78] : memref<27x1x512xf32, #tpu.memory_space<vmem>>, vector<1x1x512xf32>
    %192 = vector.shape_cast %191 : vector<1x1x512xf32> to vector<1x512xf32>
    %193 = vector.broadcast %192 : vector<1x512xf32> to vector<16x512xf32>
    %194 = arith.mulf %190, %193 : vector<16x512xf32>
    %195 = arith.truncf %194 : vector<16x512xf32> to vector<16x512xbf16>
    %c448_i32 = arith.constant 448 : i32
    %196 = tpu.dynamic_rotate %64 by %c448_i32 dim 1 : vector<16x512xf32>, i32 -> vector<16x512xf32>
    %c22 = arith.constant 22 : index
    %c0_79 = arith.constant 0 : index
    %c0_80 = arith.constant 0 : index
    %197 = vector.load %arg10[%c22, %c0_79, %c0_80] : memref<27x1x512xf32, #tpu.memory_space<vmem>>, vector<1x1x512xf32>
    %198 = vector.shape_cast %197 : vector<1x1x512xf32> to vector<1x512xf32>
    %199 = vector.broadcast %198 : vector<1x512xf32> to vector<16x512xf32>
    %200 = arith.mulf %196, %199 : vector<16x512xf32>
    %201 = arith.truncf %200 : vector<16x512xf32> to vector<16x512xbf16>
    %c447_i32 = arith.constant 447 : i32
    %202 = tpu.dynamic_rotate %64 by %c447_i32 dim 1 : vector<16x512xf32>, i32 -> vector<16x512xf32>
    %c23 = arith.constant 23 : index
    %c0_81 = arith.constant 0 : index
    %c0_82 = arith.constant 0 : index
    %203 = vector.load %arg10[%c23, %c0_81, %c0_82] : memref<27x1x512xf32, #tpu.memory_space<vmem>>, vector<1x1x512xf32>
    %204 = vector.shape_cast %203 : vector<1x1x512xf32> to vector<1x512xf32>
    %205 = vector.broadcast %204 : vector<1x512xf32> to vector<16x512xf32>
    %206 = arith.mulf %202, %205 : vector<16x512xf32>
    %207 = arith.truncf %206 : vector<16x512xf32> to vector<16x512xbf16>
    %c441_i32 = arith.constant 441 : i32
    %208 = tpu.dynamic_rotate %64 by %c441_i32 dim 1 : vector<16x512xf32>, i32 -> vector<16x512xf32>
    %c24 = arith.constant 24 : index
    %c0_83 = arith.constant 0 : index
    %c0_84 = arith.constant 0 : index
    %209 = vector.load %arg10[%c24, %c0_83, %c0_84] : memref<27x1x512xf32, #tpu.memory_space<vmem>>, vector<1x1x512xf32>
    %210 = vector.shape_cast %209 : vector<1x1x512xf32> to vector<1x512xf32>
    %211 = vector.broadcast %210 : vector<1x512xf32> to vector<16x512xf32>
    %212 = arith.mulf %208, %211 : vector<16x512xf32>
    %213 = arith.truncf %212 : vector<16x512xf32> to vector<16x512xbf16>
    %c440_i32 = arith.constant 440 : i32
    %214 = tpu.dynamic_rotate %64 by %c440_i32 dim 1 : vector<16x512xf32>, i32 -> vector<16x512xf32>
    %c25 = arith.constant 25 : index
    %c0_85 = arith.constant 0 : index
    %c0_86 = arith.constant 0 : index
    %215 = vector.load %arg10[%c25, %c0_85, %c0_86] : memref<27x1x512xf32, #tpu.memory_space<vmem>>, vector<1x1x512xf32>
    %216 = vector.shape_cast %215 : vector<1x1x512xf32> to vector<1x512xf32>
    %217 = vector.broadcast %216 : vector<1x512xf32> to vector<16x512xf32>
    %218 = arith.mulf %214, %217 : vector<16x512xf32>
    %219 = arith.truncf %218 : vector<16x512xf32> to vector<16x512xbf16>
    %c439_i32 = arith.constant 439 : i32
    %220 = tpu.dynamic_rotate %64 by %c439_i32 dim 1 : vector<16x512xf32>, i32 -> vector<16x512xf32>
    %c26 = arith.constant 26 : index
    %c0_87 = arith.constant 0 : index
    %c0_88 = arith.constant 0 : index
    %221 = vector.load %arg10[%c26, %c0_87, %c0_88] : memref<27x1x512xf32, #tpu.memory_space<vmem>>, vector<1x1x512xf32>
    %222 = vector.shape_cast %221 : vector<1x1x512xf32> to vector<1x512xf32>
    %223 = vector.broadcast %222 : vector<1x512xf32> to vector<16x512xf32>
    %224 = arith.mulf %220, %223 : vector<16x512xf32>
    %225 = arith.truncf %224 : vector<16x512xf32> to vector<16x512xbf16>
    %226 = tpu.concatenate %70, %76, %82, %88, %94, %100, %106, %112, %118, %124, %130, %136, %142, %147, %153, %159 in 0 : vector<16x512xbf16>, vector<16x512xbf16>, vector<16x512xbf16>, vector<16x512xbf16>, vector<16x512xbf16>, vector<16x512xbf16>, vector<16x512xbf16>, vector<16x512xbf16>, vector<16x512xbf16>, vector<16x512xbf16>, vector<16x512xbf16>, vector<16x512xbf16>, vector<16x512xbf16>, vector<16x512xbf16>, vector<16x512xbf16>, vector<16x512xbf16> -> vector<256x512xbf16>
    %227 = tpu.concatenate %165, %171, %177, %183, %189, %195, %201, %207, %213, %219, %225 in 0 : vector<16x512xbf16>, vector<16x512xbf16>, vector<16x512xbf16>, vector<16x512xbf16>, vector<16x512xbf16>, vector<16x512xbf16>, vector<16x512xbf16>, vector<16x512xbf16>, vector<16x512xbf16>, vector<16x512xbf16>, vector<16x512xbf16> -> vector<176x512xbf16>
    %228 = tpu.concatenate %226, %227 in 0 : vector<256x512xbf16>, vector<176x512xbf16> -> vector<432x512xbf16>
    %c0_89 = arith.constant 0 : index
    %c0_90 = arith.constant 0 : index
    %229 = vector.load %arg9[%c0_89, %c0_90] : memref<8x432xbf16, #tpu.memory_space<vmem>>, vector<8x432xbf16>
    %cst_91 = arith.constant dense<0.000000e+00> : vector<8x512xf32>
    %230 = tpu.matmul %229, %228, %cst_91 {dimension_numbers = #tpu.dot_dimension_numbers<[1], [0], [0], [1], [0, 0, 1, 1], [], []>} : vector<8x432xbf16>, vector<432x512xbf16>, vector<8x512xf32> -> vector<8x512xf32>
    %c0_92 = arith.constant 0 : index
    %c0_93 = arith.constant 0 : index
    %231 = vector.load %arg11[%c0_92, %c0_93] : memref<8x8xf32, #tpu.memory_space<vmem>>, vector<8x8xf32>
    %c0_94 = arith.constant 0 : index
    %c0_95 = arith.constant 0 : index
    %232 = vector.load %arg12[%c0_94, %c0_95] : memref<8x1xf32, #tpu.memory_space<vmem>>, vector<8x1xf32>
    %c0_96 = arith.constant 0 : index
    %c0_97 = arith.constant 0 : index
    %233 = vector.load %arg13[%c0_96, %c0_97] : memref<8x1xf32, #tpu.memory_space<vmem>>, vector<8x1xf32>
    %cst_98 = arith.constant dense<0.000000e+00> : vector<8xf32>
    %234 = vector.multi_reduction <add>, %230, %cst_98 [1] : vector<8x512xf32> to vector<8xf32>
    %235 = vector.shape_cast %234 : vector<8xf32> to vector<8x1xf32>
    %cst_99 = arith.constant dense<0.000000e+00> : vector<8x1xf32>
    %236 = tpu.matmul %231, %235, %cst_99 {dimension_numbers = #tpu.dot_dimension_numbers<[1], [0], [0], [1], [0, 0, 1, 1], [], []>, precision = #tpu.contract_precision<fp32>} : vector<8x8xf32>, vector<8x1xf32>, vector<8x1xf32> -> vector<8x1xf32>
    %cst_100 = arith.constant 4.8828125E-4 : f32
    %237 = vector.broadcast %cst_100 : f32 to vector<8x1xf32>
    %238 = arith.mulf %236, %237 : vector<8x1xf32>
    %239 = vector.broadcast %238 : vector<8x1xf32> to vector<8x512xf32>
    %240 = arith.subf %230, %239 : vector<8x512xf32>
    %241 = arith.mulf %240, %240 : vector<8x512xf32>
    %cst_101 = arith.constant dense<0.000000e+00> : vector<8xf32>
    %242 = vector.multi_reduction <add>, %241, %cst_101 [1] : vector<8x512xf32> to vector<8xf32>
    %243 = vector.shape_cast %242 : vector<8xf32> to vector<8x1xf32>
    %cst_102 = arith.constant dense<0.000000e+00> : vector<8x1xf32>
    %244 = tpu.matmul %231, %243, %cst_102 {dimension_numbers = #tpu.dot_dimension_numbers<[1], [0], [0], [1], [0, 0, 1, 1], [], []>, precision = #tpu.contract_precision<fp32>} : vector<8x8xf32>, vector<8x1xf32>, vector<8x1xf32> -> vector<8x1xf32>
    %cst_103 = arith.constant 4.8828125E-4 : f32
    %245 = vector.broadcast %cst_103 : f32 to vector<8x1xf32>
    %246 = arith.mulf %244, %245 : vector<8x1xf32>
    %cst_104 = arith.constant 9.99999974E-6 : f32
    %247 = vector.broadcast %cst_104 : f32 to vector<8x1xf32>
    %248 = arith.addf %246, %247 : vector<8x1xf32>
    %249 = math.rsqrt %248 : vector<8x1xf32>
    %250 = vector.broadcast %249 : vector<8x1xf32> to vector<8x512xf32>
    %251 = arith.mulf %240, %250 : vector<8x512xf32>
    %252 = vector.broadcast %232 : vector<8x1xf32> to vector<8x512xf32>
    %253 = arith.mulf %251, %252 : vector<8x512xf32>
    %254 = vector.broadcast %233 : vector<8x1xf32> to vector<8x512xf32>
    %255 = arith.addf %253, %254 : vector<8x512xf32>
    %cst_105 = arith.constant 0.000000e+00 : f32
    %256 = vector.broadcast %cst_105 : f32 to vector<8x512xf32>
    %257 = arith.cmpf ogt, %255, %256 : vector<8x512xf32>
    %cst_106 = arith.constant 2.000000e-01 : f32
    %258 = vector.broadcast %cst_106 : f32 to vector<8x512xf32>
    %259 = arith.mulf %258, %255 : vector<8x512xf32>
    %260 = arith.select %257, %255, %259 : vector<8x512xi1>, vector<8x512xf32>
    %c0_107 = arith.constant 0 : index
    %c0_108 = arith.constant 0 : index
    %261 = vector.load %arg14[%c0_107, %c0_108] : memref<8x8xbf16, #tpu.memory_space<vmem>>, vector<8x8xbf16>
    %262 = arith.truncf %260 : vector<8x512xf32> to vector<8x512xbf16>
    %cst_109 = arith.constant dense<0.000000e+00> : vector<8x512xf32>
    %263 = tpu.matmul %261, %262, %cst_109 {dimension_numbers = #tpu.dot_dimension_numbers<[1], [0], [0], [1], [0, 0, 1, 1], [], []>} : vector<8x8xbf16>, vector<8x512xbf16>, vector<8x512xf32> -> vector<8x512xf32>
    %264 = arith.addf %1, %263 : vector<8x512xf32>
    %c0_110 = arith.constant 0 : index
    %c0_111 = arith.constant 0 : index
    %c0_112 = arith.constant 0 : index
    %265 = vector.load %arg15[%c0_110, %c0_111, %c0_112] : memref<1x8x512xf32, #tpu.memory_space<vmem>>, vector<1x8x512xf32>
    %266 = vector.shape_cast %265 : vector<1x8x512xf32> to vector<8x512xf32>
    %267 = vector.shape_cast %264 : vector<8x512xf32> to vector<1x8x512xf32>
    tpu.vector_store %arg15[%c0_110, %c0_111, %c0_112], %267 {strides = array<i32>} : memref<1x8x512xf32, #tpu.memory_space<vmem>>, vector<1x8x512xf32>,
    return
  }
  func.func @transform_0(%arg0: i32) -> (i32, i32, i32) {
    %c0_i32 = arith.constant 0 : i32
    %c0_i32_0 = arith.constant 0 : i32
    %c0_i32_1 = arith.constant 0 : i32
    return %arg0, %c0_i32, %c0_i32_0 : i32, i32, i32
  }
  func.func @transform_1(%arg0: i32) -> (i32, i32) {
    %c0_i32 = arith.constant 0 : i32
    %c0_i32_0 = arith.constant 0 : i32
    %c0_i32_1 = arith.constant 0 : i32
    return %c0_i32, %c0_i32_0 : i32, i32
  }
  func.func @transform_2(%arg0: i32) -> (i32, i32) {
    %c0_i32 = arith.constant 0 : i32
    %c0_i32_0 = arith.constant 0 : i32
    %c0_i32_1 = arith.constant 0 : i32
    return %c0_i32, %c0_i32_0 : i32, i32
  }
  func.func @transform_3(%arg0: i32) -> (i32, i32) {
    %c0_i32 = arith.constant 0 : i32
    %c0_i32_0 = arith.constant 0 : i32
    %c0_i32_1 = arith.constant 0 : i32
    return %c0_i32, %c0_i32_0 : i32, i32
  }
  func.func @transform_4(%arg0: i32) -> (i32, i32) {
    %c0_i32 = arith.constant 0 : i32
    %c0_i32_0 = arith.constant 0 : i32
    %c0_i32_1 = arith.constant 0 : i32
    return %c0_i32, %c0_i32_0 : i32, i32
  }
  func.func @transform_5(%arg0: i32) -> (i32, i32) {
    %c0_i32 = arith.constant 0 : i32
    %c0_i32_0 = arith.constant 0 : i32
    %c0_i32_1 = arith.constant 0 : i32
    return %c0_i32, %c0_i32_0 : i32, i32
  }
  func.func @transform_6(%arg0: i32) -> (i32, i32) {
    %c0_i32 = arith.constant 0 : i32
    %c0_i32_0 = arith.constant 0 : i32
    %c0_i32_1 = arith.constant 0 : i32
    return %c0_i32, %c0_i32_0 : i32, i32
  }
  func.func @transform_7(%arg0: i32) -> (i32, i32) {
    %c0_i32 = arith.constant 0 : i32
    %c0_i32_0 = arith.constant 0 : i32
    %c0_i32_1 = arith.constant 0 : i32
    return %c0_i32, %c0_i32_0 : i32, i32
  }
  func.func @transform_8(%arg0: i32) -> (i32, i32) {
    %c0_i32 = arith.constant 0 : i32
    %c0_i32_0 = arith.constant 0 : i32
    %c0_i32_1 = arith.constant 0 : i32
    return %c0_i32, %c0_i32_0 : i32, i32
  }
  func.func @transform_9(%arg0: i32) -> (i32, i32, i32) {
    %c0_i32 = arith.constant 0 : i32
    %c0_i32_0 = arith.constant 0 : i32
    %c0_i32_1 = arith.constant 0 : i32
    %c0_i32_2 = arith.constant 0 : i32
    return %c0_i32, %c0_i32_0, %c0_i32_1 : i32, i32, i32
  }
  func.func @transform_10(%arg0: i32) -> (i32, i32) {
    %c0_i32 = arith.constant 0 : i32
    %c0_i32_0 = arith.constant 0 : i32
    %c0_i32_1 = arith.constant 0 : i32
    return %c0_i32, %c0_i32_0 : i32, i32
  }
  func.func @transform_11(%arg0: i32) -> (i32, i32) {
    %c0_i32 = arith.constant 0 : i32
    %c0_i32_0 = arith.constant 0 : i32
    %c0_i32_1 = arith.constant 0 : i32
    return %c0_i32, %c0_i32_0 : i32, i32
  }
  func.func @transform_12(%arg0: i32) -> (i32, i32) {
    %c0_i32 = arith.constant 0 : i32
    %c0_i32_0 = arith.constant 0 : i32
    %c0_i32_1 = arith.constant 0 : i32
    return %c0_i32, %c0_i32_0 : i32, i32
  }
  func.func @transform_13(%arg0: i32) -> (i32, i32) {
    %c0_i32 = arith.constant 0 : i32
    %c0_i32_0 = arith.constant 0 : i32
    %c0_i32_1 = arith.constant 0 : i32
    return %c0_i32, %c0_i32_0 : i32, i32
  }
  func.func @transform_14(%arg0: i32) -> (i32, i32, i32) {
    %c0_i32 = arith.constant 0 : i32
    %c0_i32_0 = arith.constant 0 : i32
    %c0_i32_1 = arith.constant 0 : i32
    return %arg0, %c0_i32, %c0_i32_0 : i32, i32, i32
  }
}

</mosaic_0001>

<llo_original>
// kernel: tpu_custom_call.1
$region0: #{tpu_custom_call.1}
  #allocation0 [shape = 'u32[]', space=smem, size = 0x4, offset = 0x4, fixed_abs, tag = 'smem constant byte address 0x4 - core index']
  #allocation1 [shape = 'u32[144,128]{1,0:T(1,128)}', space=vmem, size = 0x12000, scoped, tag = 'internal scratch']
  %s0 = inlined_call_operand.hbm [shape: f32[2,8,512], index: 0, kind: input, shape index: {}]
  %s1 = inlined_call_operand.vmem [shape: f32[8,8], index: 1, kind: input, shape index: {}]
  %s2 = inlined_call_operand.vmem [shape: f32[8,1], index: 2, kind: input, shape index: {}]
  %s3 = inlined_call_operand.vmem [shape: f32[8,1], index: 3, kind: input, shape index: {}]
  %s4 = inlined_call_operand.vmem [shape: bf16[16,8], index: 4, kind: input, shape index: {}]
  %s5 = inlined_call_operand.hbm [shape: f32[16,16], index: 5, kind: input, shape index: {}]
  %s6 = inlined_call_operand.vmem [shape: f32[16,1], index: 6, kind: input, shape index: {}]
  %s7 = inlined_call_operand.vmem [shape: f32[16,1], index: 7, kind: input, shape index: {}]
  %s8 = inlined_call_operand.hbm [shape: bf16[8,432], index: 8, kind: input, shape index: {}]
  %s9 = inlined_call_operand.vmem [shape: f32[27,1,512], index: 9, kind: input, shape index: {}]
  %s10 = inlined_call_operand.hbm [shape: f32[8,8], index: 10, kind: input, shape index: {}]
  %s11 = inlined_call_operand.vmem [shape: f32[8,1], index: 11, kind: input, shape index: {}]
  %s12 = inlined_call_operand.vmem [shape: f32[8,1], index: 12, kind: input, shape index: {}]
  %s13 = inlined_call_operand.vmem [shape: bf16[8,8], index: 13, kind: input, shape index: {}]
  %s14 = inlined_call_operand.hbm [shape: f32[2,8,512], index: 14, kind: output, shape index: {}]
  %s15 = sld [smem:[#allocation0]]
  $region105: #{tpu_custom_call.1} parent=0
    _
  %s17 = ssub.s32 1, %s15
  %s18 = scalar_select 0, %s17, %s15
  $region1: #{tpu_custom_call.1} parent=0
    #allocation2 [shape = 'u8[32768]{0}', space=vmem, size = 0x8000, scoped, tag = 'input window, operand 0']
    #allocation3 [shape = 's32[2]{0}', space=sflag, size = 0x8, scoped, tag = 'scoped memory for tpu_custom_call.1']
    #allocation4 [shape = 's32[2]{0}', space=sflag, size = 0x8, scoped, tag = 'scoped memory for tpu_custom_call.1']
    #allocation5 [shape = 'u8[8192]{0}', space=vmem, size = 0x2000, scoped, tag = 'input window, operand 5, single buffered']
    #allocation6 [shape = 's32[1]{0}', space=sflag, size = 0x4, scoped, tag = 'scoped memory for tpu_custom_call.1']
    #allocation7 [shape = 'u8[8192]{0}', space=vmem, size = 0x2000, scoped, tag = 'input window, operand 8, single buffered']
    #allocation8 [shape = 'u8[4096]{0}', space=vmem, size = 0x1000, scoped, tag = 'input window, operand 10, single buffered']
    #allocation9 [shape = 's32[1]{0}', space=sflag, size = 0x4, scoped, tag = 'scoped memory for tpu_custom_call.1']
    #allocation10 [shape = 'u8[32768]{0}', space=vmem, size = 0x8000, scoped, tag = 'output window, operand 0']
    %19 = vsyncpa [#allocation3], 0
    %s20 = scalar_lea.sflag [#allocation3], 1
    %21 = vsyncpa %s20, 0
    %22 = vsyncpa [#allocation6], 0
    %23 = vsyncpa [#allocation9], 0
    %24 = vsyncpa [#allocation4], 0
    %s25 = scalar_lea.sflag [#allocation4], 1
    %26 = vsyncpa %s25, 0
    loop: start=0, step=1, limit=4
    $region2: #{tpu_custom_call.1} parent=1 // loop_pre_header
      _
    $region3: #{tpu_custom_call.1} parent=1 // loop_header
      %s28 = sphi 0, %s32
      %p29 = scmp.ge.s32.totalorder %s28, 4
      %s38 = sphi 0, %s40
      %s41 = sphi 0, %s38
      %s42 = sphi 0, %s41
      %s58 = sphi 0, %s42
      %s62 = sphi 0, %s62
      %s64 = sphi 0, %s62
      %s65 = sphi 0, %s64
      %s79 = sphi 0, %s65
      %s83 = sphi 0, %s83
      %s85 = sphi 0, %s83
      %s86 = sphi 0, %s85
      %s100 = sphi 0, %s86
      %s104 = sphi 0, %s104
      %s106 = sphi 0, %s104
      %s107 = sphi 0, %s106
      %s121 = sphi 0, %s107
      %s125 = sphi 0, %s125
      %s127 = sphi 0, %s125
      %s128 = sphi 0, %s127
      %s142 = sphi 0, %s128
      %s146 = sphi 0, %s146
      %s148 = sphi 0, %s146
      %s149 = sphi 0, %s148
      %s163 = sphi 0, %s149
      %s167 = sphi 0, %s167
      %s169 = sphi 0, %s167
      %s170 = sphi 0, %s169
      %s184 = sphi 0, %s170
      %s188 = sphi 0, %s188
      %s190 = sphi 0, %s188
      %s191 = sphi 0, %s190
      %s205 = sphi 0, %s191
      %s209 = sphi 0, %s209
      %s211 = sphi 0, %s209
      %s212 = sphi 0, %s211
      %s226 = sphi 0, %s212
      %s230 = sphi 0, %s230
      %s232 = sphi 0, %s230
      %s233 = sphi 0, %s232
      %s247 = sphi 0, %s233
      %s251 = sphi 0, %s251
      %s253 = sphi 0, %s251
      %s254 = sphi 0, %s253
      %s268 = sphi 0, %s254
      %s272 = sphi 0, %s272
      %s274 = sphi 0, %s272
      %s275 = sphi 0, %s274
      %s289 = sphi 0, %s275
      %s293 = sphi 0, %s293
      %s295 = sphi 0, %s293
      %s296 = sphi 0, %s295
      %s310 = sphi 0, %s296
      %s314 = sphi 0, %s314
      %s316 = sphi 0, %s314
      %s317 = sphi 0, %s316
      %s331 = sphi 0, %s317
      %s337 = sphi 0, %s339
      %s340 = sphi 0, %s337
      %s341 = sphi 0, %s340
      %s357 = sphi 0, %s341
    $region4: #{tpu_custom_call.1} parent=1 // loop_header_branch
      %31 = sbr.rel (%p29) target = $region8
    $region5: #{tpu_custom_call.1} parent=1 // loop_body
      %s33 = ssub.s32 %s28, 1
      %s34 = ssub.s32 %s28, 2
      %s35 = sadd.s32 %s28, 1
      %s36 = ssub.s32 %s28, %s35
      %p37 = scmp.eq.s32.totalorder %s36, 0
      %s39 = sadd.s32 %s38, 1
      %s40 = scalar_select %p37, %s38, %s39
      %p43 = pneg %p37
      %p44 = scmp.eq.s32.totalorder %s28, 1
      %p45 = por %p43, %p44
      %p46 = scmp.ne.s32.totalorder %s38, %s41
      %p47 = scmp.eq.s32.totalorder %s28, 0
      %p48 = por %p46, %p47
      %p49 = scmp.ne.s32.totalorder %s38, %s41
      %p50 = scmp.eq.s32.totalorder %s33, 1
      %p51 = por %p49, %p50
      %p52 = scmp.ne.s32.totalorder %s41, %s42
      %p53 = scmp.eq.s32.totalorder %s33, 0
      %p54 = por %p52, %p53
      %p55 = scmp.ne.s32.totalorder %s41, %s42
      %p56 = scmp.eq.s32.totalorder %s34, 1
      %p57 = por %p55, %p56
      %p59 = scmp.ne.s32.totalorder %s42, %s58
      %p60 = scmp.eq.s32.totalorder %s34, 0
      %p61 = por %p59, %p60
      %s63 = sadd.s32 %s62, 1
      %p66 = scmp.eq.s32.totalorder %s28, 1
      %p67 = scmp.ne.s32.totalorder %s62, %s64
      %p68 = scmp.eq.s32.totalorder %s28, 0
      %p69 = por %p67, %p68
      %p70 = scmp.ne.s32.totalorder %s62, %s64
      %p71 = scmp.eq.s32.totalorder %s33, 1
      %p72 = por %p70, %p71
      %p73 = scmp.ne.s32.totalorder %s64, %s65
      %p74 = scmp.eq.s32.totalorder %s33, 0
      %p75 = por %p73, %p74
      %p76 = scmp.ne.s32.totalorder %s64, %s65
      %p77 = scmp.eq.s32.totalorder %s34, 1
      %p78 = por %p76, %p77
      %p80 = scmp.ne.s32.totalorder %s65, %s79
      %p81 = scmp.eq.s32.totalorder %s34, 0
      %p82 = por %p80, %p81
      %s84 = sadd.s32 %s83, 1
      %p87 = scmp.eq.s32.totalorder %s28, 1
      %p88 = scmp.ne.s32.totalorder %s83, %s85
      %p89 = scmp.eq.s32.totalorder %s28, 0
      %p90 = por %p88, %p89
      %p91 = scmp.ne.s32.totalorder %s83, %s85
      %p92 = scmp.eq.s32.totalorder %s33, 1
      %p93 = por %p91, %p92
      %p94 = scmp.ne.s32.totalorder %s85, %s86
      %p95 = scmp.eq.s32.totalorder %s33, 0
      %p96 = por %p94, %p95
      %p97 = scmp.ne.s32.totalorder %s85, %s86
      %p98 = scmp.eq.s32.totalorder %s34, 1
      %p99 = por %p97, %p98
      %p101 = scmp.ne.s32.totalorder %s86, %s100
      %p102 = scmp.eq.s32.totalorder %s34, 0
      %p103 = por %p101, %p102
      %s105 = sadd.s32 %s104, 1
      %p108 = scmp.eq.s32.totalorder %s28, 1
      %p109 = scmp.ne.s32.totalorder %s104, %s106
      %p110 = scmp.eq.s32.totalorder %s28, 0
      %p111 = por %p109, %p110
      %p112 = scmp.ne.s32.totalorder %s104, %s106
      %p113 = scmp.eq.s32.totalorder %s33, 1
      %p114 = por %p112, %p113
      %p115 = scmp.ne.s32.totalorder %s106, %s107
      %p116 = scmp.eq.s32.totalorder %s33, 0
      %p117 = por %p115, %p116
      %p118 = scmp.ne.s32.totalorder %s106, %s107
      %p119 = scmp.eq.s32.totalorder %s34, 1
      %p120 = por %p118, %p119
      %p122 = scmp.ne.s32.totalorder %s107, %s121
      %p123 = scmp.eq.s32.totalorder %s34, 0
      %p124 = por %p122, %p123
      %s126 = sadd.s32 %s125, 1
      %p129 = scmp.eq.s32.totalorder %s28, 1
      %p130 = scmp.ne.s32.totalorder %s125, %s127
      %p131 = scmp.eq.s32.totalorder %s28, 0
      %p132 = por %p130, %p131
      %p133 = scmp.ne.s32.totalorder %s125, %s127
      %p134 = scmp.eq.s32.totalorder %s33, 1
      %p135 = por %p133, %p134
      %p136 = scmp.ne.s32.totalorder %s127, %s128
      %p137 = scmp.eq.s32.totalorder %s33, 0
      %p138 = por %p136, %p137
      %p139 = scmp.ne.s32.totalorder %s127, %s128
      %p140 = scmp.eq.s32.totalorder %s34, 1
      %p141 = por %p139, %p140
      %p143 = scmp.ne.s32.totalorder %s128, %s142
      %p144 = scmp.eq.s32.totalorder %s34, 0
      %p145 = por %p143, %p144
      %s147 = sadd.s32 %s146, 1
      %p150 = scmp.eq.s32.totalorder %s28, 1
      %p151 = scmp.ne.s32.totalorder %s146, %s148
      %p152 = scmp.eq.s32.totalorder %s28, 0
      %p153 = por %p151, %p152
      %p154 = scmp.ne.s32.totalorder %s146, %s148
      %p155 = scmp.eq.s32.totalorder %s33, 1
      %p156 = por %p154, %p155
      %p157 = scmp.ne.s32.totalorder %s148, %s149
      %p158 = scmp.eq.s32.totalorder %s33, 0
      %p159 = por %p157, %p158
      %p160 = scmp.ne.s32.totalorder %s148, %s149
      %p161 = scmp.eq.s32.totalorder %s34, 1
      %p162 = por %p160, %p161
      %p164 = scmp.ne.s32.totalorder %s149, %s163
      %p165 = scmp.eq.s32.totalorder %s34, 0
      %p166 = por %p164, %p165
      %s168 = sadd.s32 %s167, 1
      %p171 = scmp.eq.s32.totalorder %s28, 1
      %p172 = scmp.ne.s32.totalorder %s167, %s169
      %p173 = scmp.eq.s32.totalorder %s28, 0
      %p174 = por %p172, %p173
      %p175 = scmp.ne.s32.totalorder %s167, %s169
      %p176 = scmp.eq.s32.totalorder %s33, 1
      %p177 = por %p175, %p176
      %p178 = scmp.ne.s32.totalorder %s169, %s170
      %p179 = scmp.eq.s32.totalorder %s33, 0
      %p180 = por %p178, %p179
      %p181 = scmp.ne.s32.totalorder %s169, %s170
      %p182 = scmp.eq.s32.totalorder %s34, 1
      %p183 = por %p181, %p182
      %p185 = scmp.ne.s32.totalorder %s170, %s184
      %p186 = scmp.eq.s32.totalorder %s34, 0
      %p187 = por %p185, %p186
      %s189 = sadd.s32 %s188, 1
      %p192 = scmp.eq.s32.totalorder %s28, 1
      %p193 = scmp.ne.s32.totalorder %s188, %s190
      %p194 = scmp.eq.s32.totalorder %s28, 0
      %p195 = por %p193, %p194
      %p196 = scmp.ne.s32.totalorder %s188, %s190
      %p197 = scmp.eq.s32.totalorder %s33, 1
      %p198 = por %p196, %p197
      %p199 = scmp.ne.s32.totalorder %s190, %s191
      %p200 = scmp.eq.s32.totalorder %s33, 0
      %p201 = por %p199, %p200
      %p202 = scmp.ne.s32.totalorder %s190, %s191
      %p203 = scmp.eq.s32.totalorder %s34, 1
      %p204 = por %p202, %p203
      %p206 = scmp.ne.s32.totalorder %s191, %s205
      %p207 = scmp.eq.s32.totalorder %s34, 0
      %p208 = por %p206, %p207
      %s210 = sadd.s32 %s209, 1
      %p213 = scmp.eq.s32.totalorder %s28, 1
      %p214 = scmp.ne.s32.totalorder %s209, %s211
      %p215 = scmp.eq.s32.totalorder %s28, 0
      %p216 = por %p214, %p215
      %p217 = scmp.ne.s32.totalorder %s209, %s211
      %p218 = scmp.eq.s32.totalorder %s33, 1
      %p219 = por %p217, %p218
      %p220 = scmp.ne.s32.totalorder %s211, %s212
      %p221 = scmp.eq.s32.totalorder %s33, 0
      %p222 = por %p220, %p221
      %p223 = scmp.ne.s32.totalorder %s211, %s212
      %p224 = scmp.eq.s32.totalorder %s34, 1
      %p225 = por %p223, %p224
      %p227 = scmp.ne.s32.totalorder %s212, %s226
      %p228 = scmp.eq.s32.totalorder %s34, 0
      %p229 = por %p227, %p228
      %s231 = sadd.s32 %s230, 1
      %p234 = scmp.eq.s32.totalorder %s28, 1
      %p235 = scmp.ne.s32.totalorder %s230, %s232
      %p236 = scmp.eq.s32.totalorder %s28, 0
      %p237 = por %p235, %p236
      %p238 = scmp.ne.s32.totalorder %s230, %s232
      %p239 = scmp.eq.s32.totalorder %s33, 1
      %p240 = por %p238, %p239
      %p241 = scmp.ne.s32.totalorder %s232, %s233
      %p242 = scmp.eq.s32.totalorder %s33, 0
      %p243 = por %p241, %p242
      %p244 = scmp.ne.s32.totalorder %s232, %s233
      %p245 = scmp.eq.s32.totalorder %s34, 1
      %p246 = por %p244, %p245
      %p248 = scmp.ne.s32.totalorder %s233, %s247
      %p249 = scmp.eq.s32.totalorder %s34, 0
      %p250 = por %p248, %p249
      %s252 = sadd.s32 %s251, 1
      %p255 = scmp.eq.s32.totalorder %s28, 1
      %p256 = scmp.ne.s32.totalorder %s251, %s253
      %p257 = scmp.eq.s32.totalorder %s28, 0
      %p258 = por %p256, %p257
      %p259 = scmp.ne.s32.totalorder %s251, %s253
      %p260 = scmp.eq.s32.totalorder %s33, 1
      %p261 = por %p259, %p260
      %p262 = scmp.ne.s32.totalorder %s253, %s254
      %p263 = scmp.eq.s32.totalorder %s33, 0
      %p264 = por %p262, %p263
      %p265 = scmp.ne.s32.totalorder %s253, %s254
      %p266 = scmp.eq.s32.totalorder %s34, 1
      %p267 = por %p265, %p266
      %p269 = scmp.ne.s32.totalorder %s254, %s268
      %p270 = scmp.eq.s32.totalorder %s34, 0
      %p271 = por %p269, %p270
      %s273 = sadd.s32 %s272, 1
      %p276 = scmp.eq.s32.totalorder %s28, 1
      %p277 = scmp.ne.s32.totalorder %s272, %s274
      %p278 = scmp.eq.s32.totalorder %s28, 0
      %p279 = por %p277, %p278
      %p280 = scmp.ne.s32.totalorder %s272, %s274
      %p281 = scmp.eq.s32.totalorder %s33, 1
      %p282 = por %p280, %p281
      %p283 = scmp.ne.s32.totalorder %s274, %s275
      %p284 = scmp.eq.s32.totalorder %s33, 0
      %p285 = por %p283, %p284
      %p286 = scmp.ne.s32.totalorder %s274, %s275
      %p287 = scmp.eq.s32.totalorder %s34, 1
      %p288 = por %p286, %p287
      %p290 = scmp.ne.s32.totalorder %s275, %s289
      %p291 = scmp.eq.s32.totalorder %s34, 0
      %p292 = por %p290, %p291
      %s294 = sadd.s32 %s293, 1
      %p297 = scmp.eq.s32.totalorder %s28, 1
      %p298 = scmp.ne.s32.totalorder %s293, %s295
      %p299 = scmp.eq.s32.totalorder %s28, 0
      %p300 = por %p298, %p299
      %p301 = scmp.ne.s32.totalorder %s293, %s295
      %p302 = scmp.eq.s32.totalorder %s33, 1
      %p303 = por %p301, %p302
      %p304 = scmp.ne.s32.totalorder %s295, %s296
      %p305 = scmp.eq.s32.totalorder %s33, 0
      %p306 = por %p304, %p305
      %p307 = scmp.ne.s32.totalorder %s295, %s296
      %p308 = scmp.eq.s32.totalorder %s34, 1
      %p309 = por %p307, %p308
      %p311 = scmp.ne.s32.totalorder %s296, %s310
      %p312 = scmp.eq.s32.totalorder %s34, 0
      %p313 = por %p311, %p312
      %s315 = sadd.s32 %s314, 1
      %p318 = scmp.eq.s32.totalorder %s28, 1
      %p319 = scmp.ne.s32.totalorder %s314, %s316
      %p320 = scmp.eq.s32.totalorder %s28, 0
      %p321 = por %p319, %p320
      %p322 = scmp.ne.s32.totalorder %s314, %s316
      %p323 = scmp.eq.s32.totalorder %s33, 1
      %p324 = por %p322, %p323
      %p325 = scmp.ne.s32.totalorder %s316, %s317
      %p326 = scmp.eq.s32.totalorder %s33, 0
      %p327 = por %p325, %p326
      %p328 = scmp.ne.s32.totalorder %s316, %s317
      %p329 = scmp.eq.s32.totalorder %s34, 1
      %p330 = por %p328, %p329
      %p332 = scmp.ne.s32.totalorder %s317, %s331
      %p333 = scmp.eq.s32.totalorder %s34, 0
      %p334 = por %p332, %p333
      %s335 = ssub.s32 %s28, %s35
      %p336 = scmp.eq.s32.totalorder %s335, 0
      %s338 = sadd.s32 %s337, 1
      %s339 = scalar_select %p336, %s337, %s338
      %p342 = pneg %p336
      %p343 = scmp.eq.s32.totalorder %s28, 1
      %p344 = por %p342, %p343
      %p345 = scmp.ne.s32.totalorder %s337, %s340
      %p346 = scmp.eq.s32.totalorder %s28, 0
      %p347 = por %p345, %p346
      %p348 = scmp.ne.s32.totalorder %s337, %s340
      %p349 = scmp.eq.s32.totalorder %s33, 1
      %p350 = por %p348, %p349
      %p351 = scmp.ne.s32.totalorder %s340, %s341
      %p352 = scmp.eq.s32.totalorder %s33, 0
      %p353 = por %p351, %p352
      %p354 = scmp.ne.s32.totalorder %s340, %s341
      %p355 = scmp.eq.s32.totalorder %s34, 1
      %p356 = por %p354, %p355
      %p358 = scmp.ne.s32.totalorder %s341, %s357
      %p359 = scmp.eq.s32.totalorder %s34, 0
      %p360 = por %p358, %p359
      %p361 = scmp.le.s32.totalorder 1, %s28
      %p362 = scmp.lt.s32.totalorder %s28, 3
      %p363 = pnand %p361, %p362
      %p364 = pneg %p363
      // Predicated region
      $region9: #{tpu_custom_call.1} parent=5 // pred_check
        _
      $region10: #{tpu_custom_call.1} parent=5 // pred_check_branch
        %366 = sbr.rel (%p363) target = $region12
      $region11: #{tpu_custom_call.1} parent=5 // pred_region
        %s367 = ssub.s32 %s28, 1
        // Predicated region
        $region13: #{tpu_custom_call.1} parent=11 // pred_check
          %p368 = pneg %p75
        $region14: #{tpu_custom_call.1} parent=11 // pred_check_branch
          %370 = sbr.rel (%p368) target = $region16
        $region15: #{tpu_custom_call.1} parent=11 // pred_region
          _
        $region16: #{tpu_custom_call.1} parent=11 // pred_fallthru
          _
        // Predicated region
        $region17: #{tpu_custom_call.1} parent=11 // pred_check
          %p371 = pneg %p96
        $region18: #{tpu_custom_call.1} parent=11 // pred_check_branch
          %373 = sbr.rel (%p371) target = $region20
        $region19: #{tpu_custom_call.1} parent=11 // pred_region
          _
        $region20: #{tpu_custom_call.1} parent=11 // pred_fallthru
          _
        // Predicated region
        $region21: #{tpu_custom_call.1} parent=11 // pred_check
          %p374 = pneg %p117
        $region22: #{tpu_custom_call.1} parent=11 // pred_check_branch
          %376 = sbr.rel (%p374) target = $region24
        $region23: #{tpu_custom_call.1} parent=11 // pred_region
          _
        $region24: #{tpu_custom_call.1} parent=11 // pred_fallthru
          _
        // Predicated region
        $region25: #{tpu_custom_call.1} parent=11 // pred_check
          %p377 = pneg %p138
        $region26: #{tpu_custom_call.1} parent=11 // pred_check_branch
          %379 = sbr.rel (%p377) target = $region28
        $region27: #{tpu_custom_call.1} parent=11 // pred_region
          _
        $region28: #{tpu_custom_call.1} parent=11 // pred_fallthru
          _
        // Predicated region
        $region29: #{tpu_custom_call.1} parent=11 // pred_check
          %p380 = pneg %p159
        $region30: #{tpu_custom_call.1} parent=11 // pred_check_branch
          %382 = sbr.rel (%p380) target = $region32
        $region31: #{tpu_custom_call.1} parent=11 // pred_region
          %s384 = ssub.s32 256, 256
          %385 = vsyncadd [#allocation6], %s384
          %s386 = sshll.u32 [#allocation5], 4
          %s387 = int_to_ptr.vmem [resolvable:$true] %s386
          %392 = dma.hbm_to_vmem [thread:$0]  %s5, 256, %s387, [#allocation6], 128, 128, 8
        $region32: #{tpu_custom_call.1} parent=11 // pred_fallthru
          _
        // Predicated region
        $region33: #{tpu_custom_call.1} parent=11 // pred_check
          %p393 = pneg %p180
        $region34: #{tpu_custom_call.1} parent=11 // pred_check_branch
          %395 = sbr.rel (%p393) target = $region36
        $region35: #{tpu_custom_call.1} parent=11 // pred_region
          _
        $region36: #{tpu_custom_call.1} parent=11 // pred_fallthru
          _
        // Predicated region
        $region37: #{tpu_custom_call.1} parent=11 // pred_check
          %p396 = pneg %p201
        $region38: #{tpu_custom_call.1} parent=11 // pred_check_branch
          %398 = sbr.rel (%p396) target = $region40
        $region39: #{tpu_custom_call.1} parent=11 // pred_region
          _
        $region40: #{tpu_custom_call.1} parent=11 // pred_fallthru
          _
        // Predicated region
        $region41: #{tpu_custom_call.1} parent=11 // pred_check
          %p399 = pneg %p222
        $region42: #{tpu_custom_call.1} parent=11 // pred_check_branch
          %401 = sbr.rel (%p399) target = $region44
        $region43: #{tpu_custom_call.1} parent=11 // pred_region
          %s403 = ssub.s32 256, 256
          %404 = vsyncadd [#allocation6], %s403
          %s406 = sshll.u32 [#allocation7], 4
          %s407 = int_to_ptr.vmem [resolvable:$true] %s406
          %409 = dma.hbm_to_vmem [thread:$0]  %s8, 256, %s407, [#allocation6]
        $region44: #{tpu_custom_call.1} parent=11 // pred_fallthru
          _
        // Predicated region
        $region45: #{tpu_custom_call.1} parent=11 // pred_check
          %p410 = pneg %p243
        $region46: #{tpu_custom_call.1} parent=11 // pred_check_branch
          %412 = sbr.rel (%p410) target = $region48
        $region47: #{tpu_custom_call.1} parent=11 // pred_region
          _
        $region48: #{tpu_custom_call.1} parent=11 // pred_fallthru
          _
        // Predicated region
        $region49: #{tpu_custom_call.1} parent=11 // pred_check
          %p413 = pneg %p264
        $region50: #{tpu_custom_call.1} parent=11 // pred_check_branch
          %415 = sbr.rel (%p413) target = $region52
        $region51: #{tpu_custom_call.1} parent=11 // pred_region
          %s417 = ssub.s32 128, 128
          %418 = vsyncadd [#allocation9], %s417
          %s420 = sshll.u32 [#allocation8], 4
          %s421 = int_to_ptr.vmem [resolvable:$true] %s420
          %423 = dma.hbm_to_vmem [thread:$0]  %s10, 128, %s421, [#allocation9]
        $region52: #{tpu_custom_call.1} parent=11 // pred_fallthru
          _
        // Predicated region
        $region53: #{tpu_custom_call.1} parent=11 // pred_check
          %p424 = pneg %p285
        $region54: #{tpu_custom_call.1} parent=11 // pred_check_branch
          %426 = sbr.rel (%p424) target = $region56
        $region55: #{tpu_custom_call.1} parent=11 // pred_region
          _
        $region56: #{tpu_custom_call.1} parent=11 // pred_fallthru
          _
        // Predicated region
        $region57: #{tpu_custom_call.1} parent=11 // pred_check
          %p427 = pneg %p306
        $region58: #{tpu_custom_call.1} parent=11 // pred_check_branch
          %429 = sbr.rel (%p427) target = $region60
        $region59: #{tpu_custom_call.1} parent=11 // pred_region
          _
        $region60: #{tpu_custom_call.1} parent=11 // pred_fallthru
          _
        // Predicated region
        $region61: #{tpu_custom_call.1} parent=11 // pred_check
          %p430 = pneg %p327
        $region62: #{tpu_custom_call.1} parent=11 // pred_check_branch
          %432 = sbr.rel (%p430) target = $region64
        $region63: #{tpu_custom_call.1} parent=11 // pred_region
          _
        $region64: #{tpu_custom_call.1} parent=11 // pred_fallthru
          _
      $region12: #{tpu_custom_call.1} parent=5 // pred_fallthru
        _
      %p433 = scmp.lt.s32.totalorder %s28, 2
      // Predicated region
      $region65: #{tpu_custom_call.1} parent=5 // pred_check
        %p434 = pneg %p433
      $region66: #{tpu_custom_call.1} parent=5 // pred_check_branch
        %436 = sbr.rel (%p434) target = $region68
      $region67: #{tpu_custom_call.1} parent=5 // pred_region
        // Predicated region
        $region69: #{tpu_custom_call.1} parent=67 // pred_check
          %p437 = pneg %p48
        $region70: #{tpu_custom_call.1} parent=67 // pred_check_branch
          %439 = sbr.rel (%p437) target = $region72
        $region71: #{tpu_custom_call.1} parent=67 // pred_region
          %s440 = sand.u32 %s38, 1
          %s441 = scalar_lea.sflag [#allocation3], %s440
          %s442 = sand.u32 %s38, 1
          %s443 = smul.addr %s442, 32
          %s444 = scalar_lea.vmem [#allocation2], %s443
          %s446 = ssub.s32 512, 512
          %447 = vsyncadd %s441, %s446
          %s448 = smul.addr %s28, 4
          %s449 = smul.addr %s448, 128
          %s450 = scalar_lea.hbm %s0, %s449
          %s452 = sshll.u32 %s444, 4
          %s453 = int_to_ptr.vmem [resolvable:$true] %s452
          %455 = dma.hbm_to_vmem [thread:$0]  %s450, 512, %s453, %s441
        $region72: #{tpu_custom_call.1} parent=67 // pred_fallthru
          _
      $region68: #{tpu_custom_call.1} parent=5 // pred_fallthru
        _
      %p456 = scmp.le.s32.totalorder 1, %s28
      %p457 = scmp.lt.s32.totalorder %s28, 3
      %p458 = pnand %p456, %p457
      %p459 = pneg %p458
      // Predicated region
      $region73: #{tpu_custom_call.1} parent=5 // pred_check
        _
      $region74: #{tpu_custom_call.1} parent=5 // pred_check_branch
        %461 = sbr.rel (%p458) target = $region76
      $region75: #{tpu_custom_call.1} parent=5 // pred_region
        %s462 = ssub.s32 %s28, 1
        %s463 = sand.u32 %s41, 1
        %s464 = scalar_lea.sflag [#allocation3], %s463
        %s465 = sand.u32 %s41, 1
        %s466 = smul.addr %s465, 32
        %s467 = scalar_lea.vmem [#allocation2], %s466
        // Predicated region
        $region77: #{tpu_custom_call.1} parent=75 // pred_check
          %p468 = pneg %p54
        $region78: #{tpu_custom_call.1} parent=75 // pred_check_branch
          %470 = sbr.rel (%p468) target = $region80
        $region79: #{tpu_custom_call.1} parent=75 // pred_region
          %471 = dma.done %s464, 512
        $region80: #{tpu_custom_call.1} parent=75 // pred_fallthru
          _
        // Predicated region
        $region81: #{tpu_custom_call.1} parent=75 // pred_check
          %p472 = pneg %p159
        $region82: #{tpu_custom_call.1} parent=75 // pred_check_branch
          %474 = sbr.rel (%p472) target = $region84
        $region83: #{tpu_custom_call.1} parent=75 // pred_region
          %475 = dma.done [#allocation6], 256
        $region84: #{tpu_custom_call.1} parent=75 // pred_fallthru
          _
        // Predicated region
        $region85: #{tpu_custom_call.1} parent=75 // pred_check
          %p476 = pneg %p222
        $region86: #{tpu_custom_call.1} parent=75 // pred_check_branch
          %478 = sbr.rel (%p476) target = $region88
        $region87: #{tpu_custom_call.1} parent=75 // pred_region
          %479 = dma.done [#allocation6], 256
        $region88: #{tpu_custom_call.1} parent=75 // pred_fallthru
          _
        // Predicated region
        $region89: #{tpu_custom_call.1} parent=75 // pred_check
          %p480 = pneg %p264
        $region90: #{tpu_custom_call.1} parent=75 // pred_check_branch
          %482 = sbr.rel (%p480) target = $region92
        $region91: #{tpu_custom_call.1} parent=75 // pred_region
          %483 = dma.done [#allocation9], 128
        $region92: #{tpu_custom_call.1} parent=75 // pred_fallthru
          _
        %s484 = sand.u32 %s41, 1
        %s485 = scalar_lea.sflag [#allocation3], %s484
        %s486 = sand.u32 %s41, 1
        %s487 = smul.addr %s486, 32
        %s488 = scalar_lea.vmem [#allocation2], %s487
        %p489 = pneg %p54
        %p490 = pneg %p51
        %p491 = pneg %p75
        %p492 = pneg %p72
        %p493 = pneg %p96
        %p494 = pneg %p93
        %p495 = pneg %p117
        %p496 = pneg %p114
        %p497 = pneg %p138
        %p498 = pneg %p135
        %p499 = pneg %p159
        %p500 = pneg %p156
        %p501 = pneg %p180
        %p502 = pneg %p177
        %p503 = pneg %p201
        %p504 = pneg %p198
        %p505 = pneg %p222
        %p506 = pneg %p219
        %p507 = pneg %p243
        %p508 = pneg %p240
        %p509 = pneg %p264
        %p510 = pneg %p261
        %p511 = pneg %p285
        %p512 = pneg %p282
        %p513 = pneg %p306
        %p514 = pneg %p303
        %p515 = pneg %p327
        %p516 = pneg %p324
        %p517 = pneg %p353
        %p518 = pneg %p350
        %s519 = sand.u32 %s340, 1
        %s520 = scalar_lea.sflag [#allocation4], %s519
        %s521 = sand.u32 %s340, 1
        %s522 = smul.addr %s521, 32
        %s523 = scalar_lea.vmem [#allocation10], %s522
        %v525 = vld [vmem:[%s467] sm:$0xff]
        %v526 = vld [vmem:[%s467 + $0x8] sm:$0xff]
        %v527 = vld [vmem:[%s467 + $0x10] sm:$0xff]
        %v528 = vld [vmem:[%s467 + $0x18] sm:$0xff]
        %v529 = vld [vmem:[%s1] sm:$0xff]
        %v530 = vld [vmem:[%s2] sm:$0xff]
        %v531 = vld [vmem:[%s3] sm:$0xff]
        %v532 = vadd.f32 %v525, %v526
        %v533 = vadd.f32 %v532, %v527
        %v534 = vadd.f32 %v533, %v528
        %535 = vadd.xlane.f32.xlu0 %v534
        %v536 = vpop.xlane.xlu0 %535
        %vm537 = vcmask 64512
        %v539 = vsel %vm537, %v529, 0
        %541 = vmatprep.subr.mxu0 0.0
        %v542 = vand.u32 %v536, 4294901760
        %543 = vmatpush1.msra.mxu0 %v542
        %544 = vmatprep.subr.mxu0 0.0
        %545 = vmatpush1.msra.mxu0 0.0
        %546 = vmatprep.subr.mxu0 0.0
        %547 = vmatpush1.msra.mxu0 0.0
        %548 = vmatprep.subr.mxu0 0.0
        %549 = vmatpush1.msra.mxu0 0.0
        %550 = vmatprep.subr.mxu0 0.0
        %551 = vmatpush1.msra.mxu0 0.0
        %552 = vmatprep.subr.mxu0 0.0
        %553 = vmatpush1.msra.mxu0 0.0
        %554 = vmatprep.subr.mxu0 0.0
        %555 = vmatpush1.msra.mxu0 0.0
        %556 = vmatprep.subr.mxu0 0.0
        %557 = vmatpush1.msra.mxu0 0.0
        %558 = vmatprep.subr.mxu0 0.0
        %559 = vmatpush1.msra.mxu0 0.0
        %560 = vmatprep.subr.mxu0 0.0
        %561 = vmatpush1.msra.mxu0 0.0
        %562 = vmatprep.subr.mxu0 0.0
        %563 = vmatpush1.msra.mxu0 0.0
        %564 = vmatprep.subr.mxu0 0.0
        %565 = vmatpush1.msra.mxu0 0.0
        %566 = vmatprep.subr.mxu0 0.0
        %567 = vmatpush1.msra.mxu0 0.0
        %568 = vmatprep.subr.mxu0 0.0
        %569 = vmatpush1.msra.mxu0 0.0
        %570 = vmatprep.subr.mxu0 0.0
        %571 = vmatpush1.msra.mxu0 0.0
        %572 = vmatprep.subr.mxu0 0.0
        %573 = vmatpush1.msra.mxu0 0.0
        %574 = vmatprep.subr.mxu0 0.0
        %575 = vmatpush1.msra.mxu0 0.0
        %576 = vmatprep.subr.mxu0 0.0
        %577 = vmatpush1.msra.mxu0 0.0
        %578 = vmatprep.subr.mxu0 0.0
        %579 = vmatpush1.msra.mxu0 0.0
        %580 = vmatprep.subr.mxu0 0.0
        %581 = vmatpush1.msra.mxu0 0.0
        %582 = vmatprep.subr.mxu0 0.0
        %583 = vmatpush1.msra.mxu0 0.0
        %584 = vmatprep.subr.mxu0 0.0
        %585 = vmatpush1.msra.mxu0 0.0
        %586 = vmatprep.subr.mxu0 0.0
        %587 = vmatpush1.msra.mxu0 0.0
        %588 = vmatprep.subr.mxu0 0.0
        %589 = vmatpush1.msra.mxu0 0.0
        %590 = vmatprep.subr.mxu0 0.0
        %591 = vmatpush1.msra.mxu0 0.0
        %592 = vmatprep.subr.mxu0 0.0
        %593 = vmatpush1.msra.mxu0 0.0
        %594 = vmatprep.subr.mxu0 0.0
        %595 = vmatpush1.msra.mxu0 0.0
        %596 = vmatprep.subr.mxu0 0.0
        %597 = vmatpush1.msra.mxu0 0.0
        %598 = vmatprep.subr.mxu0 0.0
        %599 = vmatpush1.msra.mxu0 0.0
        %600 = vmatprep.subr.mxu0 0.0
        %601 = vmatpush1.msra.mxu0 0.0
        %602 = vmatprep.subr.mxu0 0.0
        %603 = vmatpush1.msra.mxu0 0.0
        %604 = vmatprep.subr.mxu0 0.0
        %605 = vmatpush1.msra.mxu0 0.0
        %606 = vmatprep.mubr.f32.mxu0 0.0
        %v607 = vand.u32 %v539, 4294901760
        %v608 = vsub.f32 %v539, %v607
        %v609 = vand.u32 %v608, 4294901760
        %v610 = vsub.f32 %v608, %v609
        %v611 = vand.u32 %v610, 4294901760
        %612 = vmatmul.mubr.f32.gmra.mrb[0].mxu0 %v611
        %v613 = vpop.f32.mrb[0].mxu0
        %v614 = vadd.f32 0.0, %v613
        %v615 = vpop.f32.mrb[0].mxu0
        %616 = vdwg.mxu0
        %617 = vmatprep.subr.mxu0 0.0
        %v618 = vand.u32 %v536, 4294901760
        %v619 = vsub.f32 %v536, %v618
        %v620 = vand.u32 %v619, 4294901760
        %v621 = vsub.f32 %v619, %v620
        %v622 = vand.u32 %v621, 4294901760
        %623 = vmatpush1.msra.mxu0 %v622
        %624 = vmatprep.subr.mxu0 0.0
        %625 = vmatpush1.msra.mxu0 0.0
        %626 = vmatprep.subr.mxu0 0.0
        %627 = vmatpush1.msra.mxu0 0.0
        %628 = vmatprep.subr.mxu0 0.0
        %629 = vmatpush1.msra.mxu0 0.0
        %630 = vmatprep.subr.mxu0 0.0
        %631 = vmatpush1.msra.mxu0 0.0
        %632 = vmatprep.subr.mxu0 0.0
        %633 = vmatpush1.msra.mxu0 0.0
        %634 = vmatprep.subr.mxu0 0.0
        %635 = vmatpush1.msra.mxu0 0.0
        %636 = vmatprep.subr.mxu0 0.0
        %637 = vmatpush1.msra.mxu0 0.0
        %638 = vmatprep.subr.mxu0 0.0
        %639 = vmatpush1.msra.mxu0 0.0
        %640 = vmatprep.subr.mxu0 0.0
        %641 = vmatpush1.msra.mxu0 0.0
        %642 = vmatprep.subr.mxu0 0.0
        %643 = vmatpush1.msra.mxu0 0.0
        %644 = vmatprep.subr.mxu0 0.0
        %645 = vmatpush1.msra.mxu0 0.0
        %646 = vmatprep.subr.mxu0 0.0
        %647 = vmatpush1.msra.mxu0 0.0
        %648 = vmatprep.subr.mxu0 0.0
        %649 = vmatpush1.msra.mxu0 0.0
        %650 = vmatprep.subr.mxu0 0.0
        %651 = vmatpush1.msra.mxu0 0.0
        %652 = vmatprep.subr.mxu0 0.0
        %653 = vmatpush1.msra.mxu0 0.0
        %654 = vmatprep.subr.mxu0 0.0
        %655 = vmatpush1.msra.mxu0 0.0
        %656 = vmatprep.subr.mxu0 0.0
        %657 = vmatpush1.msra.mxu0 0.0
        %658 = vmatprep.subr.mxu0 0.0
        %659 = vmatpush1.msra.mxu0 0.0
        %660 = vmatprep.subr.mxu0 0.0
        %661 = vmatpush1.msra.mxu0 0.0
        %662 = vmatprep.subr.mxu0 0.0
        %663 = vmatpush1.msra.mxu0 0.0
        %664 = vmatprep.subr.mxu0 0.0
        %665 = vmatpush1.msra.mxu0 0.0
        %666 = vmatprep.subr.mxu0 0.0
        %667 = vmatpush1.msra.mxu0 0.0
        %668 = vmatprep.subr.mxu0 0.0
        %669 = vmatpush1.msra.mxu0 0.0
        %670 = vmatprep.subr.mxu0 0.0
        %671 = vmatpush1.msra.mxu0 0.0
        %672 = vmatprep.subr.mxu0 0.0
        %673 = vmatpush1.msra.mxu0 0.0
        %674 = vmatprep.subr.mxu0 0.0
        %675 = vmatpush1.msra.mxu0 0.0
        %676 = vmatprep.subr.mxu0 0.0
        %677 = vmatpush1.msra.mxu0 0.0
        %678 = vmatprep.subr.mxu0 0.0
        %679 = vmatpush1.msra.mxu0 0.0
        %680 = vmatprep.subr.mxu0 0.0
        %681 = vmatpush1.msra.mxu0 0.0
        %682 = vmatprep.subr.mxu0 0.0
        %683 = vmatpush1.msra.mxu0 0.0
        %684 = vmatprep.subr.mxu0 0.0
        %685 = vmatpush1.msra.mxu0 0.0
        %686 = vmatprep.mubr.f32.mxu0 0.0
        %v687 = vand.u32 %v539, 4294901760
        %688 = vmatmul.mubr.f32.gmra.mrb[0].mxu0 %v687
        %v689 = vpop.f32.mrb[0].mxu0
        %v690 = vadd.f32 %v614, %v689
        %v691 = vpop.f32.mrb[0].mxu0
        %692 = vdwg.mxu0
        %693 = vmatprep.subr.mxu0 0.0
        %v694 = vand.u32 %v536, 4294901760
        %v695 = vsub.f32 %v536, %v694
        %696 = vmatpush1.msra.mxu0 %v695
        %697 = vmatprep.subr.mxu0 0.0
        %698 = vmatpush1.msra.mxu0 0.0
        %699 = vmatprep.subr.mxu0 0.0
        %700 = vmatpush1.msra.mxu0 0.0
        %701 = vmatprep.subr.mxu0 0.0
        %702 = vmatpush1.msra.mxu0 0.0
        %703 = vmatprep.subr.mxu0 0.0
        %704 = vmatpush1.msra.mxu0 0.0
        %705 = vmatprep.subr.mxu0 0.0
        %706 = vmatpush1.msra.mxu0 0.0
        %707 = vmatprep.subr.mxu0 0.0
        %708 = vmatpush1.msra.mxu0 0.0
        %709 = vmatprep.subr.mxu0 0.0
        %710 = vmatpush1.msra.mxu0 0.0
        %711 = vmatprep.subr.mxu0 0.0
        %712 = vmatpush1.msra.mxu0 0.0
        %713 = vmatprep.subr.mxu0 0.0
        %714 = vmatpush1.msra.mxu0 0.0
        %715 = vmatprep.subr.mxu0 0.0
        %716 = vmatpush1.msra.mxu0 0.0
        %717 = vmatprep.subr.mxu0 0.0
        %718 = vmatpush1.msra.mxu0 0.0
        %719 = vmatprep.subr.mxu0 0.0
        %720 = vmatpush1.msra.mxu0 0.0
        %721 = vmatprep.subr.mxu0 0.0
        %722 = vmatpush1.msra.mxu0 0.0
        %723 = vmatprep.subr.mxu0 0.0
        %724 = vmatpush1.msra.mxu0 0.0
        %725 = vmatprep.subr.mxu0 0.0
        %726 = vmatpush1.msra.mxu0 0.0
        %727 = vmatprep.subr.mxu0 0.0
        %728 = vmatpush1.msra.mxu0 0.0
        %729 = vmatprep.subr.mxu0 0.0
        %730 = vmatpush1.msra.mxu0 0.0
        %731 = vmatprep.subr.mxu0 0.0
        %732 = vmatpush1.msra.mxu0 0.0
        %733 = vmatprep.subr.mxu0 0.0
        %734 = vmatpush1.msra.mxu0 0.0
        %735 = vmatprep.subr.mxu0 0.0
        %736 = vmatpush1.msra.mxu0 0.0
        %737 = vmatprep.subr.mxu0 0.0
        %738 = vmatpush1.msra.mxu0 0.0
        %739 = vmatprep.subr.mxu0 0.0
        %740 = vmatpush1.msra.mxu0 0.0
        %741 = vmatprep.subr.mxu0 0.0
        %742 = vmatpush1.msra.mxu0 0.0
        %743 = vmatprep.subr.mxu0 0.0
        %744 = vmatpush1.msra.mxu0 0.0
        %745 = vmatprep.subr.mxu0 0.0
        %746 = vmatpush1.msra.mxu0 0.0
        %747 = vmatprep.subr.mxu0 0.0
        %748 = vmatpush1.msra.mxu0 0.0
        %749 = vmatprep.subr.mxu0 0.0
        %750 = vmatpush1.msra.mxu0 0.0
        %751 = vmatprep.subr.mxu0 0.0
        %752 = vmatpush1.msra.mxu0 0.0
        %753 = vmatprep.subr.mxu0 0.0
        %754 = vmatpush1.msra.mxu0 0.0
        %755 = vmatprep.subr.mxu0 0.0
        %756 = vmatpush1.msra.mxu0 0.0
        %757 = vmatprep.subr.mxu0 0.0
        %758 = vmatpush1.msra.mxu0 0.0
        %759 = vmatprep.mubr.f32.mxu0 0.0
        %v760 = vand.u32 %v539, 4294901760
        %v761 = vsub.f32 %v539, %v760
        %762 = vmatmul.mubr.f32.gmra.mrb[0].mxu0 %v761
        %v763 = vpop.f32.mrb[0].mxu0
        %v764 = vadd.f32 %v690, %v763
        %v765 = vpop.f32.mrb[0].mxu0
        %766 = vdwg.mxu0
        %767 = vmatprep.subr.mxu0 0.0
        %v768 = vand.u32 %v536, 4294901760
        %769 = vmatpush1.msra.mxu0 %v768
        %770 = vmatprep.subr.mxu0 0.0
        %771 = vmatpush1.msra.mxu0 0.0
        %772 = vmatprep.subr.mxu0 0.0
        %773 = vmatpush1.msra.mxu0 0.0
        %774 = vmatprep.subr.mxu0 0.0
        %775 = vmatpush1.msra.mxu0 0.0
        %776 = vmatprep.subr.mxu0 0.0
        %777 = vmatpush1.msra.mxu0 0.0
        %778 = vmatprep.subr.mxu0 0.0
        %779 = vmatpush1.msra.mxu0 0.0
        %780 = vmatprep.subr.mxu0 0.0
        %781 = vmatpush1.msra.mxu0 0.0
        %782 = vmatprep.subr.mxu0 0.0
        %783 = vmatpush1.msra.mxu0 0.0
        %784 = vmatprep.subr.mxu0 0.0
        %785 = vmatpush1.msra.mxu0 0.0
        %786 = vmatprep.subr.mxu0 0.0
        %787 = vmatpush1.msra.mxu0 0.0
        %788 = vmatprep.subr.mxu0 0.0
        %789 = vmatpush1.msra.mxu0 0.0
        %790 = vmatprep.subr.mxu0 0.0
        %791 = vmatpush1.msra.mxu0 0.0
        %792 = vmatprep.subr.mxu0 0.0
        %793 = vmatpush1.msra.mxu0 0.0
        %794 = vmatprep.subr.mxu0 0.0
        %795 = vmatpush1.msra.mxu0 0.0
        %796 = vmatprep.subr.mxu0 0.0
        %797 = vmatpush1.msra.mxu0 0.0
        %798 = vmatprep.subr.mxu0 0.0
        %799 = vmatpush1.msra.mxu0 0.0
        %800 = vmatprep.subr.mxu0 0.0
        %801 = vmatpush1.msra.mxu0 0.0
        %802 = vmatprep.subr.mxu0 0.0
        %803 = vmatpush1.msra.mxu0 0.0
        %804 = vmatprep.subr.mxu0 0.0
        %805 = vmatpush1.msra.mxu0 0.0
        %806 = vmatprep.subr.mxu0 0.0
        %807 = vmatpush1.msra.mxu0 0.0
        %808 = vmatprep.subr.mxu0 0.0
        %809 = vmatpush1.msra.mxu0 0.0
        %810 = vmatprep.subr.mxu0 0.0
        %811 = vmatpush1.msra.mxu0 0.0
        %812 = vmatprep.subr.mxu0 0.0
        %813 = vmatpush1.msra.mxu0 0.0
        %814 = vmatprep.subr.mxu0 0.0
        %815 = vmatpush1.msra.mxu0 0.0
        %816 = vmatprep.subr.mxu0 0.0
        %817 = vmatpush1.msra.mxu0 0.0
        %818 = vmatprep.subr.mxu0 0.0
        %819 = vmatpush1.msra.mxu0 0.0
        %820 = vmatprep.subr.mxu0 0.0
        %821 = vmatpush1.msra.mxu0 0.0
        %822 = vmatprep.subr.mxu0 0.0
        %823 = vmatpush1.msra.mxu0 0.0
        %824 = vmatprep.subr.mxu0 0.0
        %825 = vmatpush1.msra.mxu0 0.0
        %826 = vmatprep.subr.mxu0 0.0
        %827 = vmatpush1.msra.mxu0 0.0
        %828 = vmatprep.subr.mxu0 0.0
        %829 = vmatpush1.msra.mxu0 0.0
        %830 = vmatprep.subr.mxu0 0.0
        %831 = vmatpush1.msra.mxu0 0.0
        %832 = vmatprep.mubr.f32.mxu0 0.0
        %v833 = vand.u32 %v539, 4294901760
        %v834 = vsub.f32 %v539, %v833
        %v835 = vand.u32 %v834, 4294901760
        %836 = vmatmul.mubr.f32.gmra.mrb[0].mxu0 %v835
        %v837 = vpop.f32.mrb[0].mxu0
        %v838 = vadd.f32 %v764, %v837
        %v839 = vpop.f32.mrb[0].mxu0
        %840 = vdwg.mxu0
        %841 = vmatprep.subr.mxu0 0.0
        %v842 = vand.u32 %v536, 4294901760
        %v843 = vsub.f32 %v536, %v842
        %v844 = vand.u32 %v843, 4294901760
        %845 = vmatpush1.msra.mxu0 %v844
        %846 = vmatprep.subr.mxu0 0.0
        %847 = vmatpush1.msra.mxu0 0.0
        %848 = vmatprep.subr.mxu0 0.0
        %849 = vmatpush1.msra.mxu0 0.0
        %850 = vmatprep.subr.mxu0 0.0
        %851 = vmatpush1.msra.mxu0 0.0
        %852 = vmatprep.subr.mxu0 0.0
        %853 = vmatpush1.msra.mxu0 0.0
        %854 = vmatprep.subr.mxu0 0.0
        %855 = vmatpush1.msra.mxu0 0.0
        %856 = vmatprep.subr.mxu0 0.0
        %857 = vmatpush1.msra.mxu0 0.0
        %858 = vmatprep.subr.mxu0 0.0
        %859 = vmatpush1.msra.mxu0 0.0
        %860 = vmatprep.subr.mxu0 0.0
        %861 = vmatpush1.msra.mxu0 0.0
        %862 = vmatprep.subr.mxu0 0.0
        %863 = vmatpush1.msra.mxu0 0.0
        %864 = vmatprep.subr.mxu0 0.0
        %865 = vmatpush1.msra.mxu0 0.0
        %866 = vmatprep.subr.mxu0 0.0
        %867 = vmatpush1.msra.mxu0 0.0
        %868 = vmatprep.subr.mxu0 0.0
        %869 = vmatpush1.msra.mxu0 0.0
        %870 = vmatprep.subr.mxu0 0.0
        %871 = vmatpush1.msra.mxu0 0.0
        %872 = vmatprep.subr.mxu0 0.0
        %873 = vmatpush1.msra.mxu0 0.0
        %874 = vmatprep.subr.mxu0 0.0
        %875 = vmatpush1.msra.mxu0 0.0
        %876 = vmatprep.subr.mxu0 0.0
        %877 = vmatpush1.msra.mxu0 0.0
        %878 = vmatprep.subr.mxu0 0.0
        %879 = vmatpush1.msra.mxu0 0.0
        %880 = vmatprep.subr.mxu0 0.0
        %881 = vmatpush1.msra.mxu0 0.0
        %882 = vmatprep.subr.mxu0 0.0
        %883 = vmatpush1.msra.mxu0 0.0
        %884 = vmatprep.subr.mxu0 0.0
        %885 = vmatpush1.msra.mxu0 0.0
        %886 = vmatprep.subr.mxu0 0.0
        %887 = vmatpush1.msra.mxu0 0.0
        %888 = vmatprep.subr.mxu0 0.0
        %889 = vmatpush1.msra.mxu0 0.0
        %890 = vmatprep.subr.mxu0 0.0
        %891 = vmatpush1.msra.mxu0 0.0
        %892 = vmatprep.subr.mxu0 0.0
        %893 = vmatpush1.msra.mxu0 0.0
        %894 = vmatprep.subr.mxu0 0.0
        %895 = vmatpush1.msra.mxu0 0.0
        %896 = vmatprep.subr.mxu0 0.0
        %897 = vmatpush1.msra.mxu0 0.0
        %898 = vmatprep.subr.mxu0 0.0
        %899 = vmatpush1.msra.mxu0 0.0
        %900 = vmatprep.subr.mxu0 0.0
        %901 = vmatpush1.msra.mxu0 0.0
        %902 = vmatprep.subr.mxu0 0.0
        %903 = vmatpush1.msra.mxu0 0.0
        %904 = vmatprep.subr.mxu0 0.0
        %905 = vmatpush1.msra.mxu0 0.0
        %906 = vmatprep.subr.mxu0 0.0
        %907 = vmatpush1.msra.mxu0 0.0
        %908 = vmatprep.mubr.f32.mxu0 0.0
        %v909 = vand.u32 %v539, 4294901760
        %910 = vmatmul.mubr.f32.gmra.mrb[0].mxu0 %v909
        %v911 = vpop.f32.mrb[0].mxu0
        %v912 = vadd.f32 %v838, %v911
        %v913 = vpop.f32.mrb[0].mxu0
        %914 = vdwg.mxu0
        %915 = vmatprep.subr.mxu0 0.0
        %v916 = vand.u32 %v536, 4294901760
        %917 = vmatpush1.msra.mxu0 %v916
        %918 = vmatprep.subr.mxu0 0.0
        %919 = vmatpush1.msra.mxu0 0.0
        %920 = vmatprep.subr.mxu0 0.0
        %921 = vmatpush1.msra.mxu0 0.0
        %922 = vmatprep.subr.mxu0 0.0
        %923 = vmatpush1.msra.mxu0 0.0
        %924 = vmatprep.subr.mxu0 0.0
        %925 = vmatpush1.msra.mxu0 0.0
        %926 = vmatprep.subr.mxu0 0.0
        %927 = vmatpush1.msra.mxu0 0.0
        %928 = vmatprep.subr.mxu0 0.0
        %929 = vmatpush1.msra.mxu0 0.0
        %930 = vmatprep.subr.mxu0 0.0
        %931 = vmatpush1.msra.mxu0 0.0
        %932 = vmatprep.subr.mxu0 0.0
        %933 = vmatpush1.msra.mxu0 0.0
        %934 = vmatprep.subr.mxu0 0.0
        %935 = vmatpush1.msra.mxu0 0.0
        %936 = vmatprep.subr.mxu0 0.0
        %937 = vmatpush1.msra.mxu0 0.0
        %938 = vmatprep.subr.mxu0 0.0
        %939 = vmatpush1.msra.mxu0 0.0
        %940 = vmatprep.subr.mxu0 0.0
        %941 = vmatpush1.msra.mxu0 0.0
        %942 = vmatprep.subr.mxu0 0.0
        %943 = vmatpush1.msra.mxu0 0.0
        %944 = vmatprep.subr.mxu0 0.0
        %945 = vmatpush1.msra.mxu0 0.0
        %946 = vmatprep.subr.mxu0 0.0
        %947 = vmatpush1.msra.mxu0 0.0
        %948 = vmatprep.subr.mxu0 0.0
        %949 = vmatpush1.msra.mxu0 0.0
        %950 = vmatprep.subr.mxu0 0.0
        %951 = vmatpush1.msra.mxu0 0.0
        %952 = vmatprep.subr.mxu0 0.0
        %953 = vmatpush1.msra.mxu0 0.0
        %954 = vmatprep.subr.mxu0 0.0
        %955 = vmatpush1.msra.mxu0 0.0
        %956 = vmatprep.subr.mxu0 0.0
        %957 = vmatpush1.msra.mxu0 0.0
        %958 = vmatprep.subr.mxu0 0.0
        %959 = vmatpush1.msra.mxu0 0.0
        %960 = vmatprep.subr.mxu0 0.0
        %961 = vmatpush1.msra.mxu0 0.0
        %962 = vmatprep.subr.mxu0 0.0
        %963 = vmatpush1.msra.mxu0 0.0
        %964 = vmatprep.subr.mxu0 0.0
        %965 = vmatpush1.msra.mxu0 0.0
        %966 = vmatprep.subr.mxu0 0.0
        %967 = vmatpush1.msra.mxu0 0.0
        %968 = vmatprep.subr.mxu0 0.0
        %969 = vmatpush1.msra.mxu0 0.0
        %970 = vmatprep.subr.mxu0 0.0
        %971 = vmatpush1.msra.mxu0 0.0
        %972 = vmatprep.subr.mxu0 0.0
        %973 = vmatpush1.msra.mxu0 0.0
        %974 = vmatprep.subr.mxu0 0.0
        %975 = vmatpush1.msra.mxu0 0.0
        %976 = vmatprep.subr.mxu0 0.0
        %977 = vmatpush1.msra.mxu0 0.0
        %978 = vmatprep.subr.mxu0 0.0
        %979 = vmatpush1.msra.mxu0 0.0
        %980 = vmatprep.mubr.f32.mxu0 0.0
        %v981 = vand.u32 %v539, 4294901760
        %982 = vmatmul.mubr.f32.gmra.mrb[0].mxu0 %v981
        %v983 = vpop.f32.mrb[0].mxu0
        %v984 = vadd.f32 %v912, %v983
        %v985 = vpop.f32.mrb[0].mxu0
        %986 = vdwg.mxu0
        %v987 = vmul.f32 %v984, 0.00048828125
        %989 = vset.pattern.permute.xlu0 0
        %990 = vperm.xlu0 %989, %v987
        %v991 = vpop.permute.xlu0 %990
        %v993 = vsub.f32 %v525, %v991
        %v994 = vsub.f32 %v526, %v991
        %v995 = vsub.f32 %v527, %v991
        %v996 = vsub.f32 %v528, %v991
        %v997 = vmul.f32 %v993, %v993
        %v998 = vmul.f32 %v994, %v994
        %v999 = vmul.f32 %v995, %v995
        %v1000 = vmul.f32 %v996, %v996
        %v1001 = vadd.f32 %v997, %v998
        %v1002 = vadd.f32 %v1001, %v999
        %v1003 = vadd.f32 %v1002, %v1000
        %1004 = vadd.xlane.f32.xlu0 %v1003
        %v1005 = vpop.xlane.xlu0 %1004
        %1006 = vmatprep.subr.mxu0 0.0
        %v1007 = vand.u32 %v1005, 4294901760
        %1008 = vmatpush1.msra.mxu0 %v1007
        %1009 = vmatprep.subr.mxu0 0.0
        %1010 = vmatpush1.msra.mxu0 0.0
        %1011 = vmatprep.subr.mxu0 0.0
        %1012 = vmatpush1.msra.mxu0 0.0
        %1013 = vmatprep.subr.mxu0 0.0
        %1014 = vmatpush1.msra.mxu0 0.0
        %1015 = vmatprep.subr.mxu0 0.0
        %1016 = vmatpush1.msra.mxu0 0.0
        %1017 = vmatprep.subr.mxu0 0.0
        %1018 = vmatpush1.msra.mxu0 0.0
        %1019 = vmatprep.subr.mxu0 0.0
        %1020 = vmatpush1.msra.mxu0 0.0
        %1021 = vmatprep.subr.mxu0 0.0
        %1022 = vmatpush1.msra.mxu0 0.0
        %1023 = vmatprep.subr.mxu0 0.0
        %1024 = vmatpush1.msra.mxu0 0.0
        %1025 = vmatprep.subr.mxu0 0.0
        %1026 = vmatpush1.msra.mxu0 0.0
        %1027 = vmatprep.subr.mxu0 0.0
        %1028 = vmatpush1.msra.mxu0 0.0
        %1029 = vmatprep.subr.mxu0 0.0
        %1030 = vmatpush1.msra.mxu0 0.0
        %1031 = vmatprep.subr.mxu0 0.0
        %1032 = vmatpush1.msra.mxu0 0.0
        %1033 = vmatprep.subr.mxu0 0.0
        %1034 = vmatpush1.msra.mxu0 0.0
        %1035 = vmatprep.subr.mxu0 0.0
        %1036 = vmatpush1.msra.mxu0 0.0
        %1037 = vmatprep.subr.mxu0 0.0
        %1038 = vmatpush1.msra.mxu0 0.0
        %1039 = vmatprep.subr.mxu0 0.0
        %1040 = vmatpush1.msra.mxu0 0.0
        %1041 = vmatprep.subr.mxu0 0.0
        %1042 = vmatpush1.msra.mxu0 0.0
        %1043 = vmatprep.subr.mxu0 0.0
        %1044 = vmatpush1.msra.mxu0 0.0
        %1045 = vmatprep.subr.mxu0 0.0
        %1046 = vmatpush1.msra.mxu0 0.0
        %1047 = vmatprep.subr.mxu0 0.0
        %1048 = vmatpush1.msra.mxu0 0.0
        %1049 = vmatprep.subr.mxu0 0.0
        %1050 = vmatpush1.msra.mxu0 0.0
        %1051 = vmatprep.subr.mxu0 0.0
        %1052 = vmatpush1.msra.mxu0 0.0
        %1053 = vmatprep.subr.mxu0 0.0
        %1054 = vmatpush1.msra.mxu0 0.0
        %1055 = vmatprep.subr.mxu0 0.0
        %1056 = vmatpush1.msra.mxu0 0.0
        %1057 = vmatprep.subr.mxu0 0.0
        %1058 = vmatpush1.msra.mxu0 0.0
        %1059 = vmatprep.subr.mxu0 0.0
        %1060 = vmatpush1.msra.mxu0 0.0
        %1061 = vmatprep.subr.mxu0 0.0
        %1062 = vmatpush1.msra.mxu0 0.0
        %1063 = vmatprep.subr.mxu0 0.0
        %1064 = vmatpush1.msra.mxu0 0.0
        %1065 = vmatprep.subr.mxu0 0.0
        %1066 = vmatpush1.msra.mxu0 0.0
        %1067 = vmatprep.subr.mxu0 0.0
        %1068 = vmatpush1.msra.mxu0 0.0
        %1069 = vmatprep.subr.mxu0 0.0
        %1070 = vmatpush1.msra.mxu0 0.0
        %1071 = vmatprep.mubr.f32.mxu0 0.0
        %v1072 = vand.u32 %v539, 4294901760
        %v1073 = vsub.f32 %v539, %v1072
        %v1074 = vand.u32 %v1073, 4294901760
        %v1075 = vsub.f32 %v1073, %v1074
        %v1076 = vand.u32 %v1075, 4294901760
        %1077 = vmatmul.mubr.f32.gmra.mrb[0].mxu0 %v1076
        %v1078 = vpop.f32.mrb[0].mxu0
        %v1079 = vadd.f32 0.0, %v1078
        %v1080 = vpop.f32.mrb[0].mxu0
        %1081 = vdwg.mxu0
        %1082 = vmatprep.subr.mxu0 0.0
        %v1083 = vand.u32 %v1005, 4294901760
        %v1084 = vsub.f32 %v1005, %v1083
        %v1085 = vand.u32 %v1084, 4294901760
        %v1086 = vsub.f32 %v1084, %v1085
        %v1087 = vand.u32 %v1086, 4294901760
        %1088 = vmatpush1.msra.mxu0 %v1087
        %1089 = vmatprep.subr.mxu0 0.0
        %1090 = vmatpush1.msra.mxu0 0.0
        %1091 = vmatprep.subr.mxu0 0.0
        %1092 = vmatpush1.msra.mxu0 0.0
        %1093 = vmatprep.subr.mxu0 0.0
        %1094 = vmatpush1.msra.mxu0 0.0
        %1095 = vmatprep.subr.mxu0 0.0
        %1096 = vmatpush1.msra.mxu0 0.0
        %1097 = vmatprep.subr.mxu0 0.0
        %1098 = vmatpush1.msra.mxu0 0.0
        %1099 = vmatprep.subr.mxu0 0.0
        %1100 = vmatpush1.msra.mxu0 0.0
        %1101 = vmatprep.subr.mxu0 0.0
        %1102 = vmatpush1.msra.mxu0 0.0
        %1103 = vmatprep.subr.mxu0 0.0
        %1104 = vmatpush1.msra.mxu0 0.0
        %1105 = vmatprep.subr.mxu0 0.0
        %1106 = vmatpush1.msra.mxu0 0.0
        %1107 = vmatprep.subr.mxu0 0.0
        %1108 = vmatpush1.msra.mxu0 0.0
        %1109 = vmatprep.subr.mxu0 0.0
        %1110 = vmatpush1.msra.mxu0 0.0
        %1111 = vmatprep.subr.mxu0 0.0
        %1112 = vmatpush1.msra.mxu0 0.0
        %1113 = vmatprep.subr.mxu0 0.0
        %1114 = vmatpush1.msra.mxu0 0.0
        %1115 = vmatprep.subr.mxu0 0.0
        %1116 = vmatpush1.msra.mxu0 0.0
        %1117 = vmatprep.subr.mxu0 0.0
        %1118 = vmatpush1.msra.mxu0 0.0
        %1119 = vmatprep.subr.mxu0 0.0
        %1120 = vmatpush1.msra.mxu0 0.0
        %1121 = vmatprep.subr.mxu0 0.0
        %1122 = vmatpush1.msra.mxu0 0.0
        %1123 = vmatprep.subr.mxu0 0.0
        %1124 = vmatpush1.msra.mxu0 0.0
        %1125 = vmatprep.subr.mxu0 0.0
        %1126 = vmatpush1.msra.mxu0 0.0
        %1127 = vmatprep.subr.mxu0 0.0
        %1128 = vmatpush1.msra.mxu0 0.0
        %1129 = vmatprep.subr.mxu0 0.0
        %1130 = vmatpush1.msra.mxu0 0.0
        %1131 = vmatprep.subr.mxu0 0.0
        %1132 = vmatpush1.msra.mxu0 0.0
        %1133 = vmatprep.subr.mxu0 0.0
        %1134 = vmatpush1.msra.mxu0 0.0
        %1135 = vmatprep.subr.mxu0 0.0
        %1136 = vmatpush1.msra.mxu0 0.0
        %1137 = vmatprep.subr.mxu0 0.0
        %1138 = vmatpush1.msra.mxu0 0.0
        %1139 = vmatprep.subr.mxu0 0.0
        %1140 = vmatpush1.msra.mxu0 0.0
        %1141 = vmatprep.subr.mxu0 0.0
        %1142 = vmatpush1.msra.mxu0 0.0
        %1143 = vmatprep.subr.mxu0 0.0
        %1144 = vmatpush1.msra.mxu0 0.0
        %1145 = vmatprep.subr.mxu0 0.0
        %1146 = vmatpush1.msra.mxu0 0.0
        %1147 = vmatprep.subr.mxu0 0.0
        %1148 = vmatpush1.msra.mxu0 0.0
        %1149 = vmatprep.subr.mxu0 0.0
        %1150 = vmatpush1.msra.mxu0 0.0
        %1151 = vmatprep.mubr.f32.mxu0 0.0
        %v1152 = vand.u32 %v539, 4294901760
        %1153 = vmatmul.mubr.f32.gmra.mrb[0].mxu0 %v1152
        %v1154 = vpop.f32.mrb[0].mxu0
        %v1155 = vadd.f32 %v1079, %v1154
        %v1156 = vpop.f32.mrb[0].mxu0
        %1157 = vdwg.mxu0
        %1158 = vmatprep.subr.mxu0 0.0
        %v1159 = vand.u32 %v1005, 4294901760
        %v1160 = vsub.f32 %v1005, %v1159
        %1161 = vmatpush1.msra.mxu0 %v1160
        %1162 = vmatprep.subr.mxu0 0.0
        %1163 = vmatpush1.msra.mxu0 0.0
        %1164 = vmatprep.subr.mxu0 0.0
        %1165 = vmatpush1.msra.mxu0 0.0
        %1166 = vmatprep.subr.mxu0 0.0
        %1167 = vmatpush1.msra.mxu0 0.0
        %1168 = vmatprep.subr.mxu0 0.0
        %1169 = vmatpush1.msra.mxu0 0.0
        %1170 = vmatprep.subr.mxu0 0.0
        %1171 = vmatpush1.msra.mxu0 0.0
        %1172 = vmatprep.subr.mxu0 0.0
        %1173 = vmatpush1.msra.mxu0 0.0
        %1174 = vmatprep.subr.mxu0 0.0
        %1175 = vmatpush1.msra.mxu0 0.0
        %1176 = vmatprep.subr.mxu0 0.0
        %1177 = vmatpush1.msra.mxu0 0.0
        %1178 = vmatprep.subr.mxu0 0.0
        %1179 = vmatpush1.msra.mxu0 0.0
        %1180 = vmatprep.subr.mxu0 0.0
        %1181 = vmatpush1.msra.mxu0 0.0
        %1182 = vmatprep.subr.mxu0 0.0
        %1183 = vmatpush1.msra.mxu0 0.0
        %1184 = vmatprep.subr.mxu0 0.0
        %1185 = vmatpush1.msra.mxu0 0.0
        %1186 = vmatprep.subr.mxu0 0.0
        %1187 = vmatpush1.msra.mxu0 0.0
        %1188 = vmatprep.subr.mxu0 0.0
        %1189 = vmatpush1.msra.mxu0 0.0
        %1190 = vmatprep.subr.mxu0 0.0
        %1191 = vmatpush1.msra.mxu0 0.0
        %1192 = vmatprep.subr.mxu0 0.0
        %1193 = vmatpush1.msra.mxu0 0.0
        %1194 = vmatprep.subr.mxu0 0.0
        %1195 = vmatpush1.msra.mxu0 0.0
        %1196 = vmatprep.subr.mxu0 0.0
        %1197 = vmatpush1.msra.mxu0 0.0
        %1198 = vmatprep.subr.mxu0 0.0
        %1199 = vmatpush1.msra.mxu0 0.0
        %1200 = vmatprep.subr.mxu0 0.0
        %1201 = vmatpush1.msra.mxu0 0.0
        %1202 = vmatprep.subr.mxu0 0.0
        %1203 = vmatpush1.msra.mxu0 0.0
        %1204 = vmatprep.subr.mxu0 0.0
        %1205 = vmatpush1.msra.mxu0 0.0
        %1206 = vmatprep.subr.mxu0 0.0
        %1207 = vmatpush1.msra.mxu0 0.0
        %1208 = vmatprep.subr.mxu0 0.0
        %1209 = vmatpush1.msra.mxu0 0.0
        %1210 = vmatprep.subr.mxu0 0.0
        %1211 = vmatpush1.msra.mxu0 0.0
        %1212 = vmatprep.subr.mxu0 0.0
        %1213 = vmatpush1.msra.mxu0 0.0
        %1214 = vmatprep.subr.mxu0 0.0
        %1215 = vmatpush1.msra.mxu0 0.0
        %1216 = vmatprep.subr.mxu0 0.0
        %1217 = vmatpush1.msra.mxu0 0.0
        %1218 = vmatprep.subr.mxu0 0.0
        %1219 = vmatpush1.msra.mxu0 0.0
        %1220 = vmatprep.subr.mxu0 0.0
        %1221 = vmatpush1.msra.mxu0 0.0
        %1222 = vmatprep.subr.mxu0 0.0
        %1223 = vmatpush1.msra.mxu0 0.0
        %1224 = vmatprep.mubr.f32.mxu0 0.0
        %v1225 = vand.u32 %v539, 4294901760
        %v1226 = vsub.f32 %v539, %v1225
        %1227 = vmatmul.mubr.f32.gmra.mrb[0].mxu0 %v1226
        %v1228 = vpop.f32.mrb[0].mxu0
        %v1229 = vadd.f32 %v1155, %v1228
        %v1230 = vpop.f32.mrb[0].mxu0
        %1231 = vdwg.mxu0
        %1232 = vmatprep.subr.mxu0 0.0
        %v1233 = vand.u32 %v1005, 4294901760
        %1234 = vmatpush1.msra.mxu0 %v1233
        %1235 = vmatprep.subr.mxu0 0.0
        %1236 = vmatpush1.msra.mxu0 0.0
        %1237 = vmatprep.subr.mxu0 0.0
        %1238 = vmatpush1.msra.mxu0 0.0
        %1239 = vmatprep.subr.mxu0 0.0
        %1240 = vmatpush1.msra.mxu0 0.0
        %1241 = vmatprep.subr.mxu0 0.0
        %1242 = vmatpush1.msra.mxu0 0.0
        %1243 = vmatprep.subr.mxu0 0.0
        %1244 = vmatpush1.msra.mxu0 0.0
        %1245 = vmatprep.subr.mxu0 0.0
        %1246 = vmatpush1.msra.mxu0 0.0
        %1247 = vmatprep.subr.mxu0 0.0
        %1248 = vmatpush1.msra.mxu0 0.0
        %1249 = vmatprep.subr.mxu0 0.0
        %1250 = vmatpush1.msra.mxu0 0.0
        %1251 = vmatprep.subr.mxu0 0.0
        %1252 = vmatpush1.msra.mxu0 0.0
        %1253 = vmatprep.subr.mxu0 0.0
        %1254 = vmatpush1.msra.mxu0 0.0
        %1255 = vmatprep.subr.mxu0 0.0
        %1256 = vmatpush1.msra.mxu0 0.0
        %1257 = vmatprep.subr.mxu0 0.0
        %1258 = vmatpush1.msra.mxu0 0.0
        %1259 = vmatprep.subr.mxu0 0.0
        %1260 = vmatpush1.msra.mxu0 0.0
        %1261 = vmatprep.subr.mxu0 0.0
        %1262 = vmatpush1.msra.mxu0 0.0
        %1263 = vmatprep.subr.mxu0 0.0
        %1264 = vmatpush1.msra.mxu0 0.0
        %1265 = vmatprep.subr.mxu0 0.0
        %1266 = vmatpush1.msra.mxu0 0.0
        %1267 = vmatprep.subr.mxu0 0.0
        %1268 = vmatpush1.msra.mxu0 0.0
        %1269 = vmatprep.subr.mxu0 0.0
        %1270 = vmatpush1.msra.mxu0 0.0
        %1271 = vmatprep.subr.mxu0 0.0
        %1272 = vmatpush1.msra.mxu0 0.0
        %1273 = vmatprep.subr.mxu0 0.0
        %1274 = vmatpush1.msra.mxu0 0.0
        %1275 = vmatprep.subr.mxu0 0.0
        %1276 = vmatpush1.msra.mxu0 0.0
        %1277 = vmatprep.subr.mxu0 0.0
        %1278 = vmatpush1.msra.mxu0 0.0
        %1279 = vmatprep.subr.mxu0 0.0
        %1280 = vmatpush1.msra.mxu0 0.0
        %1281 = vmatprep.subr.mxu0 0.0
        %1282 = vmatpush1.msra.mxu0 0.0
        %1283 = vmatprep.subr.mxu0 0.0
        %1284 = vmatpush1.msra.mxu0 0.0
        %1285 = vmatprep.subr.mxu0 0.0
        %1286 = vmatpush1.msra.mxu0 0.0
        %1287 = vmatprep.subr.mxu0 0.0
        %1288 = vmatpush1.msra.mxu0 0.0
        %1289 = vmatprep.subr.mxu0 0.0
        %1290 = vmatpush1.msra.mxu0 0.0
        %1291 = vmatprep.subr.mxu0 0.0
        %1292 = vmatpush1.msra.mxu0 0.0
        %1293 = vmatprep.subr.mxu0 0.0
        %1294 = vmatpush1.msra.mxu0 0.0
        %1295 = vmatprep.subr.mxu0 0.0
        %1296 = vmatpush1.msra.mxu0 0.0
        %1297 = vmatprep.mubr.f32.mxu0 0.0
        %v1298 = vand.u32 %v539, 4294901760
        %v1299 = vsub.f32 %v539, %v1298
        %v1300 = vand.u32 %v1299, 4294901760
        %1301 = vmatmul.mubr.f32.gmra.mrb[0].mxu0 %v1300
        %v1302 = vpop.f32.mrb[0].mxu0
        %v1303 = vadd.f32 %v1229, %v1302
        %v1304 = vpop.f32.mrb[0].mxu0
        %1305 = vdwg.mxu0
        %1306 = vmatprep.subr.mxu0 0.0
        %v1307 = vand.u32 %v1005, 4294901760
        %v1308 = vsub.f32 %v1005, %v1307
        %v1309 = vand.u32 %v1308, 4294901760
        %1310 = vmatpush1.msra.mxu0 %v1309
        %1311 = vmatprep.subr.mxu0 0.0
        %1312 = vmatpush1.msra.mxu0 0.0
        %1313 = vmatprep.subr.mxu0 0.0
        %1314 = vmatpush1.msra.mxu0 0.0
        %1315 = vmatprep.subr.mxu0 0.0
        %1316 = vmatpush1.msra.mxu0 0.0
        %1317 = vmatprep.subr.mxu0 0.0
        %1318 = vmatpush1.msra.mxu0 0.0
        %1319 = vmatprep.subr.mxu0 0.0
        %1320 = vmatpush1.msra.mxu0 0.0
        %1321 = vmatprep.subr.mxu0 0.0
        %1322 = vmatpush1.msra.mxu0 0.0
        %1323 = vmatprep.subr.mxu0 0.0
        %1324 = vmatpush1.msra.mxu0 0.0
        %1325 = vmatprep.subr.mxu0 0.0
        %1326 = vmatpush1.msra.mxu0 0.0
        %1327 = vmatprep.subr.mxu0 0.0
        %1328 = vmatpush1.msra.mxu0 0.0
        %1329 = vmatprep.subr.mxu0 0.0
        %1330 = vmatpush1.msra.mxu0 0.0
        %1331 = vmatprep.subr.mxu0 0.0
        %1332 = vmatpush1.msra.mxu0 0.0
        %1333 = vmatprep.subr.mxu0 0.0
        %1334 = vmatpush1.msra.mxu0 0.0
        %1335 = vmatprep.subr.mxu0 0.0
        %1336 = vmatpush1.msra.mxu0 0.0
        %1337 = vmatprep.subr.mxu0 0.0
        %1338 = vmatpush1.msra.mxu0 0.0
        %1339 = vmatprep.subr.mxu0 0.0
        %1340 = vmatpush1.msra.mxu0 0.0
        %1341 = vmatprep.subr.mxu0 0.0
        %1342 = vmatpush1.msra.mxu0 0.0
        %1343 = vmatprep.subr.mxu0 0.0
        %1344 = vmatpush1.msra.mxu0 0.0
        %1345 = vmatprep.subr.mxu0 0.0
        %1346 = vmatpush1.msra.mxu0 0.0
        %1347 = vmatprep.subr.mxu0 0.0
        %1348 = vmatpush1.msra.mxu0 0.0
        %1349 = vmatprep.subr.mxu0 0.0
        %1350 = vmatpush1.msra.mxu0 0.0
        %1351 = vmatprep.subr.mxu0 0.0
        %1352 = vmatpush1.msra.mxu0 0.0
        %1353 = vmatprep.subr.mxu0 0.0
        %1354 = vmatpush1.msra.mxu0 0.0
        %1355 = vmatprep.subr.mxu0 0.0
        %1356 = vmatpush1.msra.mxu0 0.0
        %1357 = vmatprep.subr.mxu0 0.0
        %1358 = vmatpush1.msra.mxu0 0.0
        %1359 = vmatprep.subr.mxu0 0.0
        %1360 = vmatpush1.msra.mxu0 0.0
        %1361 = vmatprep.subr.mxu0 0.0
        %1362 = vmatpush1.msra.mxu0 0.0
        %1363 = vmatprep.subr.mxu0 0.0
        %1364 = vmatpush1.msra.mxu0 0.0
        %1365 = vmatprep.subr.mxu0 0.0
        %1366 = vmatpush1.msra.mxu0 0.0
        %1367 = vmatprep.subr.mxu0 0.0
        %1368 = vmatpush1.msra.mxu0 0.0
        %1369 = vmatprep.subr.mxu0 0.0
        %1370 = vmatpush1.msra.mxu0 0.0
        %1371 = vmatprep.subr.mxu0 0.0
        %1372 = vmatpush1.msra.mxu0 0.0
        %1373 = vmatprep.mubr.f32.mxu0 0.0
        %v1374 = vand.u32 %v539, 4294901760
        %1375 = vmatmul.mubr.f32.gmra.mrb[0].mxu0 %v1374
        %v1376 = vpop.f32.mrb[0].mxu0
        %v1377 = vadd.f32 %v1303, %v1376
        %v1378 = vpop.f32.mrb[0].mxu0
        %1379 = vdwg.mxu0
        %1380 = vmatprep.subr.mxu0 0.0
        %v1381 = vand.u32 %v1005, 4294901760
        %1382 = vmatpush1.msra.mxu0 %v1381
        %1383 = vmatprep.subr.mxu0 0.0
        %1384 = vmatpush1.msra.mxu0 0.0
        %1385 = vmatprep.subr.mxu0 0.0
        %1386 = vmatpush1.msra.mxu0 0.0
        %1387 = vmatprep.subr.mxu0 0.0
        %1388 = vmatpush1.msra.mxu0 0.0
        %1389 = vmatprep.subr.mxu0 0.0
        %1390 = vmatpush1.msra.mxu0 0.0
        %1391 = vmatprep.subr.mxu0 0.0
        %1392 = vmatpush1.msra.mxu0 0.0
        %1393 = vmatprep.subr.mxu0 0.0
        %1394 = vmatpush1.msra.mxu0 0.0
        %1395 = vmatprep.subr.mxu0 0.0
        %1396 = vmatpush1.msra.mxu0 0.0
        %1397 = vmatprep.subr.mxu0 0.0
        %1398 = vmatpush1.msra.mxu0 0.0
        %1399 = vmatprep.subr.mxu0 0.0
        %1400 = vmatpush1.msra.mxu0 0.0
        %1401 = vmatprep.subr.mxu0 0.0
        %1402 = vmatpush1.msra.mxu0 0.0
        %1403 = vmatprep.subr.mxu0 0.0
        %1404 = vmatpush1.msra.mxu0 0.0
        %1405 = vmatprep.subr.mxu0 0.0
        %1406 = vmatpush1.msra.mxu0 0.0
        %1407 = vmatprep.subr.mxu0 0.0
        %1408 = vmatpush1.msra.mxu0 0.0
        %1409 = vmatprep.subr.mxu0 0.0
        %1410 = vmatpush1.msra.mxu0 0.0
        %1411 = vmatprep.subr.mxu0 0.0
        %1412 = vmatpush1.msra.mxu0 0.0
        %1413 = vmatprep.subr.mxu0 0.0
        %1414 = vmatpush1.msra.mxu0 0.0
        %1415 = vmatprep.subr.mxu0 0.0
        %1416 = vmatpush1.msra.mxu0 0.0
        %1417 = vmatprep.subr.mxu0 0.0
        %1418 = vmatpush1.msra.mxu0 0.0
        %1419 = vmatprep.subr.mxu0 0.0
        %1420 = vmatpush1.msra.mxu0 0.0
        %1421 = vmatprep.subr.mxu0 0.0
        %1422 = vmatpush1.msra.mxu0 0.0
        %1423 = vmatprep.subr.mxu0 0.0
        %1424 = vmatpush1.msra.mxu0 0.0
        %1425 = vmatprep.subr.mxu0 0.0
        %1426 = vmatpush1.msra.mxu0 0.0
        %1427 = vmatprep.subr.mxu0 0.0
        %1428 = vmatpush1.msra.mxu0 0.0
        %1429 = vmatprep.subr.mxu0 0.0
        %1430 = vmatpush1.msra.mxu0 0.0
        %1431 = vmatprep.subr.mxu0 0.0
        %1432 = vmatpush1.msra.mxu0 0.0
        %1433 = vmatprep.subr.mxu0 0.0
        %1434 = vmatpush1.msra.mxu0 0.0
        %1435 = vmatprep.subr.mxu0 0.0
        %1436 = vmatpush1.msra.mxu0 0.0
        %1437 = vmatprep.subr.mxu0 0.0
        %1438 = vmatpush1.msra.mxu0 0.0
        %1439 = vmatprep.subr.mxu0 0.0
        %1440 = vmatpush1.msra.mxu0 0.0
        %1441 = vmatprep.subr.mxu0 0.0
        %1442 = vmatpush1.msra.mxu0 0.0
        %1443 = vmatprep.subr.mxu0 0.0
        %1444 = vmatpush1.msra.mxu0 0.0
        %1445 = vmatprep.mubr.f32.mxu0 0.0
        %v1446 = vand.u32 %v539, 4294901760
        %1447 = vmatmul.mubr.f32.gmra.mrb[0].mxu0 %v1446
        %v1448 = vpop.f32.mrb[0].mxu0
        %v1449 = vadd.f32 %v1377, %v1448
        %v1450 = vpop.f32.mrb[0].mxu0
        %1451 = vdwg.mxu0
        %v1452 = vmul.f32 %v1449, 0.00048828125
        %v1453 = vadd.f32 %v1452, 1e-05
        %v1454 = vrsqrt.pop %v1453
        %1456 = vset.pattern.permute.xlu0 0
        %1457 = vperm.xlu0 %1456, %v1454
        %v1458 = vpop.permute.xlu0 %1457
        %v1460 = vmul.f32 %v993, %v1458
        %v1461 = vmul.f32 %v994, %v1458
        %v1462 = vmul.f32 %v995, %v1458
        %v1463 = vmul.f32 %v996, %v1458
        %1465 = vset.pattern.permute.xlu0 0
        %1466 = vperm.xlu0 %1465, %v530
        %v1467 = vpop.permute.xlu0 %1466
        %v1469 = vmul.f32 %v1460, %v1467
        %v1470 = vmul.f32 %v1461, %v1467
        %v1471 = vmul.f32 %v1462, %v1467
        %v1472 = vmul.f32 %v1463, %v1467
        %1474 = vset.pattern.permute.xlu0 0
        %1475 = vperm.xlu0 %1474, %v531
        %v1476 = vpop.permute.xlu0 %1475
        %v1478 = vadd.f32 %v1469, %v1476
        %v1479 = vadd.f32 %v1470, %v1476
        %v1480 = vadd.f32 %v1471, %v1476
        %v1481 = vadd.f32 %v1472, %v1476
        %vm1482 = vcmp.gt.f32.partialorder %v1478, 0.0
        %vm1483 = vcmp.gt.f32.partialorder %v1479, 0.0
        %vm1484 = vcmp.gt.f32.partialorder %v1480, 0.0
        %vm1485 = vcmp.gt.f32.partialorder %v1481, 0.0
        %v1486 = vmul.f32 %v1478, 0.2
        %v1487 = vmul.f32 %v1479, 0.2
        %v1488 = vmul.f32 %v1480, 0.2
        %v1489 = vmul.f32 %v1481, 0.2
        %v1490 = vsel %vm1482, %v1478, %v1486
        %v1491 = vsel %vm1483, %v1479, %v1487
        %v1492 = vsel %vm1484, %v1480, %v1488
        %v1493 = vsel %vm1485, %v1481, %v1489
        %v1494 = vld [vmem:[%s4] sm:$0xf]
        %v1495 = vld [vmem:[%s4 + $0x4] sm:$0xf]
        %v1496 = vpack.c.bf16 %v1490, %v1490
        %v1497 = vpack.c.bf16 %v1491, %v1491
        %v1498 = vpack.c.bf16 %v1492, %v1492
        %v1499 = vpack.c.bf16 %v1493, %v1493
        %v1502 = vunpack.c.l.b16 %v1494
        %v1503 = vunpack.c.l.b16 %v1495
        %v1504 = vpack.c.b16 %v1503, %v1502
        %v1506 = vsel %vm537, %v1504, 0
        %vm1508 = vcmask 1043456
        %v1510 = vsel %vm1508, %v1496, 0
        %v1513 = vsel %vm1508, %v1497, 0
        %v1516 = vsel %vm1508, %v1498, 0
        %v1519 = vsel %vm1508, %v1499, 0
        %1521 = vmatprep.subr.bf16.mxu0 %v1513
        %1522 = vmatpush1.bf16.msra.mxu0 %v1510
        %1523 = vmatprep.subr.bf16.mxu0 0
        %1524 = vmatpush1.bf16.msra.mxu0 0
        %1525 = vmatprep.subr.bf16.mxu0 0
        %1526 = vmatpush1.bf16.msra.mxu0 0
        %1527 = vmatprep.subr.bf16.mxu0 0
        %1528 = vmatpush1.bf16.msra.mxu0 0
        %1529 = vmatprep.subr.bf16.mxu0 0
        %1530 = vmatpush1.bf16.msra.mxu0 0
        %1531 = vmatprep.subr.bf16.mxu0 0
        %1532 = vmatpush1.bf16.msra.mxu0 0
        %1533 = vmatprep.subr.bf16.mxu0 0
        %1534 = vmatpush1.bf16.msra.mxu0 0
        %1535 = vmatprep.subr.bf16.mxu0 0
        %1536 = vmatpush1.bf16.msra.mxu0 0
        %1537 = vmatprep.subr.bf16.mxu0 0
        %1538 = vmatpush1.bf16.msra.mxu0 0
        %1539 = vmatprep.subr.bf16.mxu0 0
        %1540 = vmatpush1.bf16.msra.mxu0 0
        %1541 = vmatprep.subr.bf16.mxu0 0
        %1542 = vmatpush1.bf16.msra.mxu0 0
        %1543 = vmatprep.subr.bf16.mxu0 0
        %1544 = vmatpush1.bf16.msra.mxu0 0
        %1545 = vmatprep.subr.bf16.mxu0 0
        %1546 = vmatpush1.bf16.msra.mxu0 0
        %1547 = vmatprep.subr.bf16.mxu0 0
        %1548 = vmatpush1.bf16.msra.mxu0 0
        %1549 = vmatprep.subr.bf16.mxu0 0
        %1550 = vmatpush1.bf16.msra.mxu0 0
        %1551 = vmatprep.subr.bf16.mxu0 0
        %1552 = vmatpush1.bf16.msra.mxu0 0
        %1553 = vmatprep.mubr.bf16.mxu0 0
        %1554 = vmatmul.mubr.bf16.gmra.mrb[0].mxu0 %v1506
        %v1555 = vpop.f32.mrb[0].mxu0
        %v1556 = vadd.f32 0.0, %v1555
        %v1557 = vpop.f32.mrb[0].mxu0
        %v1558 = vadd.f32 0.0, %v1557
        %v1559 = vpop.f32.mrb[0].mxu0
        %v1560 = vadd.f32 0.0, %v1559
        %v1561 = vpop.f32.mrb[0].mxu0
        %v1562 = vadd.f32 0.0, %v1561
        %1563 = vdwg.mxu0
        %1564 = vmatprep.subr.bf16.mxu0 %v1519
        %1565 = vmatpush1.bf16.msra.mxu0 %v1516
        %1566 = vmatprep.subr.bf16.mxu0 0
        %1567 = vmatpush1.bf16.msra.mxu0 0
        %1568 = vmatprep.subr.bf16.mxu0 0
        %1569 = vmatpush1.bf16.msra.mxu0 0
        %1570 = vmatprep.subr.bf16.mxu0 0
        %1571 = vmatpush1.bf16.msra.mxu0 0
        %1572 = vmatprep.subr.bf16.mxu0 0
        %1573 = vmatpush1.bf16.msra.mxu0 0
        %1574 = vmatprep.subr.bf16.mxu0 0
        %1575 = vmatpush1.bf16.msra.mxu0 0
        %1576 = vmatprep.subr.bf16.mxu0 0
        %1577 = vmatpush1.bf16.msra.mxu0 0
        %1578 = vmatprep.subr.bf16.mxu0 0
        %1579 = vmatpush1.bf16.msra.mxu0 0
        %1580 = vmatprep.subr.bf16.mxu0 0
        %1581 = vmatpush1.bf16.msra.mxu0 0
        %1582 = vmatprep.subr.bf16.mxu0 0
        %1583 = vmatpush1.bf16.msra.mxu0 0
        %1584 = vmatprep.subr.bf16.mxu0 0
        %1585 = vmatpush1.bf16.msra.mxu0 0
        %1586 = vmatprep.subr.bf16.mxu0 0
        %1587 = vmatpush1.bf16.msra.mxu0 0
        %1588 = vmatprep.subr.bf16.mxu0 0
        %1589 = vmatpush1.bf16.msra.mxu0 0
        %1590 = vmatprep.subr.bf16.mxu0 0
        %1591 = vmatpush1.bf16.msra.mxu0 0
        %1592 = vmatprep.subr.bf16.mxu0 0
        %1593 = vmatpush1.bf16.msra.mxu0 0
        %1594 = vmatprep.subr.bf16.mxu0 0
        %1595 = vmatpush1.bf16.msra.mxu0 0
        %1596 = vmatprep.mubr.bf16.mxu0 0
        %1597 = vmatmul.mubr.bf16.gmra.mrb[0].mxu0 %v1506
        %v1598 = vpop.f32.mrb[0].mxu0
        %v1599 = vadd.f32 0.0, %v1598
        %v1600 = vpop.f32.mrb[0].mxu0
        %v1601 = vadd.f32 0.0, %v1600
        %v1602 = vpop.f32.mrb[0].mxu0
        %v1603 = vadd.f32 0.0, %v1602
        %v1604 = vpop.f32.mrb[0].mxu0
        %v1605 = vadd.f32 0.0, %v1604
        %1606 = vdwg.mxu0
        %v1607 = vld [vmem:[#allocation5] sm:$0xff]
        %v1608 = vld [vmem:[#allocation5 + $0x8] sm:$0xff]
        %v1609 = vld [vmem:[%s6] sm:$0xff]
        %v1610 = vld [vmem:[%s6 + $0x8] sm:$0xff]
        %v1611 = vld [vmem:[%s7] sm:$0xff]
        %v1612 = vld [vmem:[%s7 + $0x8] sm:$0xff]
        %v1613 = vadd.f32 %v1556, %v1558
        %v1614 = vadd.f32 %v1613, %v1599
        %v1615 = vadd.f32 %v1614, %v1601
        %1616 = vadd.xlane.f32.xlu0 %v1615
        %v1617 = vpop.xlane.xlu0 %1616
        %v1618 = vadd.f32 %v1560, %v1562
        %v1619 = vadd.f32 %v1618, %v1603
        %v1620 = vadd.f32 %v1619, %v1605
        %1621 = vadd.xlane.f32.xlu0 %v1620
        %v1622 = vpop.xlane.xlu0 %1621
        %vm1623 = vcmask 130048
        %v1625 = vsel %vm1623, %v1607, 0
        %v1628 = vsel %vm1623, %v1608, 0
        %1630 = vmatprep.subr.mxu0 0.0
        %v1631 = vand.u32 %v1617, 4294901760
        %1632 = vmatpush1.msra.mxu0 %v1631
        %1633 = vmatprep.subr.mxu0 0.0
        %v1634 = vand.u32 %v1622, 4294901760
        %1635 = vmatpush1.msra.mxu0 %v1634
        %1636 = vmatprep.subr.mxu0 0.0
        %1637 = vmatpush1.msra.mxu0 0.0
        %1638 = vmatprep.subr.mxu0 0.0
        %1639 = vmatpush1.msra.mxu0 0.0
        %1640 = vmatprep.subr.mxu0 0.0
        %1641 = vmatpush1.msra.mxu0 0.0
        %1642 = vmatprep.subr.mxu0 0.0
        %1643 = vmatpush1.msra.mxu0 0.0
        %1644 = vmatprep.subr.mxu0 0.0
        %1645 = vmatpush1.msra.mxu0 0.0
        %1646 = vmatprep.subr.mxu0 0.0
        %1647 = vmatpush1.msra.mxu0 0.0
        %1648 = vmatprep.subr.mxu0 0.0
        %1649 = vmatpush1.msra.mxu0 0.0
        %1650 = vmatprep.subr.mxu0 0.0
        %1651 = vmatpush1.msra.mxu0 0.0
        %1652 = vmatprep.subr.mxu0 0.0
        %1653 = vmatpush1.msra.mxu0 0.0
        %1654 = vmatprep.subr.mxu0 0.0
        %1655 = vmatpush1.msra.mxu0 0.0
        %1656 = vmatprep.subr.mxu0 0.0
        %1657 = vmatpush1.msra.mxu0 0.0
        %1658 = vmatprep.subr.mxu0 0.0
        %1659 = vmatpush1.msra.mxu0 0.0
        %1660 = vmatprep.subr.mxu0 0.0
        %1661 = vmatpush1.msra.mxu0 0.0
        %1662 = vmatprep.subr.mxu0 0.0
        %1663 = vmatpush1.msra.mxu0 0.0
        %1664 = vmatprep.subr.mxu0 0.0
        %1665 = vmatpush1.msra.mxu0 0.0
        %1666 = vmatprep.subr.mxu0 0.0
        %1667 = vmatpush1.msra.mxu0 0.0
        %1668 = vmatprep.subr.mxu0 0.0
        %1669 = vmatpush1.msra.mxu0 0.0
        %1670 = vmatprep.subr.mxu0 0.0
        %1671 = vmatpush1.msra.mxu0 0.0
        %1672 = vmatprep.subr.mxu0 0.0
        %1673 = vmatpush1.msra.mxu0 0.0
        %1674 = vmatprep.subr.mxu0 0.0
        %1675 = vmatpush1.msra.mxu0 0.0
        %1676 = vmatprep.subr.mxu0 0.0
        %1677 = vmatpush1.msra.mxu0 0.0
        %1678 = vmatprep.subr.mxu0 0.0
        %1679 = vmatpush1.msra.mxu0 0.0
        %1680 = vmatprep.subr.mxu0 0.0
        %1681 = vmatpush1.msra.mxu0 0.0
        %1682 = vmatprep.subr.mxu0 0.0
        %1683 = vmatpush1.msra.mxu0 0.0
        %1684 = vmatprep.subr.mxu0 0.0
        %1685 = vmatpush1.msra.mxu0 0.0
        %1686 = vmatprep.subr.mxu0 0.0
        %1687 = vmatpush1.msra.mxu0 0.0
        %1688 = vmatprep.subr.mxu0 0.0
        %1689 = vmatpush1.msra.mxu0 0.0
        %1690 = vmatprep.subr.mxu0 0.0
        %1691 = vmatpush1.msra.mxu0 0.0
        %1692 = vmatprep.subr.mxu0 0.0
        %1693 = vmatpush1.msra.mxu0 0.0
        %1694 = vmatprep.subr.mxu0 0.0
        %1695 = vmatpush1.msra.mxu0 0.0
        %1696 = vmatprep.mubr.f32.mxu0 0.0
        %v1697 = vand.u32 %v1625, 4294901760
        %v1698 = vsub.f32 %v1625, %v1697
        %v1699 = vand.u32 %v1698, 4294901760
        %v1700 = vsub.f32 %v1698, %v1699
        %v1701 = vand.u32 %v1700, 4294901760
        %1702 = vmatmul.mubr.f32.gmra.mrb[0].mxu0 %v1701
        %v1703 = vpop.f32.mrb[0].mxu0
        %v1704 = vadd.f32 0.0, %v1703
        %v1705 = vpop.f32.mrb[0].mxu0
        %1706 = vmatprep.mubr.f32.mxu0 0.0
        %v1707 = vand.u32 %v1628, 4294901760
        %v1708 = vsub.f32 %v1628, %v1707
        %v1709 = vand.u32 %v1708, 4294901760
        %v1710 = vsub.f32 %v1708, %v1709
        %v1711 = vand.u32 %v1710, 4294901760
        %1712 = vmatmul.mubr.f32.gmra.mrb[0].mxu0 %v1711
        %v1713 = vpop.f32.mrb[0].mxu0
        %v1714 = vadd.f32 0.0, %v1713
        %v1715 = vpop.f32.mrb[0].mxu0
        %1716 = vdwg.mxu0
        %1717 = vmatprep.subr.mxu0 0.0
        %v1718 = vand.u32 %v1617, 4294901760
        %v1719 = vsub.f32 %v1617, %v1718
        %v1720 = vand.u32 %v1719, 4294901760
        %v1721 = vsub.f32 %v1719, %v1720
        %v1722 = vand.u32 %v1721, 4294901760
        %1723 = vmatpush1.msra.mxu0 %v1722
        %1724 = vmatprep.subr.mxu0 0.0
        %v1725 = vand.u32 %v1622, 4294901760
        %v1726 = vsub.f32 %v1622, %v1725
        %v1727 = vand.u32 %v1726, 4294901760
        %v1728 = vsub.f32 %v1726, %v1727
        %v1729 = vand.u32 %v1728, 4294901760
        %1730 = vmatpush1.msra.mxu0 %v1729
        %1731 = vmatprep.subr.mxu0 0.0
        %1732 = vmatpush1.msra.mxu0 0.0
        %1733 = vmatprep.subr.mxu0 0.0
        %1734 = vmatpush1.msra.mxu0 0.0
        %1735 = vmatprep.subr.mxu0 0.0
        %1736 = vmatpush1.msra.mxu0 0.0
        %1737 = vmatprep.subr.mxu0 0.0
        %1738 = vmatpush1.msra.mxu0 0.0
        %1739 = vmatprep.subr.mxu0 0.0
        %1740 = vmatpush1.msra.mxu0 0.0
        %1741 = vmatprep.subr.mxu0 0.0
        %1742 = vmatpush1.msra.mxu0 0.0
        %1743 = vmatprep.subr.mxu0 0.0
        %1744 = vmatpush1.msra.mxu0 0.0
        %1745 = vmatprep.subr.mxu0 0.0
        %1746 = vmatpush1.msra.mxu0 0.0
        %1747 = vmatprep.subr.mxu0 0.0
        %1748 = vmatpush1.msra.mxu0 0.0
        %1749 = vmatprep.subr.mxu0 0.0
        %1750 = vmatpush1.msra.mxu0 0.0
        %1751 = vmatprep.subr.mxu0 0.0
        %1752 = vmatpush1.msra.mxu0 0.0
        %1753 = vmatprep.subr.mxu0 0.0
        %1754 = vmatpush1.msra.mxu0 0.0
        %1755 = vmatprep.subr.mxu0 0.0
        %1756 = vmatpush1.msra.mxu0 0.0
        %1757 = vmatprep.subr.mxu0 0.0
        %1758 = vmatpush1.msra.mxu0 0.0
        %1759 = vmatprep.subr.mxu0 0.0
        %1760 = vmatpush1.msra.mxu0 0.0
        %1761 = vmatprep.subr.mxu0 0.0
        %1762 = vmatpush1.msra.mxu0 0.0
        %1763 = vmatprep.subr.mxu0 0.0
        %1764 = vmatpush1.msra.mxu0 0.0
        %1765 = vmatprep.subr.mxu0 0.0
        %1766 = vmatpush1.msra.mxu0 0.0
        %1767 = vmatprep.subr.mxu0 0.0
        %1768 = vmatpush1.msra.mxu0 0.0
        %1769 = vmatprep.subr.mxu0 0.0
        %1770 = vmatpush1.msra.mxu0 0.0
        %1771 = vmatprep.subr.mxu0 0.0
        %1772 = vmatpush1.msra.mxu0 0.0
        %1773 = vmatprep.subr.mxu0 0.0
        %1774 = vmatpush1.msra.mxu0 0.0
        %1775 = vmatprep.subr.mxu0 0.0
        %1776 = vmatpush1.msra.mxu0 0.0
        %1777 = vmatprep.subr.mxu0 0.0
        %1778 = vmatpush1.msra.mxu0 0.0
        %1779 = vmatprep.subr.mxu0 0.0
        %1780 = vmatpush1.msra.mxu0 0.0
        %1781 = vmatprep.subr.mxu0 0.0
        %1782 = vmatpush1.msra.mxu0 0.0
        %1783 = vmatprep.subr.mxu0 0.0
        %1784 = vmatpush1.msra.mxu0 0.0
        %1785 = vmatprep.subr.mxu0 0.0
        %1786 = vmatpush1.msra.mxu0 0.0
        %1787 = vmatprep.subr.mxu0 0.0
        %1788 = vmatpush1.msra.mxu0 0.0
        %1789 = vmatprep.subr.mxu0 0.0
        %1790 = vmatpush1.msra.mxu0 0.0
        %1791 = vmatprep.mubr.f32.mxu0 0.0
        %v1792 = vand.u32 %v1625, 4294901760
        %1793 = vmatmul.mubr.f32.gmra.mrb[0].mxu0 %v1792
        %v1794 = vpop.f32.mrb[0].mxu0
        %v1795 = vadd.f32 %v1704, %v1794
        %v1796 = vpop.f32.mrb[0].mxu0
        %1797 = vmatprep.mubr.f32.mxu0 0.0
        %v1798 = vand.u32 %v1628, 4294901760
        %1799 = vmatmul.mubr.f32.gmra.mrb[0].mxu0 %v1798
        %v1800 = vpop.f32.mrb[0].mxu0
        %v1801 = vadd.f32 %v1714, %v1800
        %v1802 = vpop.f32.mrb[0].mxu0
        %1803 = vdwg.mxu0
        %1804 = vmatprep.subr.mxu0 0.0
        %v1805 = vand.u32 %v1617, 4294901760
        %v1806 = vsub.f32 %v1617, %v1805
        %1807 = vmatpush1.msra.mxu0 %v1806
        %1808 = vmatprep.subr.mxu0 0.0
        %v1809 = vand.u32 %v1622, 4294901760
        %v1810 = vsub.f32 %v1622, %v1809
        %1811 = vmatpush1.msra.mxu0 %v1810
        %1812 = vmatprep.subr.mxu0 0.0
        %1813 = vmatpush1.msra.mxu0 0.0
        %1814 = vmatprep.subr.mxu0 0.0
        %1815 = vmatpush1.msra.mxu0 0.0
        %1816 = vmatprep.subr.mxu0 0.0
        %1817 = vmatpush1.msra.mxu0 0.0
        %1818 = vmatprep.subr.mxu0 0.0
        %1819 = vmatpush1.msra.mxu0 0.0
        %1820 = vmatprep.subr.mxu0 0.0
        %1821 = vmatpush1.msra.mxu0 0.0
        %1822 = vmatprep.subr.mxu0 0.0
        %1823 = vmatpush1.msra.mxu0 0.0
        %1824 = vmatprep.subr.mxu0 0.0
        %1825 = vmatpush1.msra.mxu0 0.0
        %1826 = vmatprep.subr.mxu0 0.0
        %1827 = vmatpush1.msra.mxu0 0.0
        %1828 = vmatprep.subr.mxu0 0.0
        %1829 = vmatpush1.msra.mxu0 0.0
        %1830 = vmatprep.subr.mxu0 0.0
        %1831 = vmatpush1.msra.mxu0 0.0
        %1832 = vmatprep.subr.mxu0 0.0
        %1833 = vmatpush1.msra.mxu0 0.0
        %1834 = vmatprep.subr.mxu0 0.0
        %1835 = vmatpush1.msra.mxu0 0.0
        %1836 = vmatprep.subr.mxu0 0.0
        %1837 = vmatpush1.msra.mxu0 0.0
        %1838 = vmatprep.subr.mxu0 0.0
        %1839 = vmatpush1.msra.mxu0 0.0
        %1840 = vmatprep.subr.mxu0 0.0
        %1841 = vmatpush1.msra.mxu0 0.0
        %1842 = vmatprep.subr.mxu0 0.0
        %1843 = vmatpush1.msra.mxu0 0.0
        %1844 = vmatprep.subr.mxu0 0.0
        %1845 = vmatpush1.msra.mxu0 0.0
        %1846 = vmatprep.subr.mxu0 0.0
        %1847 = vmatpush1.msra.mxu0 0.0
        %1848 = vmatprep.subr.mxu0 0.0
        %1849 = vmatpush1.msra.mxu0 0.0
        %1850 = vmatprep.subr.mxu0 0.0
        %1851 = vmatpush1.msra.mxu0 0.0
        %1852 = vmatprep.subr.mxu0 0.0
        %1853 = vmatpush1.msra.mxu0 0.0
        %1854 = vmatprep.subr.mxu0 0.0
        %1855 = vmatpush1.msra.mxu0 0.0
        %1856 = vmatprep.subr.mxu0 0.0
        %1857 = vmatpush1.msra.mxu0 0.0
        %1858 = vmatprep.subr.mxu0 0.0
        %1859 = vmatpush1.msra.mxu0 0.0
        %1860 = vmatprep.subr.mxu0 0.0
        %1861 = vmatpush1.msra.mxu0 0.0
        %1862 = vmatprep.subr.mxu0 0.0
        %1863 = vmatpush1.msra.mxu0 0.0
        %1864 = vmatprep.subr.mxu0 0.0
        %1865 = vmatpush1.msra.mxu0 0.0
        %1866 = vmatprep.subr.mxu0 0.0
        %1867 = vmatpush1.msra.mxu0 0.0
        %1868 = vmatprep.subr.mxu0 0.0
        %1869 = vmatpush1.msra.mxu0 0.0
        %1870 = vmatprep.subr.mxu0 0.0
        %1871 = vmatpush1.msra.mxu0 0.0
        %1872 = vmatprep.mubr.f32.mxu0 0.0
        %v1873 = vand.u32 %v1625, 4294901760
        %v1874 = vsub.f32 %v1625, %v1873
        %1875 = vmatmul.mubr.f32.gmra.mrb[0].mxu0 %v1874
        %v1876 = vpop.f32.mrb[0].mxu0
        %v1877 = vadd.f32 %v1795, %v1876
        %v1878 = vpop.f32.mrb[0].mxu0
        %1879 = vmatprep.mubr.f32.mxu0 0.0
        %v1880 = vand.u32 %v1628, 4294901760
        %v1881 = vsub.f32 %v1628, %v1880
        %1882 = vmatmul.mubr.f32.gmra.mrb[0].mxu0 %v1881
        %v1883 = vpop.f32.mrb[0].mxu0
        %v1884 = vadd.f32 %v1801, %v1883
        %v1885 = vpop.f32.mrb[0].mxu0
        %1886 = vdwg.mxu0
        %1887 = vmatprep.subr.mxu0 0.0
        %v1888 = vand.u32 %v1617, 4294901760
        %1889 = vmatpush1.msra.mxu0 %v1888
        %1890 = vmatprep.subr.mxu0 0.0
        %v1891 = vand.u32 %v1622, 4294901760
        %1892 = vmatpush1.msra.mxu0 %v1891
        %1893 = vmatprep.subr.mxu0 0.0
        %1894 = vmatpush1.msra.mxu0 0.0
        %1895 = vmatprep.subr.mxu0 0.0
        %1896 = vmatpush1.msra.mxu0 0.0
        %1897 = vmatprep.subr.mxu0 0.0
        %1898 = vmatpush1.msra.mxu0 0.0
        %1899 = vmatprep.subr.mxu0 0.0
        %1900 = vmatpush1.msra.mxu0 0.0
        %1901 = vmatprep.subr.mxu0 0.0
        %1902 = vmatpush1.msra.mxu0 0.0
        %1903 = vmatprep.subr.mxu0 0.0
        %1904 = vmatpush1.msra.mxu0 0.0
        %1905 = vmatprep.subr.mxu0 0.0
        %1906 = vmatpush1.msra.mxu0 0.0
        %1907 = vmatprep.subr.mxu0 0.0
        %1908 = vmatpush1.msra.mxu0 0.0
        %1909 = vmatprep.subr.mxu0 0.0
        %1910 = vmatpush1.msra.mxu0 0.0
        %1911 = vmatprep.subr.mxu0 0.0
        %1912 = vmatpush1.msra.mxu0 0.0
        %1913 = vmatprep.subr.mxu0 0.0
        %1914 = vmatpush1.msra.mxu0 0.0
        %1915 = vmatprep.subr.mxu0 0.0
        %1916 = vmatpush1.msra.mxu0 0.0
        %1917 = vmatprep.subr.mxu0 0.0
        %1918 = vmatpush1.msra.mxu0 0.0
        %1919 = vmatprep.subr.mxu0 0.0
        %1920 = vmatpush1.msra.mxu0 0.0
        %1921 = vmatprep.subr.mxu0 0.0
        %1922 = vmatpush1.msra.mxu0 0.0
        %1923 = vmatprep.subr.mxu0 0.0
        %1924 = vmatpush1.msra.mxu0 0.0
        %1925 = vmatprep.subr.mxu0 0.0
        %1926 = vmatpush1.msra.mxu0 0.0
        %1927 = vmatprep.subr.mxu0 0.0
        %1928 = vmatpush1.msra.mxu0 0.0
        %1929 = vmatprep.subr.mxu0 0.0
        %1930 = vmatpush1.msra.mxu0 0.0
        %1931 = vmatprep.subr.mxu0 0.0
        %1932 = vmatpush1.msra.mxu0 0.0
        %1933 = vmatprep.subr.mxu0 0.0
        %1934 = vmatpush1.msra.mxu0 0.0
        %1935 = vmatprep.subr.mxu0 0.0
        %1936 = vmatpush1.msra.mxu0 0.0
        %1937 = vmatprep.subr.mxu0 0.0
        %1938 = vmatpush1.msra.mxu0 0.0
        %1939 = vmatprep.subr.mxu0 0.0
        %1940 = vmatpush1.msra.mxu0 0.0
        %1941 = vmatprep.subr.mxu0 0.0
        %1942 = vmatpush1.msra.mxu0 0.0
        %1943 = vmatprep.subr.mxu0 0.0
        %1944 = vmatpush1.msra.mxu0 0.0
        %1945 = vmatprep.subr.mxu0 0.0
        %1946 = vmatpush1.msra.mxu0 0.0
        %1947 = vmatprep.subr.mxu0 0.0
        %1948 = vmatpush1.msra.mxu0 0.0
        %1949 = vmatprep.subr.mxu0 0.0
        %1950 = vmatpush1.msra.mxu0 0.0
        %1951 = vmatprep.subr.mxu0 0.0
        %1952 = vmatpush1.msra.mxu0 0.0
        %1953 = vmatprep.mubr.f32.mxu0 0.0
        %v1954 = vand.u32 %v1625, 4294901760
        %v1955 = vsub.f32 %v1625, %v1954
        %v1956 = vand.u32 %v1955, 4294901760
        %1957 = vmatmul.mubr.f32.gmra.mrb[0].mxu0 %v1956
        %v1958 = vpop.f32.mrb[0].mxu0
        %v1959 = vadd.f32 %v1877, %v1958
        %v1960 = vpop.f32.mrb[0].mxu0
        %1961 = vmatprep.mubr.f32.mxu0 0.0
        %v1962 = vand.u32 %v1628, 4294901760
        %v1963 = vsub.f32 %v1628, %v1962
        %v1964 = vand.u32 %v1963, 4294901760
        %1965 = vmatmul.mubr.f32.gmra.mrb[0].mxu0 %v1964
        %v1966 = vpop.f32.mrb[0].mxu0
        %v1967 = vadd.f32 %v1884, %v1966
        %v1968 = vpop.f32.mrb[0].mxu0
        %1969 = vdwg.mxu0
        %1970 = vmatprep.subr.mxu0 0.0
        %v1971 = vand.u32 %v1617, 4294901760
        %v1972 = vsub.f32 %v1617, %v1971
        %v1973 = vand.u32 %v1972, 4294901760
        %1974 = vmatpush1.msra.mxu0 %v1973
        %1975 = vmatprep.subr.mxu0 0.0
        %v1976 = vand.u32 %v1622, 4294901760
        %v1977 = vsub.f32 %v1622, %v1976
        %v1978 = vand.u32 %v1977, 4294901760
        %1979 = vmatpush1.msra.mxu0 %v1978
        %1980 = vmatprep.subr.mxu0 0.0
        %1981 = vmatpush1.msra.mxu0 0.0
        %1982 = vmatprep.subr.mxu0 0.0
        %1983 = vmatpush1.msra.mxu0 0.0
        %1984 = vmatprep.subr.mxu0 0.0
        %1985 = vmatpush1.msra.mxu0 0.0
        %1986 = vmatprep.subr.mxu0 0.0
        %1987 = vmatpush1.msra.mxu0 0.0
        %1988 = vmatprep.subr.mxu0 0.0
        %1989 = vmatpush1.msra.mxu0 0.0
        %1990 = vmatprep.subr.mxu0 0.0
        %1991 = vmatpush1.msra.mxu0 0.0
        %1992 = vmatprep.subr.mxu0 0.0
        %1993 = vmatpush1.msra.mxu0 0.0
        %1994 = vmatprep.subr.mxu0 0.0
        %1995 = vmatpush1.msra.mxu0 0.0
        %1996 = vmatprep.subr.mxu0 0.0
        %1997 = vmatpush1.msra.mxu0 0.0
        %1998 = vmatprep.subr.mxu0 0.0
        %1999 = vmatpush1.msra.mxu0 0.0
        %2000 = vmatprep.subr.mxu0 0.0
        %2001 = vmatpush1.msra.mxu0 0.0
        %2002 = vmatprep.subr.mxu0 0.0
        %2003 = vmatpush1.msra.mxu0 0.0
        %2004 = vmatprep.subr.mxu0 0.0
        %2005 = vmatpush1.msra.mxu0 0.0
        %2006 = vmatprep.subr.mxu0 0.0
        %2007 = vmatpush1.msra.mxu0 0.0
        %2008 = vmatprep.subr.mxu0 0.0
        %2009 = vmatpush1.msra.mxu0 0.0
        %2010 = vmatprep.subr.mxu0 0.0
        %2011 = vmatpush1.msra.mxu0 0.0
        %2012 = vmatprep.subr.mxu0 0.0
        %2013 = vmatpush1.msra.mxu0 0.0
        %2014 = vmatprep.subr.mxu0 0.0
        %2015 = vmatpush1.msra.mxu0 0.0
        %2016 = vmatprep.subr.mxu0 0.0
        %2017 = vmatpush1.msra.mxu0 0.0
        %2018 = vmatprep.subr.mxu0 0.0
        %2019 = vmatpush1.msra.mxu0 0.0
        %2020 = vmatprep.subr.mxu0 0.0
        %2021 = vmatpush1.msra.mxu0 0.0
        %2022 = vmatprep.subr.mxu0 0.0
        %2023 = vmatpush1.msra.mxu0 0.0
        %2024 = vmatprep.subr.mxu0 0.0
        %2025 = vmatpush1.msra.mxu0 0.0
        %2026 = vmatprep.subr.mxu0 0.0
        %2027 = vmatpush1.msra.mxu0 0.0
        %2028 = vmatprep.subr.mxu0 0.0
        %2029 = vmatpush1.msra.mxu0 0.0
        %2030 = vmatprep.subr.mxu0 0.0
        %2031 = vmatpush1.msra.mxu0 0.0
        %2032 = vmatprep.subr.mxu0 0.0
        %2033 = vmatpush1.msra.mxu0 0.0
        %2034 = vmatprep.subr.mxu0 0.0
        %2035 = vmatpush1.msra.mxu0 0.0
        %2036 = vmatprep.subr.mxu0 0.0
        %2037 = vmatpush1.msra.mxu0 0.0
        %2038 = vmatprep.subr.mxu0 0.0
        %2039 = vmatpush1.msra.mxu0 0.0
        %2040 = vmatprep.mubr.f32.mxu0 0.0
        %v2041 = vand.u32 %v1625, 4294901760
        %2042 = vmatmul.mubr.f32.gmra.mrb[0].mxu0 %v2041
        %v2043 = vpop.f32.mrb[0].mxu0
        %v2044 = vadd.f32 %v1959, %v2043
        %v2045 = vpop.f32.mrb[0].mxu0
        %2046 = vmatprep.mubr.f32.mxu0 0.0
        %v2047 = vand.u32 %v1628, 4294901760
        %2048 = vmatmul.mubr.f32.gmra.mrb[0].mxu0 %v2047
        %v2049 = vpop.f32.mrb[0].mxu0
        %v2050 = vadd.f32 %v1967, %v2049
        %v2051 = vpop.f32.mrb[0].mxu0
        %2052 = vdwg.mxu0
        %2053 = vmatprep.subr.mxu0 0.0
        %v2054 = vand.u32 %v1617, 4294901760
        %2055 = vmatpush1.msra.mxu0 %v2054
        %2056 = vmatprep.subr.mxu0 0.0
        %v2057 = vand.u32 %v1622, 4294901760
        %2058 = vmatpush1.msra.mxu0 %v2057
        %2059 = vmatprep.subr.mxu0 0.0
        %2060 = vmatpush1.msra.mxu0 0.0
        %2061 = vmatprep.subr.mxu0 0.0
        %2062 = vmatpush1.msra.mxu0 0.0
        %2063 = vmatprep.subr.mxu0 0.0
        %2064 = vmatpush1.msra.mxu0 0.0
        %2065 = vmatprep.subr.mxu0 0.0
        %2066 = vmatpush1.msra.mxu0 0.0
        %2067 = vmatprep.subr.mxu0 0.0
        %2068 = vmatpush1.msra.mxu0 0.0
        %2069 = vmatprep.subr.mxu0 0.0
        %2070 = vmatpush1.msra.mxu0 0.0
        %2071 = vmatprep.subr.mxu0 0.0
        %2072 = vmatpush1.msra.mxu0 0.0
        %2073 = vmatprep.subr.mxu0 0.0
        %2074 = vmatpush1.msra.mxu0 0.0
        %2075 = vmatprep.subr.mxu0 0.0
        %2076 = vmatpush1.msra.mxu0 0.0
        %2077 = vmatprep.subr.mxu0 0.0
        %2078 = vmatpush1.msra.mxu0 0.0
        %2079 = vmatprep.subr.mxu0 0.0
        %2080 = vmatpush1.msra.mxu0 0.0
        %2081 = vmatprep.subr.mxu0 0.0
        %2082 = vmatpush1.msra.mxu0 0.0
        %2083 = vmatprep.subr.mxu0 0.0
        %2084 = vmatpush1.msra.mxu0 0.0
        %2085 = vmatprep.subr.mxu0 0.0
        %2086 = vmatpush1.msra.mxu0 0.0
        %2087 = vmatprep.subr.mxu0 0.0
        %2088 = vmatpush1.msra.mxu0 0.0
        %2089 = vmatprep.subr.mxu0 0.0
        %2090 = vmatpush1.msra.mxu0 0.0
        %2091 = vmatprep.subr.mxu0 0.0
        %2092 = vmatpush1.msra.mxu0 0.0
        %2093 = vmatprep.subr.mxu0 0.0
        %2094 = vmatpush1.msra.mxu0 0.0
        %2095 = vmatprep.subr.mxu0 0.0
        %2096 = vmatpush1.msra.mxu0 0.0
        %2097 = vmatprep.subr.mxu0 0.0
        %2098 = vmatpush1.msra.mxu0 0.0
        %2099 = vmatprep.subr.mxu0 0.0
        %2100 = vmatpush1.msra.mxu0 0.0
        %2101 = vmatprep.subr.mxu0 0.0
        %2102 = vmatpush1.msra.mxu0 0.0
        %2103 = vmatprep.subr.mxu0 0.0
        %2104 = vmatpush1.msra.mxu0 0.0
        %2105 = vmatprep.subr.mxu0 0.0
        %2106 = vmatpush1.msra.mxu0 0.0
        %2107 = vmatprep.subr.mxu0 0.0
        %2108 = vmatpush1.msra.mxu0 0.0
        %2109 = vmatprep.subr.mxu0 0.0
        %2110 = vmatpush1.msra.mxu0 0.0
        %2111 = vmatprep.subr.mxu0 0.0
        %2112 = vmatpush1.msra.mxu0 0.0
        %2113 = vmatprep.subr.mxu0 0.0
        %2114 = vmatpush1.msra.mxu0 0.0
        %2115 = vmatprep.subr.mxu0 0.0
        %2116 = vmatpush1.msra.mxu0 0.0
        %2117 = vmatprep.subr.mxu0 0.0
        %2118 = vmatpush1.msra.mxu0 0.0
        %2119 = vmatprep.mubr.f32.mxu0 0.0
        %v2120 = vand.u32 %v1625, 4294901760
        %2121 = vmatmul.mubr.f32.gmra.mrb[0].mxu0 %v2120
        %v2122 = vpop.f32.mrb[0].mxu0
        %v2123 = vadd.f32 %v2044, %v2122
        %v2124 = vpop.f32.mrb[0].mxu0
        %2125 = vmatprep.mubr.f32.mxu0 0.0
        %v2126 = vand.u32 %v1628, 4294901760
        %2127 = vmatmul.mubr.f32.gmra.mrb[0].mxu0 %v2126
        %v2128 = vpop.f32.mrb[0].mxu0
        %v2129 = vadd.f32 %v2050, %v2128
        %v2130 = vpop.f32.mrb[0].mxu0
        %2131 = vdwg.mxu0
        %v2132 = vmul.f32 %v2123, 0.00048828125
        %v2133 = vmul.f32 %v2129, 0.00048828125
        %2135 = vset.pattern.permute.xlu0 0
        %2136 = vperm.xlu0 %2135, %v2132
        %v2137 = vpop.permute.xlu0 %2136
        %2140 = vset.pattern.permute.xlu0 0
        %2141 = vperm.xlu0 %2140, %v2133
        %v2142 = vpop.permute.xlu0 %2141
        %v2144 = vsub.f32 %v1556, %v2137
        %v2145 = vsub.f32 %v1558, %v2137
        %v2146 = vsub.f32 %v1599, %v2137
        %v2147 = vsub.f32 %v1601, %v2137
        %v2148 = vsub.f32 %v1560, %v2142
        %v2149 = vsub.f32 %v1562, %v2142
        %v2150 = vsub.f32 %v1603, %v2142
        %v2151 = vsub.f32 %v1605, %v2142
        %v2152 = vmul.f32 %v2144, %v2144
        %v2153 = vmul.f32 %v2145, %v2145
        %v2154 = vmul.f32 %v2146, %v2146
        %v2155 = vmul.f32 %v2147, %v2147
        %v2156 = vmul.f32 %v2148, %v2148
        %v2157 = vmul.f32 %v2149, %v2149
        %v2158 = vmul.f32 %v2150, %v2150
        %v2159 = vmul.f32 %v2151, %v2151
        %v2160 = vadd.f32 %v2152, %v2153
        %v2161 = vadd.f32 %v2160, %v2154
        %v2162 = vadd.f32 %v2161, %v2155
        %2163 = vadd.xlane.f32.xlu0 %v2162
        %v2164 = vpop.xlane.xlu0 %2163
        %v2165 = vadd.f32 %v2156, %v2157
        %v2166 = vadd.f32 %v2165, %v2158
        %v2167 = vadd.f32 %v2166, %v2159
        %2168 = vadd.xlane.f32.xlu0 %v2167
        %v2169 = vpop.xlane.xlu0 %2168
        %2170 = vmatprep.subr.mxu0 0.0
        %v2171 = vand.u32 %v2164, 4294901760
        %2172 = vmatpush1.msra.mxu0 %v2171
        %2173 = vmatprep.subr.mxu0 0.0
        %v2174 = vand.u32 %v2169, 4294901760
        %2175 = vmatpush1.msra.mxu0 %v2174
        %2176 = vmatprep.subr.mxu0 0.0
        %2177 = vmatpush1.msra.mxu0 0.0
        %2178 = vmatprep.subr.mxu0 0.0
        %2179 = vmatpush1.msra.mxu0 0.0
        %2180 = vmatprep.subr.mxu0 0.0
        %2181 = vmatpush1.msra.mxu0 0.0
        %2182 = vmatprep.subr.mxu0 0.0
        %2183 = vmatpush1.msra.mxu0 0.0
        %2184 = vmatprep.subr.mxu0 0.0
        %2185 = vmatpush1.msra.mxu0 0.0
        %2186 = vmatprep.subr.mxu0 0.0
        %2187 = vmatpush1.msra.mxu0 0.0
        %2188 = vmatprep.subr.mxu0 0.0
        %2189 = vmatpush1.msra.mxu0 0.0
        %2190 = vmatprep.subr.mxu0 0.0
        %2191 = vmatpush1.msra.mxu0 0.0
        %2192 = vmatprep.subr.mxu0 0.0
        %2193 = vmatpush1.msra.mxu0 0.0
        %2194 = vmatprep.subr.mxu0 0.0
        %2195 = vmatpush1.msra.mxu0 0.0
        %2196 = vmatprep.subr.mxu0 0.0
        %2197 = vmatpush1.msra.mxu0 0.0
        %2198 = vmatprep.subr.mxu0 0.0
        %2199 = vmatpush1.msra.mxu0 0.0
        %2200 = vmatprep.subr.mxu0 0.0
        %2201 = vmatpush1.msra.mxu0 0.0
        %2202 = vmatprep.subr.mxu0 0.0
        %2203 = vmatpush1.msra.mxu0 0.0
        %2204 = vmatprep.subr.mxu0 0.0
        %2205 = vmatpush1.msra.mxu0 0.0
        %2206 = vmatprep.subr.mxu0 0.0
        %2207 = vmatpush1.msra.mxu0 0.0
        %2208 = vmatprep.subr.mxu0 0.0
        %2209 = vmatpush1.msra.mxu0 0.0
        %2210 = vmatprep.subr.mxu0 0.0
        %2211 = vmatpush1.msra.mxu0 0.0
        %2212 = vmatprep.subr.mxu0 0.0
        %2213 = vmatpush1.msra.mxu0 0.0
        %2214 = vmatprep.subr.mxu0 0.0
        %2215 = vmatpush1.msra.mxu0 0.0
        %2216 = vmatprep.subr.mxu0 0.0
        %2217 = vmatpush1.msra.mxu0 0.0
        %2218 = vmatprep.subr.mxu0 0.0
        %2219 = vmatpush1.msra.mxu0 0.0
        %2220 = vmatprep.subr.mxu0 0.0
        %2221 = vmatpush1.msra.mxu0 0.0
        %2222 = vmatprep.subr.mxu0 0.0
        %2223 = vmatpush1.msra.mxu0 0.0
        %2224 = vmatprep.subr.mxu0 0.0
        %2225 = vmatpush1.msra.mxu0 0.0
        %2226 = vmatprep.subr.mxu0 0.0
        %2227 = vmatpush1.msra.mxu0 0.0
        %2228 = vmatprep.subr.mxu0 0.0
        %2229 = vmatpush1.msra.mxu0 0.0
        %2230 = vmatprep.subr.mxu0 0.0
        %2231 = vmatpush1.msra.mxu0 0.0
        %2232 = vmatprep.subr.mxu0 0.0
        %2233 = vmatpush1.msra.mxu0 0.0
        %2234 = vmatprep.subr.mxu0 0.0
        %2235 = vmatpush1.msra.mxu0 0.0
        %2236 = vmatprep.mubr.f32.mxu0 0.0
        %v2237 = vand.u32 %v1625, 4294901760
        %v2238 = vsub.f32 %v1625, %v2237
        %v2239 = vand.u32 %v2238, 4294901760
        %v2240 = vsub.f32 %v2238, %v2239
        %v2241 = vand.u32 %v2240, 4294901760
        %2242 = vmatmul.mubr.f32.gmra.mrb[0].mxu0 %v2241
        %v2243 = vpop.f32.mrb[0].mxu0
        %v2244 = vadd.f32 0.0, %v2243
        %v2245 = vpop.f32.mrb[0].mxu0
        %2246 = vmatprep.mubr.f32.mxu0 0.0
        %v2247 = vand.u32 %v1628, 4294901760
        %v2248 = vsub.f32 %v1628, %v2247
        %v2249 = vand.u32 %v2248, 4294901760
        %v2250 = vsub.f32 %v2248, %v2249
        %v2251 = vand.u32 %v2250, 4294901760
        %2252 = vmatmul.mubr.f32.gmra.mrb[0].mxu0 %v2251
        %v2253 = vpop.f32.mrb[0].mxu0
        %v2254 = vadd.f32 0.0, %v2253
        %v2255 = vpop.f32.mrb[0].mxu0
        %2256 = vdwg.mxu0
        %2257 = vmatprep.subr.mxu0 0.0
        %v2258 = vand.u32 %v2164, 4294901760
        %v2259 = vsub.f32 %v2164, %v2258
        %v2260 = vand.u32 %v2259, 4294901760
        %v2261 = vsub.f32 %v2259, %v2260
        %v2262 = vand.u32 %v2261, 4294901760
        %2263 = vmatpush1.msra.mxu0 %v2262
        %2264 = vmatprep.subr.mxu0 0.0
        %v2265 = vand.u32 %v2169, 4294901760
        %v2266 = vsub.f32 %v2169, %v2265
        %v2267 = vand.u32 %v2266, 4294901760
        %v2268 = vsub.f32 %v2266, %v2267
        %v2269 = vand.u32 %v2268, 4294901760
        %2270 = vmatpush1.msra.mxu0 %v2269
        %2271 = vmatprep.subr.mxu0 0.0
        %2272 = vmatpush1.msra.mxu0 0.0
        %2273 = vmatprep.subr.mxu0 0.0
        %2274 = vmatpush1.msra.mxu0 0.0
        %2275 = vmatprep.subr.mxu0 0.0
        %2276 = vmatpush1.msra.mxu0 0.0
        %2277 = vmatprep.subr.mxu0 0.0
        %2278 = vmatpush1.msra.mxu0 0.0
        %2279 = vmatprep.subr.mxu0 0.0
        %2280 = vmatpush1.msra.mxu0 0.0
        %2281 = vmatprep.subr.mxu0 0.0
        %2282 = vmatpush1.msra.mxu0 0.0
        %2283 = vmatprep.subr.mxu0 0.0
        %2284 = vmatpush1.msra.mxu0 0.0
        %2285 = vmatprep.subr.mxu0 0.0
        %2286 = vmatpush1.msra.mxu0 0.0
        %2287 = vmatprep.subr.mxu0 0.0
        %2288 = vmatpush1.msra.mxu0 0.0
        %2289 = vmatprep.subr.mxu0 0.0
        %2290 = vmatpush1.msra.mxu0 0.0
        %2291 = vmatprep.subr.mxu0 0.0
        %2292 = vmatpush1.msra.mxu0 0.0
        %2293 = vmatprep.subr.mxu0 0.0
        %2294 = vmatpush1.msra.mxu0 0.0
        %2295 = vmatprep.subr.mxu0 0.0
        %2296 = vmatpush1.msra.mxu0 0.0
        %2297 = vmatprep.subr.mxu0 0.0
        %2298 = vmatpush1.msra.mxu0 0.0
        %2299 = vmatprep.subr.mxu0 0.0
        %2300 = vmatpush1.msra.mxu0 0.0
        %2301 = vmatprep.subr.mxu0 0.0
        %2302 = vmatpush1.msra.mxu0 0.0
        %2303 = vmatprep.subr.mxu0 0.0
        %2304 = vmatpush1.msra.mxu0 0.0
        %2305 = vmatprep.subr.mxu0 0.0
        %2306 = vmatpush1.msra.mxu0 0.0
        %2307 = vmatprep.subr.mxu0 0.0
        %2308 = vmatpush1.msra.mxu0 0.0
        %2309 = vmatprep.subr.mxu0 0.0
        %2310 = vmatpush1.msra.mxu0 0.0
        %2311 = vmatprep.subr.mxu0 0.0
        %2312 = vmatpush1.msra.mxu0 0.0
        %2313 = vmatprep.subr.mxu0 0.0
        %2314 = vmatpush1.msra.mxu0 0.0
        %2315 = vmatprep.subr.mxu0 0.0
        %2316 = vmatpush1.msra.mxu0 0.0
        %2317 = vmatprep.subr.mxu0 0.0
        %2318 = vmatpush1.msra.mxu0 0.0
        %2319 = vmatprep.subr.mxu0 0.0
        %2320 = vmatpush1.msra.mxu0 0.0
        %2321 = vmatprep.subr.mxu0 0.0
        %2322 = vmatpush1.msra.mxu0 0.0
        %2323 = vmatprep.subr.mxu0 0.0
        %2324 = vmatpush1.msra.mxu0 0.0
        %2325 = vmatprep.subr.mxu0 0.0
        %2326 = vmatpush1.msra.mxu0 0.0
        %2327 = vmatprep.subr.mxu0 0.0
        %2328 = vmatpush1.msra.mxu0 0.0
        %2329 = vmatprep.subr.mxu0 0.0
        %2330 = vmatpush1.msra.mxu0 0.0
        %2331 = vmatprep.mubr.f32.mxu0 0.0
        %v2332 = vand.u32 %v1625, 4294901760
        %2333 = vmatmul.mubr.f32.gmra.mrb[0].mxu0 %v2332
        %v2334 = vpop.f32.mrb[0].mxu0
        %v2335 = vadd.f32 %v2244, %v2334
        %v2336 = vpop.f32.mrb[0].mxu0
        %2337 = vmatprep.mubr.f32.mxu0 0.0
        %v2338 = vand.u32 %v1628, 4294901760
        %2339 = vmatmul.mubr.f32.gmra.mrb[0].mxu0 %v2338
        %v2340 = vpop.f32.mrb[0].mxu0
        %v2341 = vadd.f32 %v2254, %v2340
        %v2342 = vpop.f32.mrb[0].mxu0
        %2343 = vdwg.mxu0
        %2344 = vmatprep.subr.mxu0 0.0
        %v2345 = vand.u32 %v2164, 4294901760
        %v2346 = vsub.f32 %v2164, %v2345
        %2347 = vmatpush1.msra.mxu0 %v2346
        %2348 = vmatprep.subr.mxu0 0.0
        %v2349 = vand.u32 %v2169, 4294901760
        %v2350 = vsub.f32 %v2169, %v2349
        %2351 = vmatpush1.msra.mxu0 %v2350
        %2352 = vmatprep.subr.mxu0 0.0
        %2353 = vmatpush1.msra.mxu0 0.0
        %2354 = vmatprep.subr.mxu0 0.0
        %2355 = vmatpush1.msra.mxu0 0.0
        %2356 = vmatprep.subr.mxu0 0.0
        %2357 = vmatpush1.msra.mxu0 0.0
        %2358 = vmatprep.subr.mxu0 0.0
        %2359 = vmatpush1.msra.mxu0 0.0
        %2360 = vmatprep.subr.mxu0 0.0
        %2361 = vmatpush1.msra.mxu0 0.0
        %2362 = vmatprep.subr.mxu0 0.0
        %2363 = vmatpush1.msra.mxu0 0.0
        %2364 = vmatprep.subr.mxu0 0.0
        %2365 = vmatpush1.msra.mxu0 0.0
        %2366 = vmatprep.subr.mxu0 0.0
        %2367 = vmatpush1.msra.mxu0 0.0
        %2368 = vmatprep.subr.mxu0 0.0
        %2369 = vmatpush1.msra.mxu0 0.0
        %2370 = vmatprep.subr.mxu0 0.0
        %2371 = vmatpush1.msra.mxu0 0.0
        %2372 = vmatprep.subr.mxu0 0.0
        %2373 = vmatpush1.msra.mxu0 0.0
        %2374 = vmatprep.subr.mxu0 0.0
        %2375 = vmatpush1.msra.mxu0 0.0
        %2376 = vmatprep.subr.mxu0 0.0
        %2377 = vmatpush1.msra.mxu0 0.0
        %2378 = vmatprep.subr.mxu0 0.0
        %2379 = vmatpush1.msra.mxu0 0.0
        %2380 = vmatprep.subr.mxu0 0.0
        %2381 = vmatpush1.msra.mxu0 0.0
        %2382 = vmatprep.subr.mxu0 0.0
        %2383 = vmatpush1.msra.mxu0 0.0
        %2384 = vmatprep.subr.mxu0 0.0
        %2385 = vmatpush1.msra.mxu0 0.0
        %2386 = vmatprep.subr.mxu0 0.0
        %2387 = vmatpush1.msra.mxu0 0.0
        %2388 = vmatprep.subr.mxu0 0.0
        %2389 = vmatpush1.msra.mxu0 0.0
        %2390 = vmatprep.subr.mxu0 0.0
        %2391 = vmatpush1.msra.mxu0 0.0
        %2392 = vmatprep.subr.mxu0 0.0
        %2393 = vmatpush1.msra.mxu0 0.0
        %2394 = vmatprep.subr.mxu0 0.0
        %2395 = vmatpush1.msra.mxu0 0.0
        %2396 = vmatprep.subr.mxu0 0.0
        %2397 = vmatpush1.msra.mxu0 0.0
        %2398 = vmatprep.subr.mxu0 0.0
        %2399 = vmatpush1.msra.mxu0 0.0
        %2400 = vmatprep.subr.mxu0 0.0
        %2401 = vmatpush1.msra.mxu0 0.0
        %2402 = vmatprep.subr.mxu0 0.0
        %2403 = vmatpush1.msra.mxu0 0.0
        %2404 = vmatprep.subr.mxu0 0.0
        %2405 = vmatpush1.msra.mxu0 0.0
        %2406 = vmatprep.subr.mxu0 0.0
        %2407 = vmatpush1.msra.mxu0 0.0
        %2408 = vmatprep.subr.mxu0 0.0
        %2409 = vmatpush1.msra.mxu0 0.0
        %2410 = vmatprep.subr.mxu0 0.0
        %2411 = vmatpush1.msra.mxu0 0.0
        %2412 = vmatprep.mubr.f32.mxu0 0.0
        %v2413 = vand.u32 %v1625, 4294901760
        %v2414 = vsub.f32 %v1625, %v2413
        %2415 = vmatmul.mubr.f32.gmra.mrb[0].mxu0 %v2414
        %v2416 = vpop.f32.mrb[0].mxu0
        %v2417 = vadd.f32 %v2335, %v2416
        %v2418 = vpop.f32.mrb[0].mxu0
        %2419 = vmatprep.mubr.f32.mxu0 0.0
        %v2420 = vand.u32 %v1628, 4294901760
        %v2421 = vsub.f32 %v1628, %v2420
        %2422 = vmatmul.mubr.f32.gmra.mrb[0].mxu0 %v2421
        %v2423 = vpop.f32.mrb[0].mxu0
        %v2424 = vadd.f32 %v2341, %v2423
        %v2425 = vpop.f32.mrb[0].mxu0
        %2426 = vdwg.mxu0
        %2427 = vmatprep.subr.mxu0 0.0
        %v2428 = vand.u32 %v2164, 4294901760
        %2429 = vmatpush1.msra.mxu0 %v2428
        %2430 = vmatprep.subr.mxu0 0.0
        %v2431 = vand.u32 %v2169, 4294901760
        %2432 = vmatpush1.msra.mxu0 %v2431
        %2433 = vmatprep.subr.mxu0 0.0
        %2434 = vmatpush1.msra.mxu0 0.0
        %2435 = vmatprep.subr.mxu0 0.0
        %2436 = vmatpush1.msra.mxu0 0.0
        %2437 = vmatprep.subr.mxu0 0.0
        %2438 = vmatpush1.msra.mxu0 0.0
        %2439 = vmatprep.subr.mxu0 0.0
        %2440 = vmatpush1.msra.mxu0 0.0
        %2441 = vmatprep.subr.mxu0 0.0
        %2442 = vmatpush1.msra.mxu0 0.0
        %2443 = vmatprep.subr.mxu0 0.0
        %2444 = vmatpush1.msra.mxu0 0.0
        %2445 = vmatprep.subr.mxu0 0.0
        %2446 = vmatpush1.msra.mxu0 0.0
        %2447 = vmatprep.subr.mxu0 0.0
        %2448 = vmatpush1.msra.mxu0 0.0
        %2449 = vmatprep.subr.mxu0 0.0
        %2450 = vmatpush1.msra.mxu0 0.0
        %2451 = vmatprep.subr.mxu0 0.0
        %2452 = vmatpush1.msra.mxu0 0.0
        %2453 = vmatprep.subr.mxu0 0.0
        %2454 = vmatpush1.msra.mxu0 0.0
        %2455 = vmatprep.subr.mxu0 0.0
        %2456 = vmatpush1.msra.mxu0 0.0
        %2457 = vmatprep.subr.mxu0 0.0
        %2458 = vmatpush1.msra.mxu0 0.0
        %2459 = vmatprep.subr.mxu0 0.0
        %2460 = vmatpush1.msra.mxu0 0.0
        %2461 = vmatprep.subr.mxu0 0.0
        %2462 = vmatpush1.msra.mxu0 0.0
        %2463 = vmatprep.subr.mxu0 0.0
        %2464 = vmatpush1.msra.mxu0 0.0
        %2465 = vmatprep.subr.mxu0 0.0
        %2466 = vmatpush1.msra.mxu0 0.0
        %2467 = vmatprep.subr.mxu0 0.0
        %2468 = vmatpush1.msra.mxu0 0.0
        %2469 = vmatprep.subr.mxu0 0.0
        %2470 = vmatpush1.msra.mxu0 0.0
        %2471 = vmatprep.subr.mxu0 0.0
        %2472 = vmatpush1.msra.mxu0 0.0
        %2473 = vmatprep.subr.mxu0 0.0
        %2474 = vmatpush1.msra.mxu0 0.0
        %2475 = vmatprep.subr.mxu0 0.0
        %2476 = vmatpush1.msra.mxu0 0.0
        %2477 = vmatprep.subr.mxu0 0.0
        %2478 = vmatpush1.msra.mxu0 0.0
        %2479 = vmatprep.subr.mxu0 0.0
        %2480 = vmatpush1.msra.mxu0 0.0
        %2481 = vmatprep.subr.mxu0 0.0
        %2482 = vmatpush1.msra.mxu0 0.0
        %2483 = vmatprep.subr.mxu0 0.0
        %2484 = vmatpush1.msra.mxu0 0.0
        %2485 = vmatprep.subr.mxu0 0.0
        %2486 = vmatpush1.msra.mxu0 0.0
        %2487 = vmatprep.subr.mxu0 0.0
        %2488 = vmatpush1.msra.mxu0 0.0
        %2489 = vmatprep.subr.mxu0 0.0
        %2490 = vmatpush1.msra.mxu0 0.0
        %2491 = vmatprep.subr.mxu0 0.0
        %2492 = vmatpush1.msra.mxu0 0.0
        %2493 = vmatprep.mubr.f32.mxu0 0.0
        %v2494 = vand.u32 %v1625, 4294901760
        %v2495 = vsub.f32 %v1625, %v2494
        %v2496 = vand.u32 %v2495, 4294901760
        %2497 = vmatmul.mubr.f32.gmra.mrb[0].mxu0 %v2496
        %v2498 = vpop.f32.mrb[0].mxu0
        %v2499 = vadd.f32 %v2417, %v2498
        %v2500 = vpop.f32.mrb[0].mxu0
        %2501 = vmatprep.mubr.f32.mxu0 0.0
        %v2502 = vand.u32 %v1628, 4294901760
        %v2503 = vsub.f32 %v1628, %v2502
        %v2504 = vand.u32 %v2503, 4294901760
        %2505 = vmatmul.mubr.f32.gmra.mrb[0].mxu0 %v2504
        %v2506 = vpop.f32.mrb[0].mxu0
        %v2507 = vadd.f32 %v2424, %v2506
        %v2508 = vpop.f32.mrb[0].mxu0
        %2509 = vdwg.mxu0
        %2510 = vmatprep.subr.mxu0 0.0
        %v2511 = vand.u32 %v2164, 4294901760
        %v2512 = vsub.f32 %v2164, %v2511
        %v2513 = vand.u32 %v2512, 4294901760
        %2514 = vmatpush1.msra.mxu0 %v2513
        %2515 = vmatprep.subr.mxu0 0.0
        %v2516 = vand.u32 %v2169, 4294901760
        %v2517 = vsub.f32 %v2169, %v2516
        %v2518 = vand.u32 %v2517, 4294901760
        %2519 = vmatpush1.msra.mxu0 %v2518
        %2520 = vmatprep.subr.mxu0 0.0
        %2521 = vmatpush1.msra.mxu0 0.0
        %2522 = vmatprep.subr.mxu0 0.0
        %2523 = vmatpush1.msra.mxu0 0.0
        %2524 = vmatprep.subr.mxu0 0.0
        %2525 = vmatpush1.msra.mxu0 0.0
        %2526 = vmatprep.subr.mxu0 0.0
        %2527 = vmatpush1.msra.mxu0 0.0
        %2528 = vmatprep.subr.mxu0 0.0
        %2529 = vmatpush1.msra.mxu0 0.0
        %2530 = vmatprep.subr.mxu0 0.0
        %2531 = vmatpush1.msra.mxu0 0.0
        %2532 = vmatprep.subr.mxu0 0.0
        %2533 = vmatpush1.msra.mxu0 0.0
        %2534 = vmatprep.subr.mxu0 0.0
        %2535 = vmatpush1.msra.mxu0 0.0
        %2536 = vmatprep.subr.mxu0 0.0
        %2537 = vmatpush1.msra.mxu0 0.0
        %2538 = vmatprep.subr.mxu0 0.0
        %2539 = vmatpush1.msra.mxu0 0.0
        %2540 = vmatprep.subr.mxu0 0.0
        %2541 = vmatpush1.msra.mxu0 0.0
        %2542 = vmatprep.subr.mxu0 0.0
        %2543 = vmatpush1.msra.mxu0 0.0
        %2544 = vmatprep.subr.mxu0 0.0
        %2545 = vmatpush1.msra.mxu0 0.0
        %2546 = vmatprep.subr.mxu0 0.0
        %2547 = vmatpush1.msra.mxu0 0.0
        %2548 = vmatprep.subr.mxu0 0.0
        %2549 = vmatpush1.msra.mxu0 0.0
        %2550 = vmatprep.subr.mxu0 0.0
        %2551 = vmatpush1.msra.mxu0 0.0
        %2552 = vmatprep.subr.mxu0 0.0
        %2553 = vmatpush1.msra.mxu0 0.0
        %2554 = vmatprep.subr.mxu0 0.0
        %2555 = vmatpush1.msra.mxu0 0.0
        %2556 = vmatprep.subr.mxu0 0.0
        %2557 = vmatpush1.msra.mxu0 0.0
        %2558 = vmatprep.subr.mxu0 0.0
        %2559 = vmatpush1.msra.mxu0 0.0
        %2560 = vmatprep.subr.mxu0 0.0
        %2561 = vmatpush1.msra.mxu0 0.0
        %2562 = vmatprep.subr.mxu0 0.0
        %2563 = vmatpush1.msra.mxu0 0.0
        %2564 = vmatprep.subr.mxu0 0.0
        %2565 = vmatpush1.msra.mxu0 0.0
        %2566 = vmatprep.subr.mxu0 0.0
        %2567 = vmatpush1.msra.mxu0 0.0
        %2568 = vmatprep.subr.mxu0 0.0
        %2569 = vmatpush1.msra.mxu0 0.0
        %2570 = vmatprep.subr.mxu0 0.0
        %2571 = vmatpush1.msra.mxu0 0.0
        %2572 = vmatprep.subr.mxu0 0.0
        %2573 = vmatpush1.msra.mxu0 0.0
        %2574 = vmatprep.subr.mxu0 0.0
        %2575 = vmatpush1.msra.mxu0 0.0
        %2576 = vmatprep.subr.mxu0 0.0
        %2577 = vmatpush1.msra.mxu0 0.0
        %2578 = vmatprep.subr.mxu0 0.0
        %2579 = vmatpush1.msra.mxu0 0.0
        %2580 = vmatprep.mubr.f32.mxu0 0.0
        %v2581 = vand.u32 %v1625, 4294901760
        %2582 = vmatmul.mubr.f32.gmra.mrb[0].mxu0 %v2581
        %v2583 = vpop.f32.mrb[0].mxu0
        %v2584 = vadd.f32 %v2499, %v2583
        %v2585 = vpop.f32.mrb[0].mxu0
        %2586 = vmatprep.mubr.f32.mxu0 0.0
        %v2587 = vand.u32 %v1628, 4294901760
        %2588 = vmatmul.mubr.f32.gmra.mrb[0].mxu0 %v2587
        %v2589 = vpop.f32.mrb[0].mxu0
        %v2590 = vadd.f32 %v2507, %v2589
        %v2591 = vpop.f32.mrb[0].mxu0
        %2592 = vdwg.mxu0
        %2593 = vmatprep.subr.mxu0 0.0
        %v2594 = vand.u32 %v2164, 4294901760
        %2595 = vmatpush1.msra.mxu0 %v2594
        %2596 = vmatprep.subr.mxu0 0.0
        %v2597 = vand.u32 %v2169, 4294901760
        %2598 = vmatpush1.msra.mxu0 %v2597
        %2599 = vmatprep.subr.mxu0 0.0
        %2600 = vmatpush1.msra.mxu0 0.0
        %2601 = vmatprep.subr.mxu0 0.0
        %2602 = vmatpush1.msra.mxu0 0.0
        %2603 = vmatprep.subr.mxu0 0.0
        %2604 = vmatpush1.msra.mxu0 0.0
        %2605 = vmatprep.subr.mxu0 0.0
        %2606 = vmatpush1.msra.mxu0 0.0
        %2607 = vmatprep.subr.mxu0 0.0
        %2608 = vmatpush1.msra.mxu0 0.0
        %2609 = vmatprep.subr.mxu0 0.0
        %2610 = vmatpush1.msra.mxu0 0.0
        %2611 = vmatprep.subr.mxu0 0.0
        %2612 = vmatpush1.msra.mxu0 0.0
        %2613 = vmatprep.subr.mxu0 0.0
        %2614 = vmatpush1.msra.mxu0 0.0
        %2615 = vmatprep.subr.mxu0 0.0
        %2616 = vmatpush1.msra.mxu0 0.0
        %2617 = vmatprep.subr.mxu0 0.0
        %2618 = vmatpush1.msra.mxu0 0.0
        %2619 = vmatprep.subr.mxu0 0.0
        %2620 = vmatpush1.msra.mxu0 0.0
        %2621 = vmatprep.subr.mxu0 0.0
        %2622 = vmatpush1.msra.mxu0 0.0
        %2623 = vmatprep.subr.mxu0 0.0
        %2624 = vmatpush1.msra.mxu0 0.0
        %2625 = vmatprep.subr.mxu0 0.0
        %2626 = vmatpush1.msra.mxu0 0.0
        %2627 = vmatprep.subr.mxu0 0.0
        %2628 = vmatpush1.msra.mxu0 0.0
        %2629 = vmatprep.subr.mxu0 0.0
        %2630 = vmatpush1.msra.mxu0 0.0
        %2631 = vmatprep.subr.mxu0 0.0
        %2632 = vmatpush1.msra.mxu0 0.0
        %2633 = vmatprep.subr.mxu0 0.0
        %2634 = vmatpush1.msra.mxu0 0.0
        %2635 = vmatprep.subr.mxu0 0.0
        %2636 = vmatpush1.msra.mxu0 0.0
        %2637 = vmatprep.subr.mxu0 0.0
        %2638 = vmatpush1.msra.mxu0 0.0
        %2639 = vmatprep.subr.mxu0 0.0
        %2640 = vmatpush1.msra.mxu0 0.0
        %2641 = vmatprep.subr.mxu0 0.0
        %2642 = vmatpush1.msra.mxu0 0.0
        %2643 = vmatprep.subr.mxu0 0.0
        %2644 = vmatpush1.msra.mxu0 0.0
        %2645 = vmatprep.subr.mxu0 0.0
        %2646 = vmatpush1.msra.mxu0 0.0
        %2647 = vmatprep.subr.mxu0 0.0
        %2648 = vmatpush1.msra.mxu0 0.0
        %2649 = vmatprep.subr.mxu0 0.0
        %2650 = vmatpush1.msra.mxu0 0.0
        %2651 = vmatprep.subr.mxu0 0.0
        %2652 = vmatpush1.msra.mxu0 0.0
        %2653 = vmatprep.subr.mxu0 0.0
        %2654 = vmatpush1.msra.mxu0 0.0
        %2655 = vmatprep.subr.mxu0 0.0
        %2656 = vmatpush1.msra.mxu0 0.0
        %2657 = vmatprep.subr.mxu0 0.0
        %2658 = vmatpush1.msra.mxu0 0.0
        %2659 = vmatprep.mubr.f32.mxu0 0.0
        %v2660 = vand.u32 %v1625, 4294901760
        %2661 = vmatmul.mubr.f32.gmra.mrb[0].mxu0 %v2660
        %v2662 = vpop.f32.mrb[0].mxu0
        %v2663 = vadd.f32 %v2584, %v2662
        %v2664 = vpop.f32.mrb[0].mxu0
        %2665 = vmatprep.mubr.f32.mxu0 0.0
        %v2666 = vand.u32 %v1628, 4294901760
        %2667 = vmatmul.mubr.f32.gmra.mrb[0].mxu0 %v2666
        %v2668 = vpop.f32.mrb[0].mxu0
        %v2669 = vadd.f32 %v2590, %v2668
        %v2670 = vpop.f32.mrb[0].mxu0
        %2671 = vdwg.mxu0
        %v2672 = vmul.f32 %v2663, 0.00048828125
        %v2673 = vmul.f32 %v2669, 0.00048828125
        %v2674 = vadd.f32 %v2672, 1e-05
        %v2675 = vadd.f32 %v2673, 1e-05
        %v2676 = vrsqrt.pop %v2674
        %v2677 = vrsqrt.pop %v2675
        %2679 = vset.pattern.permute.xlu0 0
        %2680 = vperm.xlu0 %2679, %v2676
        %v2681 = vpop.permute.xlu0 %2680
        %2684 = vset.pattern.permute.xlu0 0
        %2685 = vperm.xlu0 %2684, %v2677
        %v2686 = vpop.permute.xlu0 %2685
        %v2688 = vmul.f32 %v2144, %v2681
        %v2689 = vmul.f32 %v2145, %v2681
        %v2690 = vmul.f32 %v2146, %v2681
        %v2691 = vmul.f32 %v2147, %v2681
        %v2692 = vmul.f32 %v2148, %v2686
        %v2693 = vmul.f32 %v2149, %v2686
        %v2694 = vmul.f32 %v2150, %v2686
        %v2695 = vmul.f32 %v2151, %v2686
        %2697 = vset.pattern.permute.xlu0 0
        %2698 = vperm.xlu0 %2697, %v1609
        %v2699 = vpop.permute.xlu0 %2698
        %2702 = vset.pattern.permute.xlu0 0
        %2703 = vperm.xlu0 %2702, %v1610
        %v2704 = vpop.permute.xlu0 %2703
        %v2706 = vmul.f32 %v2688, %v2699
        %v2707 = vmul.f32 %v2689, %v2699
        %v2708 = vmul.f32 %v2690, %v2699
        %v2709 = vmul.f32 %v2691, %v2699
        %v2710 = vmul.f32 %v2692, %v2704
        %v2711 = vmul.f32 %v2693, %v2704
        %v2712 = vmul.f32 %v2694, %v2704
        %v2713 = vmul.f32 %v2695, %v2704
        %2715 = vset.pattern.permute.xlu0 0
        %2716 = vperm.xlu0 %2715, %v1611
        %v2717 = vpop.permute.xlu0 %2716
        %2720 = vset.pattern.permute.xlu0 0
        %2721 = vperm.xlu0 %2720, %v1612
        %v2722 = vpop.permute.xlu0 %2721
        %v2724 = vadd.f32 %v2706, %v2717
        %v2725 = vadd.f32 %v2707, %v2717
        %v2726 = vadd.f32 %v2708, %v2717
        %v2727 = vadd.f32 %v2709, %v2717
        %v2728 = vadd.f32 %v2710, %v2722
        %v2729 = vadd.f32 %v2711, %v2722
        %v2730 = vadd.f32 %v2712, %v2722
        %v2731 = vadd.f32 %v2713, %v2722
        %vm2732 = vcmp.gt.f32.partialorder %v2724, 0.0
        %vm2733 = vcmp.gt.f32.partialorder %v2725, 0.0
        %vm2734 = vcmp.gt.f32.partialorder %v2726, 0.0
        %vm2735 = vcmp.gt.f32.partialorder %v2727, 0.0
        %vm2736 = vcmp.gt.f32.partialorder %v2728, 0.0
        %vm2737 = vcmp.gt.f32.partialorder %v2729, 0.0
        %vm2738 = vcmp.gt.f32.partialorder %v2730, 0.0
        %vm2739 = vcmp.gt.f32.partialorder %v2731, 0.0
        %v2740 = vmul.f32 %v2724, 0.2
        %v2741 = vmul.f32 %v2725, 0.2
        %v2742 = vmul.f32 %v2726, 0.2
        %v2743 = vmul.f32 %v2727, 0.2
        %v2744 = vmul.f32 %v2728, 0.2
        %v2745 = vmul.f32 %v2729, 0.2
        %v2746 = vmul.f32 %v2730, 0.2
        %v2747 = vmul.f32 %v2731, 0.2
        %v2748 = vsel %vm2732, %v2724, %v2740
        %v2749 = vsel %vm2733, %v2725, %v2741
        %v2750 = vsel %vm2734, %v2726, %v2742
        %v2751 = vsel %vm2735, %v2727, %v2743
        %v2752 = vsel %vm2736, %v2728, %v2744
        %v2753 = vsel %vm2737, %v2729, %v2745
        %v2754 = vsel %vm2738, %v2730, %v2746
        %v2755 = vsel %vm2739, %v2731, %v2747
        %2756 = vrot.lane.b32.xlu0 %v2748, 73
        %v2757 = vpop.permute.xlu0 %2756
        %2758 = vrot.lane.b32.xlu0 %v2752, 73
        %v2759 = vpop.permute.xlu0 %2758
        %2760 = vrot.lane.b32.xlu0 %v2749, 73
        %v2761 = vpop.permute.xlu0 %2760
        %2762 = vrot.lane.b32.xlu0 %v2753, 73
        %v2763 = vpop.permute.xlu0 %2762
        %2764 = vrot.lane.b32.xlu0 %v2750, 73
        %v2765 = vpop.permute.xlu0 %2764
        %2766 = vrot.lane.b32.xlu0 %v2754, 73
        %v2767 = vpop.permute.xlu0 %2766
        %2768 = vrot.lane.b32.xlu0 %v2751, 73
        %v2769 = vpop.permute.xlu0 %2768
        %2770 = vrot.lane.b32.xlu0 %v2755, 73
        %v2771 = vpop.permute.xlu0 %2770
        %v2772 = vlaneseq
        %v2773 = vand.u32 %v2772, 127
        %vm2774 = vcmp.lt.s32.totalorder %v2773, 73
        %v2775 = vsel %vm2774, %v2765, %v2769
        %v2776 = vsel %vm2774, %v2767, %v2771
        %v2777 = vsel %vm2774, %v2761, %v2765
        %v2778 = vsel %vm2774, %v2763, %v2767
        %v2779 = vsel %vm2774, %v2757, %v2761
        %v2780 = vsel %vm2774, %v2759, %v2763
        %v2781 = vsel %vm2774, %v2769, %v2757
        %v2782 = vsel %vm2774, %v2771, %v2759
        %v2783 = vld [vmem:[%s9] sm:$0xf]
        %v2785 = vlaneseq
        %v2786 = vshrl.u32 %v2785, 7
        %v2787 = vsub.s32 0, %v2786
        %v2788 = vrot.slane %v2783, %v2787
        %v2789 = vlaneseq
        %v2790 = vshrl.u32 %v2789, 7
        %v2791 = vsub.s32 1, %v2790
        %v2792 = vrot.slane %v2783, %v2791
        %v2793 = vlaneseq
        %v2794 = vshrl.u32 %v2793, 7
        %v2795 = vsub.s32 2, %v2794
        %v2796 = vrot.slane %v2783, %v2795
        %v2797 = vlaneseq
        %v2798 = vshrl.u32 %v2797, 7
        %v2799 = vsub.s32 3, %v2798
        %v2800 = vrot.slane %v2783, %v2799
        %v2805 = vmul.f32 %v2781, %v2788
        %v2806 = vmul.f32 %v2779, %v2792
        %v2807 = vmul.f32 %v2777, %v2796
        %v2808 = vmul.f32 %v2775, %v2800
        %v2809 = vmul.f32 %v2782, %v2788
        %v2810 = vmul.f32 %v2780, %v2792
        %v2811 = vmul.f32 %v2778, %v2796
        %v2812 = vmul.f32 %v2776, %v2800
        %v2813 = vpack.c.bf16 %v2809, %v2805
        %v2814 = vpack.c.bf16 %v2810, %v2806
        %v2815 = vpack.c.bf16 %v2811, %v2807
        %v2816 = vpack.c.bf16 %v2812, %v2808
        %2817 = vrot.lane.b32.xlu0 %v2748, 72
        %v2818 = vpop.permute.xlu0 %2817
        %2819 = vrot.lane.b32.xlu0 %v2752, 72
        %v2820 = vpop.permute.xlu0 %2819
        %2821 = vrot.lane.b32.xlu0 %v2749, 72
        %v2822 = vpop.permute.xlu0 %2821
        %2823 = vrot.lane.b32.xlu0 %v2753, 72
        %v2824 = vpop.permute.xlu0 %2823
        %2825 = vrot.lane.b32.xlu0 %v2750, 72
        %v2826 = vpop.permute.xlu0 %2825
        %2827 = vrot.lane.b32.xlu0 %v2754, 72
        %v2828 = vpop.permute.xlu0 %2827
        %2829 = vrot.lane.b32.xlu0 %v2751, 72
        %v2830 = vpop.permute.xlu0 %2829
        %2831 = vrot.lane.b32.xlu0 %v2755, 72
        %v2832 = vpop.permute.xlu0 %2831
        %vm2833 = vcmp.lt.s32.totalorder %v2773, 72
        %v2834 = vsel %vm2833, %v2826, %v2830
        %v2835 = vsel %vm2833, %v2828, %v2832
        %v2836 = vsel %vm2833, %v2822, %v2826
        %v2837 = vsel %vm2833, %v2824, %v2828
        %v2838 = vsel %vm2833, %v2818, %v2822
        %v2839 = vsel %vm2833, %v2820, %v2824
        %v2840 = vsel %vm2833, %v2830, %v2818
        %v2841 = vsel %vm2833, %v2832, %v2820
        %s2842 = scalar_lea.vmem %s9, 4
        %v2843 = vld [vmem:[%s2842] sm:$0xf]
        %v2845 = vlaneseq
        %v2846 = vshrl.u32 %v2845, 7
        %v2847 = vsub.s32 0, %v2846
        %v2848 = vrot.slane %v2843, %v2847
        %v2849 = vlaneseq
        %v2850 = vshrl.u32 %v2849, 7
        %v2851 = vsub.s32 1, %v2850
        %v2852 = vrot.slane %v2843, %v2851
        %v2853 = vlaneseq
        %v2854 = vshrl.u32 %v2853, 7
        %v2855 = vsub.s32 2, %v2854
        %v2856 = vrot.slane %v2843, %v2855
        %v2857 = vlaneseq
        %v2858 = vshrl.u32 %v2857, 7
        %v2859 = vsub.s32 3, %v2858
        %v2860 = vrot.slane %v2843, %v2859
        %v2865 = vmul.f32 %v2840, %v2848
        %v2866 = vmul.f32 %v2838, %v2852
        %v2867 = vmul.f32 %v2836, %v2856
        %v2868 = vmul.f32 %v2834, %v2860
        %v2869 = vmul.f32 %v2841, %v2848
        %v2870 = vmul.f32 %v2839, %v2852
        %v2871 = vmul.f32 %v2837, %v2856
        %v2872 = vmul.f32 %v2835, %v2860
        %v2873 = vpack.c.bf16 %v2869, %v2865
        %v2874 = vpack.c.bf16 %v2870, %v2866
        %v2875 = vpack.c.bf16 %v2871, %v2867
        %v2876 = vpack.c.bf16 %v2872, %v2868
        %2877 = vrot.lane.b32.xlu0 %v2748, 71
        %v2878 = vpop.permute.xlu0 %2877
        %2879 = vrot.lane.b32.xlu0 %v2752, 71
        %v2880 = vpop.permute.xlu0 %2879
        %2881 = vrot.lane.b32.xlu0 %v2749, 71
        %v2882 = vpop.permute.xlu0 %2881
        %2883 = vrot.lane.b32.xlu0 %v2753, 71
        %v2884 = vpop.permute.xlu0 %2883
        %2885 = vrot.lane.b32.xlu0 %v2750, 71
        %v2886 = vpop.permute.xlu0 %2885
        %2887 = vrot.lane.b32.xlu0 %v2754, 71
        %v2888 = vpop.permute.xlu0 %2887
        %2889 = vrot.lane.b32.xlu0 %v2751, 71
        %v2890 = vpop.permute.xlu0 %2889
        %2891 = vrot.lane.b32.xlu0 %v2755, 71
        %v2892 = vpop.permute.xlu0 %2891
        %vm2893 = vcmp.lt.s32.totalorder %v2773, 71
        %v2894 = vsel %vm2893, %v2886, %v2890
        %v2895 = vsel %vm2893, %v2888, %v2892
        %v2896 = vsel %vm2893, %v2882, %v2886
        %v2897 = vsel %vm2893, %v2884, %v2888
        %v2898 = vsel %vm2893, %v2878, %v2882
        %v2899 = vsel %vm2893, %v2880, %v2884
        %v2900 = vsel %vm2893, %v2890, %v2878
        %v2901 = vsel %vm2893, %v2892, %v2880
        %s2902 = scalar_lea.vmem %s9, 8
        %v2903 = vld [vmem:[%s2902] sm:$0xf]
        %v2905 = vlaneseq
        %v2906 = vshrl.u32 %v2905, 7
        %v2907 = vsub.s32 0, %v2906
        %v2908 = vrot.slane %v2903, %v2907
        %v2909 = vlaneseq
        %v2910 = vshrl.u32 %v2909, 7
        %v2911 = vsub.s32 1, %v2910
        %v2912 = vrot.slane %v2903, %v2911
        %v2913 = vlaneseq
        %v2914 = vshrl.u32 %v2913, 7
        %v2915 = vsub.s32 2, %v2914
        %v2916 = vrot.slane %v2903, %v2915
        %v2917 = vlaneseq
        %v2918 = vshrl.u32 %v2917, 7
        %v2919 = vsub.s32 3, %v2918
        %v2920 = vrot.slane %v2903, %v2919
        %v2925 = vmul.f32 %v2900, %v2908
        %v2926 = vmul.f32 %v2898, %v2912
        %v2927 = vmul.f32 %v2896, %v2916
        %v2928 = vmul.f32 %v2894, %v2920
        %v2929 = vmul.f32 %v2901, %v2908
        %v2930 = vmul.f32 %v2899, %v2912
        %v2931 = vmul.f32 %v2897, %v2916
        %v2932 = vmul.f32 %v2895, %v2920
        %v2933 = vpack.c.bf16 %v2929, %v2925
        %v2934 = vpack.c.bf16 %v2930, %v2926
        %v2935 = vpack.c.bf16 %v2931, %v2927
        %v2936 = vpack.c.bf16 %v2932, %v2928
        %2937 = vrot.lane.b32.xlu0 %v2748, 65
        %v2938 = vpop.permute.xlu0 %2937
        %2939 = vrot.lane.b32.xlu0 %v2752, 65
        %v2940 = vpop.permute.xlu0 %2939
        %2941 = vrot.lane.b32.xlu0 %v2749, 65
        %v2942 = vpop.permute.xlu0 %2941
        %2943 = vrot.lane.b32.xlu0 %v2753, 65
        %v2944 = vpop.permute.xlu0 %2943
        %2945 = vrot.lane.b32.xlu0 %v2750, 65
        %v2946 = vpop.permute.xlu0 %2945
        %2947 = vrot.lane.b32.xlu0 %v2754, 65
        %v2948 = vpop.permute.xlu0 %2947
        %2949 = vrot.lane.b32.xlu0 %v2751, 65
        %v2950 = vpop.permute.xlu0 %2949
        %2951 = vrot.lane.b32.xlu0 %v2755, 65
        %v2952 = vpop.permute.xlu0 %2951
        %vm2953 = vcmp.lt.s32.totalorder %v2773, 65
        %v2954 = vsel %vm2953, %v2946, %v2950
        %v2955 = vsel %vm2953, %v2948, %v2952
        %v2956 = vsel %vm2953, %v2942, %v2946
        %v2957 = vsel %vm2953, %v2944, %v2948
        %v2958 = vsel %vm2953, %v2938, %v2942
        %v2959 = vsel %vm2953, %v2940, %v2944
        %v2960 = vsel %vm2953, %v2950, %v2938
        %v2961 = vsel %vm2953, %v2952, %v2940
        %s2962 = scalar_lea.vmem %s9, 12
        %v2963 = vld [vmem:[%s2962] sm:$0xf]
        %v2965 = vlaneseq
        %v2966 = vshrl.u32 %v2965, 7
        %v2967 = vsub.s32 0, %v2966
        %v2968 = vrot.slane %v2963, %v2967
        %v2969 = vlaneseq
        %v2970 = vshrl.u32 %v2969, 7
        %v2971 = vsub.s32 1, %v2970
        %v2972 = vrot.slane %v2963, %v2971
        %v2973 = vlaneseq
        %v2974 = vshrl.u32 %v2973, 7
        %v2975 = vsub.s32 2, %v2974
        %v2976 = vrot.slane %v2963, %v2975
        %v2977 = vlaneseq
        %v2978 = vshrl.u32 %v2977, 7
        %v2979 = vsub.s32 3, %v2978
        %v2980 = vrot.slane %v2963, %v2979
        %v2985 = vmul.f32 %v2960, %v2968
        %v2986 = vmul.f32 %v2958, %v2972
        %v2987 = vmul.f32 %v2956, %v2976
        %v2988 = vmul.f32 %v2954, %v2980
        %v2989 = vmul.f32 %v2961, %v2968
        %v2990 = vmul.f32 %v2959, %v2972
        %v2991 = vmul.f32 %v2957, %v2976
        %v2992 = vmul.f32 %v2955, %v2980
        %v2993 = vpack.c.bf16 %v2989, %v2985
        %v2994 = vpack.c.bf16 %v2990, %v2986
        %v2995 = vpack.c.bf16 %v2991, %v2987
        %v2996 = vpack.c.bf16 %v2992, %v2988
        %2997 = vrot.lane.b32.xlu0 %v2748, 64
        %v2998 = vpop.permute.xlu0 %2997
        %2999 = vrot.lane.b32.xlu0 %v2752, 64
        %v3000 = vpop.permute.xlu0 %2999
        %3001 = vrot.lane.b32.xlu0 %v2749, 64
        %v3002 = vpop.permute.xlu0 %3001
        %3003 = vrot.lane.b32.xlu0 %v2753, 64
        %v3004 = vpop.permute.xlu0 %3003
        %3005 = vrot.lane.b32.xlu0 %v2750, 64
        %v3006 = vpop.permute.xlu0 %3005
        %3007 = vrot.lane.b32.xlu0 %v2754, 64
        %v3008 = vpop.permute.xlu0 %3007
        %3009 = vrot.lane.b32.xlu0 %v2751, 64
        %v3010 = vpop.permute.xlu0 %3009
        %3011 = vrot.lane.b32.xlu0 %v2755, 64
        %v3012 = vpop.permute.xlu0 %3011
        %vm3013 = vcmp.lt.s32.totalorder %v2773, 64
        %v3014 = vsel %vm3013, %v3006, %v3010
        %v3015 = vsel %vm3013, %v3008, %v3012
        %v3016 = vsel %vm3013, %v3002, %v3006
        %v3017 = vsel %vm3013, %v3004, %v3008
        %v3018 = vsel %vm3013, %v2998, %v3002
        %v3019 = vsel %vm3013, %v3000, %v3004
        %v3020 = vsel %vm3013, %v3010, %v2998
        %v3021 = vsel %vm3013, %v3012, %v3000
        %s3022 = scalar_lea.vmem %s9, 16
        %v3023 = vld [vmem:[%s3022] sm:$0xf]
        %v3025 = vlaneseq
        %v3026 = vshrl.u32 %v3025, 7
        %v3027 = vsub.s32 0, %v3026
        %v3028 = vrot.slane %v3023, %v3027
        %v3029 = vlaneseq
        %v3030 = vshrl.u32 %v3029, 7
        %v3031 = vsub.s32 1, %v3030
        %v3032 = vrot.slane %v3023, %v3031
        %v3033 = vlaneseq
        %v3034 = vshrl.u32 %v3033, 7
        %v3035 = vsub.s32 2, %v3034
        %v3036 = vrot.slane %v3023, %v3035
        %v3037 = vlaneseq
        %v3038 = vshrl.u32 %v3037, 7
        %v3039 = vsub.s32 3, %v3038
        %v3040 = vrot.slane %v3023, %v3039
        %v3045 = vmul.f32 %v3020, %v3028
        %v3046 = vmul.f32 %v3018, %v3032
        %v3047 = vmul.f32 %v3016, %v3036
        %v3048 = vmul.f32 %v3014, %v3040
        %v3049 = vmul.f32 %v3021, %v3028
        %v3050 = vmul.f32 %v3019, %v3032
        %v3051 = vmul.f32 %v3017, %v3036
        %v3052 = vmul.f32 %v3015, %v3040
        %v3053 = vpack.c.bf16 %v3049, %v3045
        %v3054 = vpack.c.bf16 %v3050, %v3046
        %v3055 = vpack.c.bf16 %v3051, %v3047
        %v3056 = vpack.c.bf16 %v3052, %v3048
        %3057 = vrot.lane.b32.xlu0 %v2748, 63
        %v3058 = vpop.permute.xlu0 %3057
        %3059 = vrot.lane.b32.xlu0 %v2752, 63
        %v3060 = vpop.permute.xlu0 %3059
        %3061 = vrot.lane.b32.xlu0 %v2749, 63
        %v3062 = vpop.permute.xlu0 %3061
        %3063 = vrot.lane.b32.xlu0 %v2753, 63
        %v3064 = vpop.permute.xlu0 %3063
        %3065 = vrot.lane.b32.xlu0 %v2750, 63
        %v3066 = vpop.permute.xlu0 %3065
        %3067 = vrot.lane.b32.xlu0 %v2754, 63
        %v3068 = vpop.permute.xlu0 %3067
        %3069 = vrot.lane.b32.xlu0 %v2751, 63
        %v3070 = vpop.permute.xlu0 %3069
        %3071 = vrot.lane.b32.xlu0 %v2755, 63
        %v3072 = vpop.permute.xlu0 %3071
        %vm3073 = vcmp.lt.s32.totalorder %v2773, 63
        %v3074 = vsel %vm3073, %v3066, %v3070
        %v3075 = vsel %vm3073, %v3068, %v3072
        %v3076 = vsel %vm3073, %v3062, %v3066
        %v3077 = vsel %vm3073, %v3064, %v3068
        %v3078 = vsel %vm3073, %v3058, %v3062
        %v3079 = vsel %vm3073, %v3060, %v3064
        %v3080 = vsel %vm3073, %v3070, %v3058
        %v3081 = vsel %vm3073, %v3072, %v3060
        %s3082 = scalar_lea.vmem %s9, 20
        %v3083 = vld [vmem:[%s3082] sm:$0xf]
        %v3085 = vlaneseq
        %v3086 = vshrl.u32 %v3085, 7
        %v3087 = vsub.s32 0, %v3086
        %v3088 = vrot.slane %v3083, %v3087
        %v3089 = vlaneseq
        %v3090 = vshrl.u32 %v3089, 7
        %v3091 = vsub.s32 1, %v3090
        %v3092 = vrot.slane %v3083, %v3091
        %v3093 = vlaneseq
        %v3094 = vshrl.u32 %v3093, 7
        %v3095 = vsub.s32 2, %v3094
        %v3096 = vrot.slane %v3083, %v3095
        %v3097 = vlaneseq
        %v3098 = vshrl.u32 %v3097, 7
        %v3099 = vsub.s32 3, %v3098
        %v3100 = vrot.slane %v3083, %v3099
        %v3105 = vmul.f32 %v3080, %v3088
        %v3106 = vmul.f32 %v3078, %v3092
        %v3107 = vmul.f32 %v3076, %v3096
        %v3108 = vmul.f32 %v3074, %v3100
        %v3109 = vmul.f32 %v3081, %v3088
        %v3110 = vmul.f32 %v3079, %v3092
        %v3111 = vmul.f32 %v3077, %v3096
        %v3112 = vmul.f32 %v3075, %v3100
        %v3113 = vpack.c.bf16 %v3109, %v3105
        %v3114 = vpack.c.bf16 %v3110, %v3106
        %v3115 = vpack.c.bf16 %v3111, %v3107
        %v3116 = vpack.c.bf16 %v3112, %v3108
        %3117 = vrot.lane.b32.xlu0 %v2748, 57
        %v3118 = vpop.permute.xlu0 %3117
        %3119 = vrot.lane.b32.xlu0 %v2752, 57
        %v3120 = vpop.permute.xlu0 %3119
        %3121 = vrot.lane.b32.xlu0 %v2749, 57
        %v3122 = vpop.permute.xlu0 %3121
        %3123 = vrot.lane.b32.xlu0 %v2753, 57
        %v3124 = vpop.permute.xlu0 %3123
        %3125 = vrot.lane.b32.xlu0 %v2750, 57
        %v3126 = vpop.permute.xlu0 %3125
        %3127 = vrot.lane.b32.xlu0 %v2754, 57
        %v3128 = vpop.permute.xlu0 %3127
        %3129 = vrot.lane.b32.xlu0 %v2751, 57
        %v3130 = vpop.permute.xlu0 %3129
        %3131 = vrot.lane.b32.xlu0 %v2755, 57
        %v3132 = vpop.permute.xlu0 %3131
        %vm3133 = vcmp.lt.s32.totalorder %v2773, 57
        %v3134 = vsel %vm3133, %v3126, %v3130
        %v3135 = vsel %vm3133, %v3128, %v3132
        %v3136 = vsel %vm3133, %v3122, %v3126
        %v3137 = vsel %vm3133, %v3124, %v3128
        %v3138 = vsel %vm3133, %v3118, %v3122
        %v3139 = vsel %vm3133, %v3120, %v3124
        %v3140 = vsel %vm3133, %v3130, %v3118
        %v3141 = vsel %vm3133, %v3132, %v3120
        %s3142 = scalar_lea.vmem %s9, 24
        %v3143 = vld [vmem:[%s3142] sm:$0xf]
        %v3145 = vlaneseq
        %v3146 = vshrl.u32 %v3145, 7
        %v3147 = vsub.s32 0, %v3146
        %v3148 = vrot.slane %v3143, %v3147
        %v3149 = vlaneseq
        %v3150 = vshrl.u32 %v3149, 7
        %v3151 = vsub.s32 1, %v3150
        %v3152 = vrot.slane %v3143, %v3151
        %v3153 = vlaneseq
        %v3154 = vshrl.u32 %v3153, 7
        %v3155 = vsub.s32 2, %v3154
        %v3156 = vrot.slane %v3143, %v3155
        %v3157 = vlaneseq
        %v3158 = vshrl.u32 %v3157, 7
        %v3159 = vsub.s32 3, %v3158
        %v3160 = vrot.slane %v3143, %v3159
        %v3165 = vmul.f32 %v3140, %v3148
        %v3166 = vmul.f32 %v3138, %v3152
        %v3167 = vmul.f32 %v3136, %v3156
        %v3168 = vmul.f32 %v3134, %v3160
        %v3169 = vmul.f32 %v3141, %v3148
        %v3170 = vmul.f32 %v3139, %v3152
        %v3171 = vmul.f32 %v3137, %v3156
        %v3172 = vmul.f32 %v3135, %v3160
        %v3173 = vpack.c.bf16 %v3169, %v3165
        %v3174 = vpack.c.bf16 %v3170, %v3166
        %v3175 = vpack.c.bf16 %v3171, %v3167
        %v3176 = vpack.c.bf16 %v3172, %v3168
        %3177 = vrot.lane.b32.xlu0 %v2748, 56
        %v3178 = vpop.permute.xlu0 %3177
        %3179 = vrot.lane.b32.xlu0 %v2752, 56
        %v3180 = vpop.permute.xlu0 %3179
        %3181 = vrot.lane.b32.xlu0 %v2749, 56
        %v3182 = vpop.permute.xlu0 %3181
        %3183 = vrot.lane.b32.xlu0 %v2753, 56
        %v3184 = vpop.permute.xlu0 %3183
        %3185 = vrot.lane.b32.xlu0 %v2750, 56
        %v3186 = vpop.permute.xlu0 %3185
        %3187 = vrot.lane.b32.xlu0 %v2754, 56
        %v3188 = vpop.permute.xlu0 %3187
        %3189 = vrot.lane.b32.xlu0 %v2751, 56
        %v3190 = vpop.permute.xlu0 %3189
        %3191 = vrot.lane.b32.xlu0 %v2755, 56
        %v3192 = vpop.permute.xlu0 %3191
        %vm3193 = vcmp.lt.s32.totalorder %v2773, 56
        %v3194 = vsel %vm3193, %v3186, %v3190
        %v3195 = vsel %vm3193, %v3188, %v3192
        %v3196 = vsel %vm3193, %v3182, %v3186
        %v3197 = vsel %vm3193, %v3184, %v3188
        %v3198 = vsel %vm3193, %v3178, %v3182
        %v3199 = vsel %vm3193, %v3180, %v3184
        %v3200 = vsel %vm3193, %v3190, %v3178
        %v3201 = vsel %vm3193, %v3192, %v3180
        %s3202 = scalar_lea.vmem %s9, 28
        %v3203 = vld [vmem:[%s3202] sm:$0xf]
        %v3205 = vlaneseq
        %v3206 = vshrl.u32 %v3205, 7
        %v3207 = vsub.s32 0, %v3206
        %v3208 = vrot.slane %v3203, %v3207
        %v3209 = vlaneseq
        %v3210 = vshrl.u32 %v3209, 7
        %v3211 = vsub.s32 1, %v3210
        %v3212 = vrot.slane %v3203, %v3211
        %v3213 = vlaneseq
        %v3214 = vshrl.u32 %v3213, 7
        %v3215 = vsub.s32 2, %v3214
        %v3216 = vrot.slane %v3203, %v3215
        %v3217 = vlaneseq
        %v3218 = vshrl.u32 %v3217, 7
        %v3219 = vsub.s32 3, %v3218
        %v3220 = vrot.slane %v3203, %v3219
        %v3225 = vmul.f32 %v3200, %v3208
        %v3226 = vmul.f32 %v3198, %v3212
        %v3227 = vmul.f32 %v3196, %v3216
        %v3228 = vmul.f32 %v3194, %v3220
        %v3229 = vmul.f32 %v3201, %v3208
        %v3230 = vmul.f32 %v3199, %v3212
        %v3231 = vmul.f32 %v3197, %v3216
        %v3232 = vmul.f32 %v3195, %v3220
        %v3233 = vpack.c.bf16 %v3229, %v3225
        %v3234 = vpack.c.bf16 %v3230, %v3226
        %v3235 = vpack.c.bf16 %v3231, %v3227
        %v3236 = vpack.c.bf16 %v3232, %v3228
        %3237 = vrot.lane.b32.xlu0 %v2748, 55
        %v3238 = vpop.permute.xlu0 %3237
        %3239 = vrot.lane.b32.xlu0 %v2752, 55
        %v3240 = vpop.permute.xlu0 %3239
        %3241 = vrot.lane.b32.xlu0 %v2749, 55
        %v3242 = vpop.permute.xlu0 %3241
        %3243 = vrot.lane.b32.xlu0 %v2753, 55
        %v3244 = vpop.permute.xlu0 %3243
        %3245 = vrot.lane.b32.xlu0 %v2750, 55
        %v3246 = vpop.permute.xlu0 %3245
        %3247 = vrot.lane.b32.xlu0 %v2754, 55
        %v3248 = vpop.permute.xlu0 %3247
        %3249 = vrot.lane.b32.xlu0 %v2751, 55
        %v3250 = vpop.permute.xlu0 %3249
        %3251 = vrot.lane.b32.xlu0 %v2755, 55
        %v3252 = vpop.permute.xlu0 %3251
        %vm3253 = vcmp.lt.s32.totalorder %v2773, 55
        %v3254 = vsel %vm3253, %v3246, %v3250
        %v3255 = vsel %vm3253, %v3248, %v3252
        %v3256 = vsel %vm3253, %v3242, %v3246
        %v3257 = vsel %vm3253, %v3244, %v3248
        %v3258 = vsel %vm3253, %v3238, %v3242
        %v3259 = vsel %vm3253, %v3240, %v3244
        %v3260 = vsel %vm3253, %v3250, %v3238
        %v3261 = vsel %vm3253, %v3252, %v3240
        %s3262 = scalar_lea.vmem %s9, 32
        %v3263 = vld [vmem:[%s3262] sm:$0xf]
        %v3265 = vlaneseq
        %v3266 = vshrl.u32 %v3265, 7
        %v3267 = vsub.s32 0, %v3266
        %v3268 = vrot.slane %v3263, %v3267
        %v3269 = vlaneseq
        %v3270 = vshrl.u32 %v3269, 7
        %v3271 = vsub.s32 1, %v3270
        %v3272 = vrot.slane %v3263, %v3271
        %v3273 = vlaneseq
        %v3274 = vshrl.u32 %v3273, 7
        %v3275 = vsub.s32 2, %v3274
        %v3276 = vrot.slane %v3263, %v3275
        %v3277 = vlaneseq
        %v3278 = vshrl.u32 %v3277, 7
        %v3279 = vsub.s32 3, %v3278
        %v3280 = vrot.slane %v3263, %v3279
        %v3285 = vmul.f32 %v3260, %v3268
        %v3286 = vmul.f32 %v3258, %v3272
        %v3287 = vmul.f32 %v3256, %v3276
        %v3288 = vmul.f32 %v3254, %v3280
        %v3289 = vmul.f32 %v3261, %v3268
        %v3290 = vmul.f32 %v3259, %v3272
        %v3291 = vmul.f32 %v3257, %v3276
        %v3292 = vmul.f32 %v3255, %v3280
        %v3293 = vpack.c.bf16 %v3289, %v3285
        %v3294 = vpack.c.bf16 %v3290, %v3286
        %v3295 = vpack.c.bf16 %v3291, %v3287
        %v3296 = vpack.c.bf16 %v3292, %v3288
        %3297 = vrot.lane.b32.xlu0 %v2748, 9
        %v3298 = vpop.permute.xlu0 %3297
        %3299 = vrot.lane.b32.xlu0 %v2752, 9
        %v3300 = vpop.permute.xlu0 %3299
        %3301 = vrot.lane.b32.xlu0 %v2749, 9
        %v3302 = vpop.permute.xlu0 %3301
        %3303 = vrot.lane.b32.xlu0 %v2753, 9
        %v3304 = vpop.permute.xlu0 %3303
        %3305 = vrot.lane.b32.xlu0 %v2750, 9
        %v3306 = vpop.permute.xlu0 %3305
        %3307 = vrot.lane.b32.xlu0 %v2754, 9
        %v3308 = vpop.permute.xlu0 %3307
        %3309 = vrot.lane.b32.xlu0 %v2751, 9
        %v3310 = vpop.permute.xlu0 %3309
        %3311 = vrot.lane.b32.xlu0 %v2755, 9
        %v3312 = vpop.permute.xlu0 %3311
        %vm3313 = vcmp.lt.s32.totalorder %v2773, 9
        %v3314 = vsel %vm3313, %v3306, %v3310
        %v3315 = vsel %vm3313, %v3308, %v3312
        %v3316 = vsel %vm3313, %v3302, %v3306
        %v3317 = vsel %vm3313, %v3304, %v3308
        %v3318 = vsel %vm3313, %v3298, %v3302
        %v3319 = vsel %vm3313, %v3300, %v3304
        %v3320 = vsel %vm3313, %v3310, %v3298
        %v3321 = vsel %vm3313, %v3312, %v3300
        %s3322 = scalar_lea.vmem %s9, 36
        %v3323 = vld [vmem:[%s3322] sm:$0xf]
        %v3325 = vlaneseq
        %v3326 = vshrl.u32 %v3325, 7
        %v3327 = vsub.s32 0, %v3326
        %v3328 = vrot.slane %v3323, %v3327
        %v3329 = vlaneseq
        %v3330 = vshrl.u32 %v3329, 7
        %v3331 = vsub.s32 1, %v3330
        %v3332 = vrot.slane %v3323, %v3331
        %v3333 = vlaneseq
        %v3334 = vshrl.u32 %v3333, 7
        %v3335 = vsub.s32 2, %v3334
        %v3336 = vrot.slane %v3323, %v3335
        %v3337 = vlaneseq
        %v3338 = vshrl.u32 %v3337, 7
        %v3339 = vsub.s32 3, %v3338
        %v3340 = vrot.slane %v3323, %v3339
        %v3345 = vmul.f32 %v3320, %v3328
        %v3346 = vmul.f32 %v3318, %v3332
        %v3347 = vmul.f32 %v3316, %v3336
        %v3348 = vmul.f32 %v3314, %v3340
        %v3349 = vmul.f32 %v3321, %v3328
        %v3350 = vmul.f32 %v3319, %v3332
        %v3351 = vmul.f32 %v3317, %v3336
        %v3352 = vmul.f32 %v3315, %v3340
        %v3353 = vpack.c.bf16 %v3349, %v3345
        %v3354 = vpack.c.bf16 %v3350, %v3346
        %v3355 = vpack.c.bf16 %v3351, %v3347
        %v3356 = vpack.c.bf16 %v3352, %v3348
        %3357 = vrot.lane.b32.xlu0 %v2748, 8
        %v3358 = vpop.permute.xlu0 %3357
        %3359 = vrot.lane.b32.xlu0 %v2752, 8
        %v3360 = vpop.permute.xlu0 %3359
        %3361 = vrot.lane.b32.xlu0 %v2749, 8
        %v3362 = vpop.permute.xlu0 %3361
        %3363 = vrot.lane.b32.xlu0 %v2753, 8
        %v3364 = vpop.permute.xlu0 %3363
        %3365 = vrot.lane.b32.xlu0 %v2750, 8
        %v3366 = vpop.permute.xlu0 %3365
        %3367 = vrot.lane.b32.xlu0 %v2754, 8
        %v3368 = vpop.permute.xlu0 %3367
        %3369 = vrot.lane.b32.xlu0 %v2751, 8
        %v3370 = vpop.permute.xlu0 %3369
        %3371 = vrot.lane.b32.xlu0 %v2755, 8
        %v3372 = vpop.permute.xlu0 %3371
        %vm3373 = vcmp.lt.s32.totalorder %v2773, 8
        %v3374 = vsel %vm3373, %v3366, %v3370
        %v3375 = vsel %vm3373, %v3368, %v3372
        %v3376 = vsel %vm3373, %v3362, %v3366
        %v3377 = vsel %vm3373, %v3364, %v3368
        %v3378 = vsel %vm3373, %v3358, %v3362
        %v3379 = vsel %vm3373, %v3360, %v3364
        %v3380 = vsel %vm3373, %v3370, %v3358
        %v3381 = vsel %vm3373, %v3372, %v3360
        %s3382 = scalar_lea.vmem %s9, 40
        %v3383 = vld [vmem:[%s3382] sm:$0xf]
        %v3385 = vlaneseq
        %v3386 = vshrl.u32 %v3385, 7
        %v3387 = vsub.s32 0, %v3386
        %v3388 = vrot.slane %v3383, %v3387
        %v3389 = vlaneseq
        %v3390 = vshrl.u32 %v3389, 7
        %v3391 = vsub.s32 1, %v3390
        %v3392 = vrot.slane %v3383, %v3391
        %v3393 = vlaneseq
        %v3394 = vshrl.u32 %v3393, 7
        %v3395 = vsub.s32 2, %v3394
        %v3396 = vrot.slane %v3383, %v3395
        %v3397 = vlaneseq
        %v3398 = vshrl.u32 %v3397, 7
        %v3399 = vsub.s32 3, %v3398
        %v3400 = vrot.slane %v3383, %v3399
        %v3405 = vmul.f32 %v3380, %v3388
        %v3406 = vmul.f32 %v3378, %v3392
        %v3407 = vmul.f32 %v3376, %v3396
        %v3408 = vmul.f32 %v3374, %v3400
        %v3409 = vmul.f32 %v3381, %v3388
        %v3410 = vmul.f32 %v3379, %v3392
        %v3411 = vmul.f32 %v3377, %v3396
        %v3412 = vmul.f32 %v3375, %v3400
        %v3413 = vpack.c.bf16 %v3409, %v3405
        %v3414 = vpack.c.bf16 %v3410, %v3406
        %v3415 = vpack.c.bf16 %v3411, %v3407
        %v3416 = vpack.c.bf16 %v3412, %v3408
        %3417 = vrot.lane.b32.xlu0 %v2748, 7
        %v3418 = vpop.permute.xlu0 %3417
        %3419 = vrot.lane.b32.xlu0 %v2752, 7
        %v3420 = vpop.permute.xlu0 %3419
        %3421 = vrot.lane.b32.xlu0 %v2749, 7
        %v3422 = vpop.permute.xlu0 %3421
        %3423 = vrot.lane.b32.xlu0 %v2753, 7
        %v3424 = vpop.permute.xlu0 %3423
        %3425 = vrot.lane.b32.xlu0 %v2750, 7
        %v3426 = vpop.permute.xlu0 %3425
        %3427 = vrot.lane.b32.xlu0 %v2754, 7
        %v3428 = vpop.permute.xlu0 %3427
        %3429 = vrot.lane.b32.xlu0 %v2751, 7
        %v3430 = vpop.permute.xlu0 %3429
        %3431 = vrot.lane.b32.xlu0 %v2755, 7
        %v3432 = vpop.permute.xlu0 %3431
        %vm3433 = vcmp.lt.s32.totalorder %v2773, 7
        %v3434 = vsel %vm3433, %v3426, %v3430
        %v3435 = vsel %vm3433, %v3428, %v3432
        %v3436 = vsel %vm3433, %v3422, %v3426
        %v3437 = vsel %vm3433, %v3424, %v3428
        %v3438 = vsel %vm3433, %v3418, %v3422
        %v3439 = vsel %vm3433, %v3420, %v3424
        %v3440 = vsel %vm3433, %v3430, %v3418
        %v3441 = vsel %vm3433, %v3432, %v3420
        %s3442 = scalar_lea.vmem %s9, 44
        %v3443 = vld [vmem:[%s3442] sm:$0xf]
        %v3445 = vlaneseq
        %v3446 = vshrl.u32 %v3445, 7
        %v3447 = vsub.s32 0, %v3446
        %v3448 = vrot.slane %v3443, %v3447
        %v3449 = vlaneseq
        %v3450 = vshrl.u32 %v3449, 7
        %v3451 = vsub.s32 1, %v3450
        %v3452 = vrot.slane %v3443, %v3451
        %v3453 = vlaneseq
        %v3454 = vshrl.u32 %v3453, 7
        %v3455 = vsub.s32 2, %v3454
        %v3456 = vrot.slane %v3443, %v3455
        %v3457 = vlaneseq
        %v3458 = vshrl.u32 %v3457, 7
        %v3459 = vsub.s32 3, %v3458
        %v3460 = vrot.slane %v3443, %v3459
        %v3465 = vmul.f32 %v3440, %v3448
        %v3466 = vmul.f32 %v3438, %v3452
        %v3467 = vmul.f32 %v3436, %v3456
        %v3468 = vmul.f32 %v3434, %v3460
        %v3469 = vmul.f32 %v3441, %v3448
        %v3470 = vmul.f32 %v3439, %v3452
        %v3471 = vmul.f32 %v3437, %v3456
        %v3472 = vmul.f32 %v3435, %v3460
        %v3473 = vpack.c.bf16 %v3469, %v3465
        %v3474 = vpack.c.bf16 %v3470, %v3466
        %v3475 = vpack.c.bf16 %v3471, %v3467
        %v3476 = vpack.c.bf16 %v3472, %v3468
        %3477 = vrot.lane.b32.xlu0 %v2748, 1
        %v3478 = vpop.permute.xlu0 %3477
        %3479 = vrot.lane.b32.xlu0 %v2752, 1
        %v3480 = vpop.permute.xlu0 %3479
        %3481 = vrot.lane.b32.xlu0 %v2749, 1
        %v3482 = vpop.permute.xlu0 %3481
        %3483 = vrot.lane.b32.xlu0 %v2753, 1
        %v3484 = vpop.permute.xlu0 %3483
        %3485 = vrot.lane.b32.xlu0 %v2750, 1
        %v3486 = vpop.permute.xlu0 %3485
        %3487 = vrot.lane.b32.xlu0 %v2754, 1
        %v3488 = vpop.permute.xlu0 %3487
        %3489 = vrot.lane.b32.xlu0 %v2751, 1
        %v3490 = vpop.permute.xlu0 %3489
        %3491 = vrot.lane.b32.xlu0 %v2755, 1
        %v3492 = vpop.permute.xlu0 %3491
        %vm3493 = vcmp.lt.s32.totalorder %v2773, 1
        %v3494 = vsel %vm3493, %v3486, %v3490
        %v3495 = vsel %vm3493, %v3488, %v3492
        %v3496 = vsel %vm3493, %v3482, %v3486
        %v3497 = vsel %vm3493, %v3484, %v3488
        %v3498 = vsel %vm3493, %v3478, %v3482
        %v3499 = vsel %vm3493, %v3480, %v3484
        %v3500 = vsel %vm3493, %v3490, %v3478
        %v3501 = vsel %vm3493, %v3492, %v3480
        %s3502 = scalar_lea.vmem %s9, 48
        %v3503 = vld [vmem:[%s3502] sm:$0xf]
        %v3505 = vlaneseq
        %v3506 = vshrl.u32 %v3505, 7
        %v3507 = vsub.s32 0, %v3506
        %v3508 = vrot.slane %v3503, %v3507
        %v3509 = vlaneseq
        %v3510 = vshrl.u32 %v3509, 7
        %v3511 = vsub.s32 1, %v3510
        %v3512 = vrot.slane %v3503, %v3511
        %v3513 = vlaneseq
        %v3514 = vshrl.u32 %v3513, 7
        %v3515 = vsub.s32 2, %v3514
        %v3516 = vrot.slane %v3503, %v3515
        %v3517 = vlaneseq
        %v3518 = vshrl.u32 %v3517, 7
        %v3519 = vsub.s32 3, %v3518
        %v3520 = vrot.slane %v3503, %v3519
        %v3525 = vmul.f32 %v3500, %v3508
        %v3526 = vmul.f32 %v3498, %v3512
        %v3527 = vmul.f32 %v3496, %v3516
        %v3528 = vmul.f32 %v3494, %v3520
        %v3529 = vmul.f32 %v3501, %v3508
        %v3530 = vmul.f32 %v3499, %v3512
        %v3531 = vmul.f32 %v3497, %v3516
        %v3532 = vmul.f32 %v3495, %v3520
        %v3533 = vpack.c.bf16 %v3529, %v3525
        %v3534 = vpack.c.bf16 %v3530, %v3526
        %v3535 = vpack.c.bf16 %v3531, %v3527
        %v3536 = vpack.c.bf16 %v3532, %v3528
        %s3537 = scalar_lea.vmem %s9, 52
        %v3538 = vld [vmem:[%s3537] sm:$0xf]
        %v3540 = vlaneseq
        %v3541 = vshrl.u32 %v3540, 7
        %v3542 = vsub.s32 0, %v3541
        %v3543 = vrot.slane %v3538, %v3542
        %v3544 = vlaneseq
        %v3545 = vshrl.u32 %v3544, 7
        %v3546 = vsub.s32 1, %v3545
        %v3547 = vrot.slane %v3538, %v3546
        %v3548 = vlaneseq
        %v3549 = vshrl.u32 %v3548, 7
        %v3550 = vsub.s32 2, %v3549
        %v3551 = vrot.slane %v3538, %v3550
        %v3552 = vlaneseq
        %v3553 = vshrl.u32 %v3552, 7
        %v3554 = vsub.s32 3, %v3553
        %v3555 = vrot.slane %v3538, %v3554
        %v3560 = vmul.f32 %v2748, %v3543
        %v3561 = vmul.f32 %v2749, %v3547
        %v3562 = vmul.f32 %v2750, %v3551
        %v3563 = vmul.f32 %v2751, %v3555
        %v3564 = vmul.f32 %v2752, %v3543
        %v3565 = vmul.f32 %v2753, %v3547
        %v3566 = vmul.f32 %v2754, %v3551
        %v3567 = vmul.f32 %v2755, %v3555
        %v3568 = vpack.c.bf16 %v3564, %v3560
        %v3569 = vpack.c.bf16 %v3565, %v3561
        %v3570 = vpack.c.bf16 %v3566, %v3562
        %v3571 = vpack.c.bf16 %v3567, %v3563
        %3572 = vrot.lane.b32.xlu0 %v2748, 127
        %v3573 = vpop.permute.xlu0 %3572
        %3574 = vrot.lane.b32.xlu0 %v2752, 127
        %v3575 = vpop.permute.xlu0 %3574
        %3576 = vrot.lane.b32.xlu0 %v2749, 127
        %v3577 = vpop.permute.xlu0 %3576
        %3578 = vrot.lane.b32.xlu0 %v2753, 127
        %v3579 = vpop.permute.xlu0 %3578
        %3580 = vrot.lane.b32.xlu0 %v2750, 127
        %v3581 = vpop.permute.xlu0 %3580
        %3582 = vrot.lane.b32.xlu0 %v2754, 127
        %v3583 = vpop.permute.xlu0 %3582
        %3584 = vrot.lane.b32.xlu0 %v2751, 127
        %v3585 = vpop.permute.xlu0 %3584
        %3586 = vrot.lane.b32.xlu0 %v2755, 127
        %v3587 = vpop.permute.xlu0 %3586
        %vm3588 = vcmp.lt.s32.totalorder %v2773, 127
        %v3589 = vsel %vm3588, %v3581, %v3585
        %v3590 = vsel %vm3588, %v3583, %v3587
        %v3591 = vsel %vm3588, %v3577, %v3581
        %v3592 = vsel %vm3588, %v3579, %v3583
        %v3593 = vsel %vm3588, %v3573, %v3577
        %v3594 = vsel %vm3588, %v3575, %v3579
        %v3595 = vsel %vm3588, %v3585, %v3573
        %v3596 = vsel %vm3588, %v3587, %v3575
        %s3597 = scalar_lea.vmem %s9, 56
        %v3598 = vld [vmem:[%s3597] sm:$0xf]
        %v3600 = vlaneseq
        %v3601 = vshrl.u32 %v3600, 7
        %v3602 = vsub.s32 0, %v3601
        %v3603 = vrot.slane %v3598, %v3602
        %v3604 = vlaneseq
        %v3605 = vshrl.u32 %v3604, 7
        %v3606 = vsub.s32 1, %v3605
        %v3607 = vrot.slane %v3598, %v3606
        %v3608 = vlaneseq
        %v3609 = vshrl.u32 %v3608, 7
        %v3610 = vsub.s32 2, %v3609
        %v3611 = vrot.slane %v3598, %v3610
        %v3612 = vlaneseq
        %v3613 = vshrl.u32 %v3612, 7
        %v3614 = vsub.s32 3, %v3613
        %v3615 = vrot.slane %v3598, %v3614
        %v3620 = vmul.f32 %v3593, %v3603
        %v3621 = vmul.f32 %v3591, %v3607
        %v3622 = vmul.f32 %v3589, %v3611
        %v3623 = vmul.f32 %v3595, %v3615
        %v3624 = vmul.f32 %v3594, %v3603
        %v3625 = vmul.f32 %v3592, %v3607
        %v3626 = vmul.f32 %v3590, %v3611
        %v3627 = vmul.f32 %v3596, %v3615
        %v3628 = vpack.c.bf16 %v3624, %v3620
        %v3629 = vpack.c.bf16 %v3625, %v3621
        %v3630 = vpack.c.bf16 %v3626, %v3622
        %v3631 = vpack.c.bf16 %v3627, %v3623
        %3632 = vrot.lane.b32.xlu0 %v2748, 121
        %v3633 = vpop.permute.xlu0 %3632
        %3634 = vrot.lane.b32.xlu0 %v2752, 121
        %v3635 = vpop.permute.xlu0 %3634
        %3636 = vrot.lane.b32.xlu0 %v2749, 121
        %v3637 = vpop.permute.xlu0 %3636
        %3638 = vrot.lane.b32.xlu0 %v2753, 121
        %v3639 = vpop.permute.xlu0 %3638
        %3640 = vrot.lane.b32.xlu0 %v2750, 121
        %v3641 = vpop.permute.xlu0 %3640
        %3642 = vrot.lane.b32.xlu0 %v2754, 121
        %v3643 = vpop.permute.xlu0 %3642
        %3644 = vrot.lane.b32.xlu0 %v2751, 121
        %v3645 = vpop.permute.xlu0 %3644
        %3646 = vrot.lane.b32.xlu0 %v2755, 121
        %v3647 = vpop.permute.xlu0 %3646
        %vm3648 = vcmp.lt.s32.totalorder %v2773, 121
        %v3649 = vsel %vm3648, %v3641, %v3645
        %v3650 = vsel %vm3648, %v3643, %v3647
        %v3651 = vsel %vm3648, %v3637, %v3641
        %v3652 = vsel %vm3648, %v3639, %v3643
        %v3653 = vsel %vm3648, %v3633, %v3637
        %v3654 = vsel %vm3648, %v3635, %v3639
        %v3655 = vsel %vm3648, %v3645, %v3633
        %v3656 = vsel %vm3648, %v3647, %v3635
        %s3657 = scalar_lea.vmem %s9, 60
        %v3658 = vld [vmem:[%s3657] sm:$0xf]
        %v3660 = vlaneseq
        %v3661 = vshrl.u32 %v3660, 7
        %v3662 = vsub.s32 0, %v3661
        %v3663 = vrot.slane %v3658, %v3662
        %v3664 = vlaneseq
        %v3665 = vshrl.u32 %v3664, 7
        %v3666 = vsub.s32 1, %v3665
        %v3667 = vrot.slane %v3658, %v3666
        %v3668 = vlaneseq
        %v3669 = vshrl.u32 %v3668, 7
        %v3670 = vsub.s32 2, %v3669
        %v3671 = vrot.slane %v3658, %v3670
        %v3672 = vlaneseq
        %v3673 = vshrl.u32 %v3672, 7
        %v3674 = vsub.s32 3, %v3673
        %v3675 = vrot.slane %v3658, %v3674
        %v3680 = vmul.f32 %v3653, %v3663
        %v3681 = vmul.f32 %v3651, %v3667
        %v3682 = vmul.f32 %v3649, %v3671
        %v3683 = vmul.f32 %v3655, %v3675
        %v3684 = vmul.f32 %v3654, %v3663
        %v3685 = vmul.f32 %v3652, %v3667
        %v3686 = vmul.f32 %v3650, %v3671
        %v3687 = vmul.f32 %v3656, %v3675
        %v3688 = vpack.c.bf16 %v3684, %v3680
        %v3689 = vpack.c.bf16 %v3685, %v3681
        %v3690 = vpack.c.bf16 %v3686, %v3682
        %v3691 = vpack.c.bf16 %v3687, %v3683
        %3692 = vrot.lane.b32.xlu0 %v2748, 120
        %v3693 = vpop.permute.xlu0 %3692
        %3694 = vrot.lane.b32.xlu0 %v2752, 120
        %v3695 = vpop.permute.xlu0 %3694
        %3696 = vrot.lane.b32.xlu0 %v2749, 120
        %v3697 = vpop.permute.xlu0 %3696
        %3698 = vrot.lane.b32.xlu0 %v2753, 120
        %v3699 = vpop.permute.xlu0 %3698
        %3700 = vrot.lane.b32.xlu0 %v2750, 120
        %v3701 = vpop.permute.xlu0 %3700
        %3702 = vrot.lane.b32.xlu0 %v2754, 120
        %v3703 = vpop.permute.xlu0 %3702
        %3704 = vrot.lane.b32.xlu0 %v2751, 120
        %v3705 = vpop.permute.xlu0 %3704
        %3706 = vrot.lane.b32.xlu0 %v2755, 120
        %v3707 = vpop.permute.xlu0 %3706
        %vm3708 = vcmp.lt.s32.totalorder %v2773, 120
        %v3709 = vsel %vm3708, %v3701, %v3705
        %v3710 = vsel %vm3708, %v3703, %v3707
        %v3711 = vsel %vm3708, %v3697, %v3701
        %v3712 = vsel %vm3708, %v3699, %v3703
        %v3713 = vsel %vm3708, %v3693, %v3697
        %v3714 = vsel %vm3708, %v3695, %v3699
        %v3715 = vsel %vm3708, %v3705, %v3693
        %v3716 = vsel %vm3708, %v3707, %v3695
        %s3717 = scalar_lea.vmem %s9, 64
        %v3718 = vld [vmem:[%s3717] sm:$0xf]
        %v3720 = vlaneseq
        %v3721 = vshrl.u32 %v3720, 7
        %v3722 = vsub.s32 0, %v3721
        %v3723 = vrot.slane %v3718, %v3722
        %v3724 = vlaneseq
        %v3725 = vshrl.u32 %v3724, 7
        %v3726 = vsub.s32 1, %v3725
        %v3727 = vrot.slane %v3718, %v3726
        %v3728 = vlaneseq
        %v3729 = vshrl.u32 %v3728, 7
        %v3730 = vsub.s32 2, %v3729
        %v3731 = vrot.slane %v3718, %v3730
        %v3732 = vlaneseq
        %v3733 = vshrl.u32 %v3732, 7
        %v3734 = vsub.s32 3, %v3733
        %v3735 = vrot.slane %v3718, %v3734
        %v3740 = vmul.f32 %v3713, %v3723
        %v3741 = vmul.f32 %v3711, %v3727
        %v3742 = vmul.f32 %v3709, %v3731
        %v3743 = vmul.f32 %v3715, %v3735
        %v3744 = vmul.f32 %v3714, %v3723
        %v3745 = vmul.f32 %v3712, %v3727
        %v3746 = vmul.f32 %v3710, %v3731
        %v3747 = vmul.f32 %v3716, %v3735
        %v3748 = vpack.c.bf16 %v3744, %v3740
        %v3749 = vpack.c.bf16 %v3745, %v3741
        %v3750 = vpack.c.bf16 %v3746, %v3742
        %v3751 = vpack.c.bf16 %v3747, %v3743
        %3752 = vrot.lane.b32.xlu0 %v2748, 119
        %v3753 = vpop.permute.xlu0 %3752
        %3754 = vrot.lane.b32.xlu0 %v2752, 119
        %v3755 = vpop.permute.xlu0 %3754
        %3756 = vrot.lane.b32.xlu0 %v2749, 119
        %v3757 = vpop.permute.xlu0 %3756
        %3758 = vrot.lane.b32.xlu0 %v2753, 119
        %v3759 = vpop.permute.xlu0 %3758
        %3760 = vrot.lane.b32.xlu0 %v2750, 119
        %v3761 = vpop.permute.xlu0 %3760
        %3762 = vrot.lane.b32.xlu0 %v2754, 119
        %v3763 = vpop.permute.xlu0 %3762
        %3764 = vrot.lane.b32.xlu0 %v2751, 119
        %v3765 = vpop.permute.xlu0 %3764
        %3766 = vrot.lane.b32.xlu0 %v2755, 119
        %v3767 = vpop.permute.xlu0 %3766
        %vm3768 = vcmp.lt.s32.totalorder %v2773, 119
        %v3769 = vsel %vm3768, %v3761, %v3765
        %v3770 = vsel %vm3768, %v3763, %v3767
        %v3771 = vsel %vm3768, %v3757, %v3761
        %v3772 = vsel %vm3768, %v3759, %v3763
        %v3773 = vsel %vm3768, %v3753, %v3757
        %v3774 = vsel %vm3768, %v3755, %v3759
        %v3775 = vsel %vm3768, %v3765, %v3753
        %v3776 = vsel %vm3768, %v3767, %v3755
        %s3777 = scalar_lea.vmem %s9, 68
        %v3778 = vld [vmem:[%s3777] sm:$0xf]
        %v3780 = vlaneseq
        %v3781 = vshrl.u32 %v3780, 7
        %v3782 = vsub.s32 0, %v3781
        %v3783 = vrot.slane %v3778, %v3782
        %v3784 = vlaneseq
        %v3785 = vshrl.u32 %v3784, 7
        %v3786 = vsub.s32 1, %v3785
        %v3787 = vrot.slane %v3778, %v3786
        %v3788 = vlaneseq
        %v3789 = vshrl.u32 %v3788, 7
        %v3790 = vsub.s32 2, %v3789
        %v3791 = vrot.slane %v3778, %v3790
        %v3792 = vlaneseq
        %v3793 = vshrl.u32 %v3792, 7
        %v3794 = vsub.s32 3, %v3793
        %v3795 = vrot.slane %v3778, %v3794
        %v3800 = vmul.f32 %v3773, %v3783
        %v3801 = vmul.f32 %v3771, %v3787
        %v3802 = vmul.f32 %v3769, %v3791
        %v3803 = vmul.f32 %v3775, %v3795
        %v3804 = vmul.f32 %v3774, %v3783
        %v3805 = vmul.f32 %v3772, %v3787
        %v3806 = vmul.f32 %v3770, %v3791
        %v3807 = vmul.f32 %v3776, %v3795
        %v3808 = vpack.c.bf16 %v3804, %v3800
        %v3809 = vpack.c.bf16 %v3805, %v3801
        %v3810 = vpack.c.bf16 %v3806, %v3802
        %v3811 = vpack.c.bf16 %v3807, %v3803
        %s3812 = scalar_lea.vmem %s9, 72
        %v3813 = vld [vmem:[%s3812] sm:$0xf]
        %v3815 = vlaneseq
        %v3816 = vshrl.u32 %v3815, 7
        %v3817 = vsub.s32 0, %v3816
        %v3818 = vrot.slane %v3813, %v3817
        %v3819 = vlaneseq
        %v3820 = vshrl.u32 %v3819, 7
        %v3821 = vsub.s32 1, %v3820
        %v3822 = vrot.slane %v3813, %v3821
        %v3823 = vlaneseq
        %v3824 = vshrl.u32 %v3823, 7
        %v3825 = vsub.s32 2, %v3824
        %v3826 = vrot.slane %v3813, %v3825
        %v3827 = vlaneseq
        %v3828 = vshrl.u32 %v3827, 7
        %v3829 = vsub.s32 3, %v3828
        %v3830 = vrot.slane %v3813, %v3829
        %v3835 = vmul.f32 %v2779, %v3818
        %v3836 = vmul.f32 %v2777, %v3822
        %v3837 = vmul.f32 %v2775, %v3826
        %v3838 = vmul.f32 %v2781, %v3830
        %v3839 = vmul.f32 %v2780, %v3818
        %v3840 = vmul.f32 %v2778, %v3822
        %v3841 = vmul.f32 %v2776, %v3826
        %v3842 = vmul.f32 %v2782, %v3830
        %v3843 = vpack.c.bf16 %v3839, %v3835
        %v3844 = vpack.c.bf16 %v3840, %v3836
        %v3845 = vpack.c.bf16 %v3841, %v3837
        %v3846 = vpack.c.bf16 %v3842, %v3838
        %s3847 = scalar_lea.vmem %s9, 76
        %v3848 = vld [vmem:[%s3847] sm:$0xf]
        %v3850 = vlaneseq
        %v3851 = vshrl.u32 %v3850, 7
        %v3852 = vsub.s32 0, %v3851
        %v3853 = vrot.slane %v3848, %v3852
        %v3854 = vlaneseq
        %v3855 = vshrl.u32 %v3854, 7
        %v3856 = vsub.s32 1, %v3855
        %v3857 = vrot.slane %v3848, %v3856
        %v3858 = vlaneseq
        %v3859 = vshrl.u32 %v3858, 7
        %v3860 = vsub.s32 2, %v3859
        %v3861 = vrot.slane %v3848, %v3860
        %v3862 = vlaneseq
        %v3863 = vshrl.u32 %v3862, 7
        %v3864 = vsub.s32 3, %v3863
        %v3865 = vrot.slane %v3848, %v3864
        %v3870 = vmul.f32 %v2838, %v3853
        %v3871 = vmul.f32 %v2836, %v3857
        %v3872 = vmul.f32 %v2834, %v3861
        %v3873 = vmul.f32 %v2840, %v3865
        %v3874 = vmul.f32 %v2839, %v3853
        %v3875 = vmul.f32 %v2837, %v3857
        %v3876 = vmul.f32 %v2835, %v3861
        %v3877 = vmul.f32 %v2841, %v3865
        %v3878 = vpack.c.bf16 %v3874, %v3870
        %v3879 = vpack.c.bf16 %v3875, %v3871
        %v3880 = vpack.c.bf16 %v3876, %v3872
        %v3881 = vpack.c.bf16 %v3877, %v3873
        %s3882 = scalar_lea.vmem %s9, 80
        %v3883 = vld [vmem:[%s3882] sm:$0xf]
        %v3885 = vlaneseq
        %v3886 = vshrl.u32 %v3885, 7
        %v3887 = vsub.s32 0, %v3886
        %v3888 = vrot.slane %v3883, %v3887
        %v3889 = vlaneseq
        %v3890 = vshrl.u32 %v3889, 7
        %v3891 = vsub.s32 1, %v3890
        %v3892 = vrot.slane %v3883, %v3891
        %v3893 = vlaneseq
        %v3894 = vshrl.u32 %v3893, 7
        %v3895 = vsub.s32 2, %v3894
        %v3896 = vrot.slane %v3883, %v3895
        %v3897 = vlaneseq
        %v3898 = vshrl.u32 %v3897, 7
        %v3899 = vsub.s32 3, %v3898
        %v3900 = vrot.slane %v3883, %v3899
        %v3905 = vmul.f32 %v2898, %v3888
        %v3906 = vmul.f32 %v2896, %v3892
        %v3907 = vmul.f32 %v2894, %v3896
        %v3908 = vmul.f32 %v2900, %v3900
        %v3909 = vmul.f32 %v2899, %v3888
        %v3910 = vmul.f32 %v2897, %v3892
        %v3911 = vmul.f32 %v2895, %v3896
        %v3912 = vmul.f32 %v2901, %v3900
        %v3913 = vpack.c.bf16 %v3909, %v3905
        %v3914 = vpack.c.bf16 %v3910, %v3906
        %v3915 = vpack.c.bf16 %v3911, %v3907
        %v3916 = vpack.c.bf16 %v3912, %v3908
        %s3917 = scalar_lea.vmem %s9, 84
        %v3918 = vld [vmem:[%s3917] sm:$0xf]
        %v3920 = vlaneseq
        %v3921 = vshrl.u32 %v3920, 7
        %v3922 = vsub.s32 0, %v3921
        %v3923 = vrot.slane %v3918, %v3922
        %v3924 = vlaneseq
        %v3925 = vshrl.u32 %v3924, 7
        %v3926 = vsub.s32 1, %v3925
        %v3927 = vrot.slane %v3918, %v3926
        %v3928 = vlaneseq
        %v3929 = vshrl.u32 %v3928, 7
        %v3930 = vsub.s32 2, %v3929
        %v3931 = vrot.slane %v3918, %v3930
        %v3932 = vlaneseq
        %v3933 = vshrl.u32 %v3932, 7
        %v3934 = vsub.s32 3, %v3933
        %v3935 = vrot.slane %v3918, %v3934
        %v3940 = vmul.f32 %v2958, %v3923
        %v3941 = vmul.f32 %v2956, %v3927
        %v3942 = vmul.f32 %v2954, %v3931
        %v3943 = vmul.f32 %v2960, %v3935
        %v3944 = vmul.f32 %v2959, %v3923
        %v3945 = vmul.f32 %v2957, %v3927
        %v3946 = vmul.f32 %v2955, %v3931
        %v3947 = vmul.f32 %v2961, %v3935
        %v3948 = vpack.c.bf16 %v3944, %v3940
        %v3949 = vpack.c.bf16 %v3945, %v3941
        %v3950 = vpack.c.bf16 %v3946, %v3942
        %v3951 = vpack.c.bf16 %v3947, %v3943
        %s3952 = scalar_lea.vmem %s9, 88
        %v3953 = vld [vmem:[%s3952] sm:$0xf]
        %v3955 = vlaneseq
        %v3956 = vshrl.u32 %v3955, 7
        %v3957 = vsub.s32 0, %v3956
        %v3958 = vrot.slane %v3953, %v3957
        %v3959 = vlaneseq
        %v3960 = vshrl.u32 %v3959, 7
        %v3961 = vsub.s32 1, %v3960
        %v3962 = vrot.slane %v3953, %v3961
        %v3963 = vlaneseq
        %v3964 = vshrl.u32 %v3963, 7
        %v3965 = vsub.s32 2, %v3964
        %v3966 = vrot.slane %v3953, %v3965
        %v3967 = vlaneseq
        %v3968 = vshrl.u32 %v3967, 7
        %v3969 = vsub.s32 3, %v3968
        %v3970 = vrot.slane %v3953, %v3969
        %v3975 = vmul.f32 %v3018, %v3958
        %v3976 = vmul.f32 %v3016, %v3962
        %v3977 = vmul.f32 %v3014, %v3966
        %v3978 = vmul.f32 %v3020, %v3970
        %v3979 = vmul.f32 %v3019, %v3958
        %v3980 = vmul.f32 %v3017, %v3962
        %v3981 = vmul.f32 %v3015, %v3966
        %v3982 = vmul.f32 %v3021, %v3970
        %v3983 = vpack.c.bf16 %v3979, %v3975
        %v3984 = vpack.c.bf16 %v3980, %v3976
        %v3985 = vpack.c.bf16 %v3981, %v3977
        %v3986 = vpack.c.bf16 %v3982, %v3978
        %s3987 = scalar_lea.vmem %s9, 92
        %v3988 = vld [vmem:[%s3987] sm:$0xf]
        %v3990 = vlaneseq
        %v3991 = vshrl.u32 %v3990, 7
        %v3992 = vsub.s32 0, %v3991
        %v3993 = vrot.slane %v3988, %v3992
        %v3994 = vlaneseq
        %v3995 = vshrl.u32 %v3994, 7
        %v3996 = vsub.s32 1, %v3995
        %v3997 = vrot.slane %v3988, %v3996
        %v3998 = vlaneseq
        %v3999 = vshrl.u32 %v3998, 7
        %v4000 = vsub.s32 2, %v3999
        %v4001 = vrot.slane %v3988, %v4000
        %v4002 = vlaneseq
        %v4003 = vshrl.u32 %v4002, 7
        %v4004 = vsub.s32 3, %v4003
        %v4005 = vrot.slane %v3988, %v4004
        %v4010 = vmul.f32 %v3078, %v3993
        %v4011 = vmul.f32 %v3076, %v3997
        %v4012 = vmul.f32 %v3074, %v4001
        %v4013 = vmul.f32 %v3080, %v4005
        %v4014 = vmul.f32 %v3079, %v3993
        %v4015 = vmul.f32 %v3077, %v3997
        %v4016 = vmul.f32 %v3075, %v4001
        %v4017 = vmul.f32 %v3081, %v4005
        %v4018 = vpack.c.bf16 %v4014, %v4010
        %v4019 = vpack.c.bf16 %v4015, %v4011
        %v4020 = vpack.c.bf16 %v4016, %v4012
        %v4021 = vpack.c.bf16 %v4017, %v4013
        %s4022 = scalar_lea.vmem %s9, 96
        %v4023 = vld [vmem:[%s4022] sm:$0xf]
        %v4025 = vlaneseq
        %v4026 = vshrl.u32 %v4025, 7
        %v4027 = vsub.s32 0, %v4026
        %v4028 = vrot.slane %v4023, %v4027
        %v4029 = vlaneseq
        %v4030 = vshrl.u32 %v4029, 7
        %v4031 = vsub.s32 1, %v4030
        %v4032 = vrot.slane %v4023, %v4031
        %v4033 = vlaneseq
        %v4034 = vshrl.u32 %v4033, 7
        %v4035 = vsub.s32 2, %v4034
        %v4036 = vrot.slane %v4023, %v4035
        %v4037 = vlaneseq
        %v4038 = vshrl.u32 %v4037, 7
        %v4039 = vsub.s32 3, %v4038
        %v4040 = vrot.slane %v4023, %v4039
        %v4045 = vmul.f32 %v3138, %v4028
        %v4046 = vmul.f32 %v3136, %v4032
        %v4047 = vmul.f32 %v3134, %v4036
        %v4048 = vmul.f32 %v3140, %v4040
        %v4049 = vmul.f32 %v3139, %v4028
        %v4050 = vmul.f32 %v3137, %v4032
        %v4051 = vmul.f32 %v3135, %v4036
        %v4052 = vmul.f32 %v3141, %v4040
        %v4053 = vpack.c.bf16 %v4049, %v4045
        %v4054 = vpack.c.bf16 %v4050, %v4046
        %v4055 = vpack.c.bf16 %v4051, %v4047
        %v4056 = vpack.c.bf16 %v4052, %v4048
        %s4057 = scalar_lea.vmem %s9, 100
        %v4058 = vld [vmem:[%s4057] sm:$0xf]
        %v4060 = vlaneseq
        %v4061 = vshrl.u32 %v4060, 7
        %v4062 = vsub.s32 0, %v4061
        %v4063 = vrot.slane %v4058, %v4062
        %v4064 = vlaneseq
        %v4065 = vshrl.u32 %v4064, 7
        %v4066 = vsub.s32 1, %v4065
        %v4067 = vrot.slane %v4058, %v4066
        %v4068 = vlaneseq
        %v4069 = vshrl.u32 %v4068, 7
        %v4070 = vsub.s32 2, %v4069
        %v4071 = vrot.slane %v4058, %v4070
        %v4072 = vlaneseq
        %v4073 = vshrl.u32 %v4072, 7
        %v4074 = vsub.s32 3, %v4073
        %v4075 = vrot.slane %v4058, %v4074
        %v4080 = vmul.f32 %v3198, %v4063
        %v4081 = vmul.f32 %v3196, %v4067
        %v4082 = vmul.f32 %v3194, %v4071
        %v4083 = vmul.f32 %v3200, %v4075
        %v4084 = vmul.f32 %v3199, %v4063
        %v4085 = vmul.f32 %v3197, %v4067
        %v4086 = vmul.f32 %v3195, %v4071
        %v4087 = vmul.f32 %v3201, %v4075
        %v4088 = vpack.c.bf16 %v4084, %v4080
        %v4089 = vpack.c.bf16 %v4085, %v4081
        %v4090 = vpack.c.bf16 %v4086, %v4082
        %v4091 = vpack.c.bf16 %v4087, %v4083
        %s4092 = scalar_lea.vmem %s9, 104
        %v4093 = vld [vmem:[%s4092] sm:$0xf]
        %v4095 = vlaneseq
        %v4096 = vshrl.u32 %v4095, 7
        %v4097 = vsub.s32 0, %v4096
        %v4098 = vrot.slane %v4093, %v4097
        %v4099 = vlaneseq
        %v4100 = vshrl.u32 %v4099, 7
        %v4101 = vsub.s32 1, %v4100
        %v4102 = vrot.slane %v4093, %v4101
        %v4103 = vlaneseq
        %v4104 = vshrl.u32 %v4103, 7
        %v4105 = vsub.s32 2, %v4104
        %v4106 = vrot.slane %v4093, %v4105
        %v4107 = vlaneseq
        %v4108 = vshrl.u32 %v4107, 7
        %v4109 = vsub.s32 3, %v4108
        %v4110 = vrot.slane %v4093, %v4109
        %v4115 = vmul.f32 %v3258, %v4098
        %v4116 = vmul.f32 %v3256, %v4102
        %v4117 = vmul.f32 %v3254, %v4106
        %v4118 = vmul.f32 %v3260, %v4110
        %v4119 = vmul.f32 %v3259, %v4098
        %v4120 = vmul.f32 %v3257, %v4102
        %v4121 = vmul.f32 %v3255, %v4106
        %v4122 = vmul.f32 %v3261, %v4110
        %v4123 = vpack.c.bf16 %v4119, %v4115
        %v4124 = vpack.c.bf16 %v4120, %v4116
        %v4125 = vpack.c.bf16 %v4121, %v4117
        %v4126 = vpack.c.bf16 %v4122, %v4118
        %v4127 = vld [vmem:[#allocation7] sm:$0xff]
        %v4128 = vld [vmem:[#allocation7 + $0x8] sm:$0xff]
        %v4131 = vunpack.c.l.b16 %v4127
        %v4132 = vunpack.c.h.b16 %v4127
        %v4133 = vunpack.c.l.b16 %v4128
        %v4134 = vunpack.c.h.b16 %v4128
        %v4135 = vpack.c.b16 %v4131, %v4131
        %v4136 = vpack.c.b16 %v4132, %v4132
        %v4137 = vpack.c.b16 %v4133, %v4133
        %v4138 = vpack.c.b16 %v4134, %v4134
        %vm4142 = vcmask 392192
        %v4144 = vsel %vm4142, %v4138, 0
        %4146 = vmatprep.subr.bf16.mxu0 %v2814
        %4147 = vmatpush1.bf16.msra.mxu0 %v2813
        %4148 = vmatprep.subr.bf16.mxu0 %v2874
        %4149 = vmatpush1.bf16.msra.mxu0 %v2873
        %4150 = vmatprep.subr.bf16.mxu0 %v2934
        %4151 = vmatpush1.bf16.msra.mxu0 %v2933
        %4152 = vmatprep.subr.bf16.mxu0 %v2994
        %4153 = vmatpush1.bf16.msra.mxu0 %v2993
        %4154 = vmatprep.subr.bf16.mxu0 %v3054
        %4155 = vmatpush1.bf16.msra.mxu0 %v3053
        %4156 = vmatprep.subr.bf16.mxu0 %v3114
        %4157 = vmatpush1.bf16.msra.mxu0 %v3113
        %4158 = vmatprep.subr.bf16.mxu0 %v3174
        %4159 = vmatpush1.bf16.msra.mxu0 %v3173
        %4160 = vmatprep.subr.bf16.mxu0 %v3234
        %4161 = vmatpush1.bf16.msra.mxu0 %v3233
        %4162 = vmatprep.subr.bf16.mxu0 %v3294
        %4163 = vmatpush1.bf16.msra.mxu0 %v3293
        %4164 = vmatprep.subr.bf16.mxu0 %v3354
        %4165 = vmatpush1.bf16.msra.mxu0 %v3353
        %4166 = vmatprep.subr.bf16.mxu0 %v3414
        %4167 = vmatpush1.bf16.msra.mxu0 %v3413
        %4168 = vmatprep.subr.bf16.mxu0 %v3474
        %4169 = vmatpush1.bf16.msra.mxu0 %v3473
        %4170 = vmatprep.subr.bf16.mxu0 %v3534
        %4171 = vmatpush1.bf16.msra.mxu0 %v3533
        %4172 = vmatprep.subr.bf16.mxu0 %v3569
        %4173 = vmatpush1.bf16.msra.mxu0 %v3568
        %4174 = vmatprep.subr.bf16.mxu0 %v3629
        %4175 = vmatpush1.bf16.msra.mxu0 %v3628
        %4176 = vmatprep.subr.bf16.mxu0 %v3689
        %4177 = vmatpush1.bf16.msra.mxu0 %v3688
        %4178 = vmatprep.mubr.bf16.mxu0 %v4136
        %4179 = vmatmul.mubr.bf16.gmra.mrb[0].mxu0 %v4135
        %v4180 = vpop.f32.mrb[0].mxu0
        %v4181 = vadd.f32 0.0, %v4180
        %v4182 = vpop.f32.mrb[0].mxu0
        %v4183 = vadd.f32 0.0, %v4182
        %v4184 = vpop.f32.mrb[0].mxu0
        %v4185 = vpop.f32.mrb[0].mxu0
        %4186 = vdwg.mxu0
        %4187 = vmatprep.subr.bf16.mxu0 %v3749
        %4188 = vmatpush1.bf16.msra.mxu0 %v3748
        %4189 = vmatprep.subr.bf16.mxu0 %v3809
        %4190 = vmatpush1.bf16.msra.mxu0 %v3808
        %4191 = vmatprep.subr.bf16.mxu0 %v3844
        %4192 = vmatpush1.bf16.msra.mxu0 %v3843
        %4193 = vmatprep.subr.bf16.mxu0 %v3879
        %4194 = vmatpush1.bf16.msra.mxu0 %v3878
        %4195 = vmatprep.subr.bf16.mxu0 %v3914
        %4196 = vmatpush1.bf16.msra.mxu0 %v3913
        %4197 = vmatprep.subr.bf16.mxu0 %v3949
        %4198 = vmatpush1.bf16.msra.mxu0 %v3948
        %4199 = vmatprep.subr.bf16.mxu0 %v3984
        %4200 = vmatpush1.bf16.msra.mxu0 %v3983
        %4201 = vmatprep.subr.bf16.mxu0 %v4019
        %4202 = vmatpush1.bf16.msra.mxu0 %v4018
        %4203 = vmatprep.subr.bf16.mxu0 %v4054
        %4204 = vmatpush1.bf16.msra.mxu0 %v4053
        %4205 = vmatprep.subr.bf16.mxu0 %v4089
        %4206 = vmatpush1.bf16.msra.mxu0 %v4088
        %4207 = vmatprep.subr.bf16.mxu0 %v4124
        %4208 = vmatpush1.bf16.msra.mxu0 %v4123
        %4209 = vmatprep.subr.bf16.mxu0 0
        %4210 = vmatpush1.bf16.msra.mxu0 0
        %4211 = vmatprep.subr.bf16.mxu0 0
        %4212 = vmatpush1.bf16.msra.mxu0 0
        %4213 = vmatprep.subr.bf16.mxu0 0
        %4214 = vmatpush1.bf16.msra.mxu0 0
        %4215 = vmatprep.subr.bf16.mxu0 0
        %4216 = vmatpush1.bf16.msra.mxu0 0
        %4217 = vmatprep.subr.bf16.mxu0 0
        %4218 = vmatpush1.bf16.msra.mxu0 0
        %4219 = vmatprep.mubr.bf16.mxu0 %v4144
        %4220 = vmatmul.mubr.bf16.gmra.mrb[0].mxu0 %v4137
        %v4221 = vpop.f32.mrb[0].mxu0
        %v4222 = vadd.f32 %v4181, %v4221
        %v4223 = vpop.f32.mrb[0].mxu0
        %v4224 = vadd.f32 %v4183, %v4223
        %v4225 = vpop.f32.mrb[0].mxu0
        %v4226 = vpop.f32.mrb[0].mxu0
        %4227 = vdwg.mxu0
        %4228 = vmatprep.subr.bf16.mxu0 %v2816
        %4229 = vmatpush1.bf16.msra.mxu0 %v2815
        %4230 = vmatprep.subr.bf16.mxu0 %v2876
        %4231 = vmatpush1.bf16.msra.mxu0 %v2875
        %4232 = vmatprep.subr.bf16.mxu0 %v2936
        %4233 = vmatpush1.bf16.msra.mxu0 %v2935
        %4234 = vmatprep.subr.bf16.mxu0 %v2996
        %4235 = vmatpush1.bf16.msra.mxu0 %v2995
        %4236 = vmatprep.subr.bf16.mxu0 %v3056
        %4237 = vmatpush1.bf16.msra.mxu0 %v3055
        %4238 = vmatprep.subr.bf16.mxu0 %v3116
        %4239 = vmatpush1.bf16.msra.mxu0 %v3115
        %4240 = vmatprep.subr.bf16.mxu0 %v3176
        %4241 = vmatpush1.bf16.msra.mxu0 %v3175
        %4242 = vmatprep.subr.bf16.mxu0 %v3236
        %4243 = vmatpush1.bf16.msra.mxu0 %v3235
        %4244 = vmatprep.subr.bf16.mxu0 %v3296
        %4245 = vmatpush1.bf16.msra.mxu0 %v3295
        %4246 = vmatprep.subr.bf16.mxu0 %v3356
        %4247 = vmatpush1.bf16.msra.mxu0 %v3355
        %4248 = vmatprep.subr.bf16.mxu0 %v3416
        %4249 = vmatpush1.bf16.msra.mxu0 %v3415
        %4250 = vmatprep.subr.bf16.mxu0 %v3476
        %4251 = vmatpush1.bf16.msra.mxu0 %v3475
        %4252 = vmatprep.subr.bf16.mxu0 %v3536
        %4253 = vmatpush1.bf16.msra.mxu0 %v3535
        %4254 = vmatprep.subr.bf16.mxu0 %v3571
        %4255 = vmatpush1.bf16.msra.mxu0 %v3570
        %4256 = vmatprep.subr.bf16.mxu0 %v3631
        %4257 = vmatpush1.bf16.msra.mxu0 %v3630
        %4258 = vmatprep.subr.bf16.mxu0 %v3691
        %4259 = vmatpush1.bf16.msra.mxu0 %v3690
        %4260 = vmatprep.mubr.bf16.mxu0 %v4136
        %4261 = vmatmul.mubr.bf16.gmra.mrb[0].mxu0 %v4135
        %v4262 = vpop.f32.mrb[0].mxu0
        %v4263 = vadd.f32 0.0, %v4262
        %v4264 = vpop.f32.mrb[0].mxu0
        %v4265 = vadd.f32 0.0, %v4264
        %v4266 = vpop.f32.mrb[0].mxu0
        %v4267 = vpop.f32.mrb[0].mxu0
        %4268 = vdwg.mxu0
        %4269 = vmatprep.subr.bf16.mxu0 %v3751
        %4270 = vmatpush1.bf16.msra.mxu0 %v3750
        %4271 = vmatprep.subr.bf16.mxu0 %v3811
        %4272 = vmatpush1.bf16.msra.mxu0 %v3810
        %4273 = vmatprep.subr.bf16.mxu0 %v3846
        %4274 = vmatpush1.bf16.msra.mxu0 %v3845
        %4275 = vmatprep.subr.bf16.mxu0 %v3881
        %4276 = vmatpush1.bf16.msra.mxu0 %v3880
        %4277 = vmatprep.subr.bf16.mxu0 %v3916
        %4278 = vmatpush1.bf16.msra.mxu0 %v3915
        %4279 = vmatprep.subr.bf16.mxu0 %v3951
        %4280 = vmatpush1.bf16.msra.mxu0 %v3950
        %4281 = vmatprep.subr.bf16.mxu0 %v3986
        %4282 = vmatpush1.bf16.msra.mxu0 %v3985
        %4283 = vmatprep.subr.bf16.mxu0 %v4021
        %4284 = vmatpush1.bf16.msra.mxu0 %v4020
        %4285 = vmatprep.subr.bf16.mxu0 %v4056
        %4286 = vmatpush1.bf16.msra.mxu0 %v4055
        %4287 = vmatprep.subr.bf16.mxu0 %v4091
        %4288 = vmatpush1.bf16.msra.mxu0 %v4090
        %4289 = vmatprep.subr.bf16.mxu0 %v4126
        %4290 = vmatpush1.bf16.msra.mxu0 %v4125
        %4291 = vmatprep.subr.bf16.mxu0 0
        %4292 = vmatpush1.bf16.msra.mxu0 0
        %4293 = vmatprep.subr.bf16.mxu0 0
        %4294 = vmatpush1.bf16.msra.mxu0 0
        %4295 = vmatprep.subr.bf16.mxu0 0
        %4296 = vmatpush1.bf16.msra.mxu0 0
        %4297 = vmatprep.subr.bf16.mxu0 0
        %4298 = vmatpush1.bf16.msra.mxu0 0
        %4299 = vmatprep.subr.bf16.mxu0 0
        %4300 = vmatpush1.bf16.msra.mxu0 0
        %4301 = vmatprep.mubr.bf16.mxu0 %v4144
        %4302 = vmatmul.mubr.bf16.gmra.mrb[0].mxu0 %v4137
        %v4303 = vpop.f32.mrb[0].mxu0
        %v4304 = vadd.f32 %v4263, %v4303
        %v4305 = vpop.f32.mrb[0].mxu0
        %v4306 = vadd.f32 %v4265, %v4305
        %v4307 = vpop.f32.mrb[0].mxu0
        %v4308 = vpop.f32.mrb[0].mxu0
        %4309 = vdwg.mxu0
        %v4310 = vld [vmem:[#allocation8] sm:$0xff]
        %v4311 = vld [vmem:[%s11] sm:$0xff]
        %v4312 = vld [vmem:[%s12] sm:$0xff]
        %v4313 = vadd.f32 %v4222, %v4224
        %v4314 = vadd.f32 %v4313, %v4304
        %v4315 = vadd.f32 %v4314, %v4306
        %4316 = vadd.xlane.f32.xlu0 %v4315
        %v4317 = vpop.xlane.xlu0 %4316
        %v4319 = vsel %vm537, %v4310, 0
        %4321 = vmatprep.subr.mxu0 0.0
        %v4322 = vand.u32 %v4317, 4294901760
        %4323 = vmatpush1.msra.mxu0 %v4322
        %4324 = vmatprep.subr.mxu0 0.0
        %4325 = vmatpush1.msra.mxu0 0.0
        %4326 = vmatprep.subr.mxu0 0.0
        %4327 = vmatpush1.msra.mxu0 0.0
        %4328 = vmatprep.subr.mxu0 0.0
        %4329 = vmatpush1.msra.mxu0 0.0
        %4330 = vmatprep.subr.mxu0 0.0
        %4331 = vmatpush1.msra.mxu0 0.0
        %4332 = vmatprep.subr.mxu0 0.0
        %4333 = vmatpush1.msra.mxu0 0.0
        %4334 = vmatprep.subr.mxu0 0.0
        %4335 = vmatpush1.msra.mxu0 0.0
        %4336 = vmatprep.subr.mxu0 0.0
        %4337 = vmatpush1.msra.mxu0 0.0
        %4338 = vmatprep.subr.mxu0 0.0
        %4339 = vmatpush1.msra.mxu0 0.0
        %4340 = vmatprep.subr.mxu0 0.0
        %4341 = vmatpush1.msra.mxu0 0.0
        %4342 = vmatprep.subr.mxu0 0.0
        %4343 = vmatpush1.msra.mxu0 0.0
        %4344 = vmatprep.subr.mxu0 0.0
        %4345 = vmatpush1.msra.mxu0 0.0
        %4346 = vmatprep.subr.mxu0 0.0
        %4347 = vmatpush1.msra.mxu0 0.0
        %4348 = vmatprep.subr.mxu0 0.0
        %4349 = vmatpush1.msra.mxu0 0.0
        %4350 = vmatprep.subr.mxu0 0.0
        %4351 = vmatpush1.msra.mxu0 0.0
        %4352 = vmatprep.subr.mxu0 0.0
        %4353 = vmatpush1.msra.mxu0 0.0
        %4354 = vmatprep.subr.mxu0 0.0
        %4355 = vmatpush1.msra.mxu0 0.0
        %4356 = vmatprep.subr.mxu0 0.0
        %4357 = vmatpush1.msra.mxu0 0.0
        %4358 = vmatprep.subr.mxu0 0.0
        %4359 = vmatpush1.msra.mxu0 0.0
        %4360 = vmatprep.subr.mxu0 0.0
        %4361 = vmatpush1.msra.mxu0 0.0
        %4362 = vmatprep.subr.mxu0 0.0
        %4363 = vmatpush1.msra.mxu0 0.0
        %4364 = vmatprep.subr.mxu0 0.0
        %4365 = vmatpush1.msra.mxu0 0.0
        %4366 = vmatprep.subr.mxu0 0.0
        %4367 = vmatpush1.msra.mxu0 0.0
        %4368 = vmatprep.subr.mxu0 0.0
        %4369 = vmatpush1.msra.mxu0 0.0
        %4370 = vmatprep.subr.mxu0 0.0
        %4371 = vmatpush1.msra.mxu0 0.0
        %4372 = vmatprep.subr.mxu0 0.0
        %4373 = vmatpush1.msra.mxu0 0.0
        %4374 = vmatprep.subr.mxu0 0.0
        %4375 = vmatpush1.msra.mxu0 0.0
        %4376 = vmatprep.subr.mxu0 0.0
        %4377 = vmatpush1.msra.mxu0 0.0
        %4378 = vmatprep.subr.mxu0 0.0
        %4379 = vmatpush1.msra.mxu0 0.0
        %4380 = vmatprep.subr.mxu0 0.0
        %4381 = vmatpush1.msra.mxu0 0.0
        %4382 = vmatprep.subr.mxu0 0.0
        %4383 = vmatpush1.msra.mxu0 0.0
        %4384 = vmatprep.subr.mxu0 0.0
        %4385 = vmatpush1.msra.mxu0 0.0
        %4386 = vmatprep.mubr.f32.mxu0 0.0
        %v4387 = vand.u32 %v4319, 4294901760
        %v4388 = vsub.f32 %v4319, %v4387
        %v4389 = vand.u32 %v4388, 4294901760
        %v4390 = vsub.f32 %v4388, %v4389
        %v4391 = vand.u32 %v4390, 4294901760
        %4392 = vmatmul.mubr.f32.gmra.mrb[0].mxu0 %v4391
        %v4393 = vpop.f32.mrb[0].mxu0
        %v4394 = vadd.f32 0.0, %v4393
        %v4395 = vpop.f32.mrb[0].mxu0
        %4396 = vdwg.mxu0
        %4397 = vmatprep.subr.mxu0 0.0
        %v4398 = vand.u32 %v4317, 4294901760
        %v4399 = vsub.f32 %v4317, %v4398
        %v4400 = vand.u32 %v4399, 4294901760
        %v4401 = vsub.f32 %v4399, %v4400
        %v4402 = vand.u32 %v4401, 4294901760
        %4403 = vmatpush1.msra.mxu0 %v4402
        %4404 = vmatprep.subr.mxu0 0.0
        %4405 = vmatpush1.msra.mxu0 0.0
        %4406 = vmatprep.subr.mxu0 0.0
        %4407 = vmatpush1.msra.mxu0 0.0
        %4408 = vmatprep.subr.mxu0 0.0
        %4409 = vmatpush1.msra.mxu0 0.0
        %4410 = vmatprep.subr.mxu0 0.0
        %4411 = vmatpush1.msra.mxu0 0.0
        %4412 = vmatprep.subr.mxu0 0.0
        %4413 = vmatpush1.msra.mxu0 0.0
        %4414 = vmatprep.subr.mxu0 0.0
        %4415 = vmatpush1.msra.mxu0 0.0
        %4416 = vmatprep.subr.mxu0 0.0
        %4417 = vmatpush1.msra.mxu0 0.0
        %4418 = vmatprep.subr.mxu0 0.0
        %4419 = vmatpush1.msra.mxu0 0.0
        %4420 = vmatprep.subr.mxu0 0.0
        %4421 = vmatpush1.msra.mxu0 0.0
        %4422 = vmatprep.subr.mxu0 0.0
        %4423 = vmatpush1.msra.mxu0 0.0
        %4424 = vmatprep.subr.mxu0 0.0
        %4425 = vmatpush1.msra.mxu0 0.0
        %4426 = vmatprep.subr.mxu0 0.0
        %4427 = vmatpush1.msra.mxu0 0.0
        %4428 = vmatprep.subr.mxu0 0.0
        %4429 = vmatpush1.msra.mxu0 0.0
        %4430 = vmatprep.subr.mxu0 0.0
        %4431 = vmatpush1.msra.mxu0 0.0
        %4432 = vmatprep.subr.mxu0 0.0
        %4433 = vmatpush1.msra.mxu0 0.0
        %4434 = vmatprep.subr.mxu0 0.0
        %4435 = vmatpush1.msra.mxu0 0.0
        %4436 = vmatprep.subr.mxu0 0.0
        %4437 = vmatpush1.msra.mxu0 0.0
        %4438 = vmatprep.subr.mxu0 0.0
        %4439 = vmatpush1.msra.mxu0 0.0
        %4440 = vmatprep.subr.mxu0 0.0
        %4441 = vmatpush1.msra.mxu0 0.0
        %4442 = vmatprep.subr.mxu0 0.0
        %4443 = vmatpush1.msra.mxu0 0.0
        %4444 = vmatprep.subr.mxu0 0.0
        %4445 = vmatpush1.msra.mxu0 0.0
        %4446 = vmatprep.subr.mxu0 0.0
        %4447 = vmatpush1.msra.mxu0 0.0
        %4448 = vmatprep.subr.mxu0 0.0
        %4449 = vmatpush1.msra.mxu0 0.0
        %4450 = vmatprep.subr.mxu0 0.0
        %4451 = vmatpush1.msra.mxu0 0.0
        %4452 = vmatprep.subr.mxu0 0.0
        %4453 = vmatpush1.msra.mxu0 0.0
        %4454 = vmatprep.subr.mxu0 0.0
        %4455 = vmatpush1.msra.mxu0 0.0
        %4456 = vmatprep.subr.mxu0 0.0
        %4457 = vmatpush1.msra.mxu0 0.0
        %4458 = vmatprep.subr.mxu0 0.0
        %4459 = vmatpush1.msra.mxu0 0.0
        %4460 = vmatprep.subr.mxu0 0.0
        %4461 = vmatpush1.msra.mxu0 0.0
        %4462 = vmatprep.subr.mxu0 0.0
        %4463 = vmatpush1.msra.mxu0 0.0
        %4464 = vmatprep.subr.mxu0 0.0
        %4465 = vmatpush1.msra.mxu0 0.0
        %4466 = vmatprep.mubr.f32.mxu0 0.0
        %v4467 = vand.u32 %v4319, 4294901760
        %4468 = vmatmul.mubr.f32.gmra.mrb[0].mxu0 %v4467
        %v4469 = vpop.f32.mrb[0].mxu0
        %v4470 = vadd.f32 %v4394, %v4469
        %v4471 = vpop.f32.mrb[0].mxu0
        %4472 = vdwg.mxu0
        %4473 = vmatprep.subr.mxu0 0.0
        %v4474 = vand.u32 %v4317, 4294901760
        %v4475 = vsub.f32 %v4317, %v4474
        %4476 = vmatpush1.msra.mxu0 %v4475
        %4477 = vmatprep.subr.mxu0 0.0
        %4478 = vmatpush1.msra.mxu0 0.0
        %4479 = vmatprep.subr.mxu0 0.0
        %4480 = vmatpush1.msra.mxu0 0.0
        %4481 = vmatprep.subr.mxu0 0.0
        %4482 = vmatpush1.msra.mxu0 0.0
        %4483 = vmatprep.subr.mxu0 0.0
        %4484 = vmatpush1.msra.mxu0 0.0
        %4485 = vmatprep.subr.mxu0 0.0
        %4486 = vmatpush1.msra.mxu0 0.0
        %4487 = vmatprep.subr.mxu0 0.0
        %4488 = vmatpush1.msra.mxu0 0.0
        %4489 = vmatprep.subr.mxu0 0.0
        %4490 = vmatpush1.msra.mxu0 0.0
        %4491 = vmatprep.subr.mxu0 0.0
        %4492 = vmatpush1.msra.mxu0 0.0
        %4493 = vmatprep.subr.mxu0 0.0
        %4494 = vmatpush1.msra.mxu0 0.0
        %4495 = vmatprep.subr.mxu0 0.0
        %4496 = vmatpush1.msra.mxu0 0.0
        %4497 = vmatprep.subr.mxu0 0.0
        %4498 = vmatpush1.msra.mxu0 0.0
        %4499 = vmatprep.subr.mxu0 0.0
        %4500 = vmatpush1.msra.mxu0 0.0
        %4501 = vmatprep.subr.mxu0 0.0
        %4502 = vmatpush1.msra.mxu0 0.0
        %4503 = vmatprep.subr.mxu0 0.0
        %4504 = vmatpush1.msra.mxu0 0.0
        %4505 = vmatprep.subr.mxu0 0.0
        %4506 = vmatpush1.msra.mxu0 0.0
        %4507 = vmatprep.subr.mxu0 0.0
        %4508 = vmatpush1.msra.mxu0 0.0
        %4509 = vmatprep.subr.mxu0 0.0
        %4510 = vmatpush1.msra.mxu0 0.0
        %4511 = vmatprep.subr.mxu0 0.0
        %4512 = vmatpush1.msra.mxu0 0.0
        %4513 = vmatprep.subr.mxu0 0.0
        %4514 = vmatpush1.msra.mxu0 0.0
        %4515 = vmatprep.subr.mxu0 0.0
        %4516 = vmatpush1.msra.mxu0 0.0
        %4517 = vmatprep.subr.mxu0 0.0
        %4518 = vmatpush1.msra.mxu0 0.0
        %4519 = vmatprep.subr.mxu0 0.0
        %4520 = vmatpush1.msra.mxu0 0.0
        %4521 = vmatprep.subr.mxu0 0.0
        %4522 = vmatpush1.msra.mxu0 0.0
        %4523 = vmatprep.subr.mxu0 0.0
        %4524 = vmatpush1.msra.mxu0 0.0
        %4525 = vmatprep.subr.mxu0 0.0
        %4526 = vmatpush1.msra.mxu0 0.0
        %4527 = vmatprep.subr.mxu0 0.0
        %4528 = vmatpush1.msra.mxu0 0.0
        %4529 = vmatprep.subr.mxu0 0.0
        %4530 = vmatpush1.msra.mxu0 0.0
        %4531 = vmatprep.subr.mxu0 0.0
        %4532 = vmatpush1.msra.mxu0 0.0
        %4533 = vmatprep.subr.mxu0 0.0
        %4534 = vmatpush1.msra.mxu0 0.0
        %4535 = vmatprep.subr.mxu0 0.0
        %4536 = vmatpush1.msra.mxu0 0.0
        %4537 = vmatprep.subr.mxu0 0.0
        %4538 = vmatpush1.msra.mxu0 0.0
        %4539 = vmatprep.mubr.f32.mxu0 0.0
        %v4540 = vand.u32 %v4319, 4294901760
        %v4541 = vsub.f32 %v4319, %v4540
        %4542 = vmatmul.mubr.f32.gmra.mrb[0].mxu0 %v4541
        %v4543 = vpop.f32.mrb[0].mxu0
        %v4544 = vadd.f32 %v4470, %v4543
        %v4545 = vpop.f32.mrb[0].mxu0
        %4546 = vdwg.mxu0
        %4547 = vmatprep.subr.mxu0 0.0
        %v4548 = vand.u32 %v4317, 4294901760
        %4549 = vmatpush1.msra.mxu0 %v4548
        %4550 = vmatprep.subr.mxu0 0.0
        %4551 = vmatpush1.msra.mxu0 0.0
        %4552 = vmatprep.subr.mxu0 0.0
        %4553 = vmatpush1.msra.mxu0 0.0
        %4554 = vmatprep.subr.mxu0 0.0
        %4555 = vmatpush1.msra.mxu0 0.0
        %4556 = vmatprep.subr.mxu0 0.0
        %4557 = vmatpush1.msra.mxu0 0.0
        %4558 = vmatprep.subr.mxu0 0.0
        %4559 = vmatpush1.msra.mxu0 0.0
        %4560 = vmatprep.subr.mxu0 0.0
        %4561 = vmatpush1.msra.mxu0 0.0
        %4562 = vmatprep.subr.mxu0 0.0
        %4563 = vmatpush1.msra.mxu0 0.0
        %4564 = vmatprep.subr.mxu0 0.0
        %4565 = vmatpush1.msra.mxu0 0.0
        %4566 = vmatprep.subr.mxu0 0.0
        %4567 = vmatpush1.msra.mxu0 0.0
        %4568 = vmatprep.subr.mxu0 0.0
        %4569 = vmatpush1.msra.mxu0 0.0
        %4570 = vmatprep.subr.mxu0 0.0
        %4571 = vmatpush1.msra.mxu0 0.0
        %4572 = vmatprep.subr.mxu0 0.0
        %4573 = vmatpush1.msra.mxu0 0.0
        %4574 = vmatprep.subr.mxu0 0.0
        %4575 = vmatpush1.msra.mxu0 0.0
        %4576 = vmatprep.subr.mxu0 0.0
        %4577 = vmatpush1.msra.mxu0 0.0
        %4578 = vmatprep.subr.mxu0 0.0
        %4579 = vmatpush1.msra.mxu0 0.0
        %4580 = vmatprep.subr.mxu0 0.0
        %4581 = vmatpush1.msra.mxu0 0.0
        %4582 = vmatprep.subr.mxu0 0.0
        %4583 = vmatpush1.msra.mxu0 0.0
        %4584 = vmatprep.subr.mxu0 0.0
        %4585 = vmatpush1.msra.mxu0 0.0
        %4586 = vmatprep.subr.mxu0 0.0
        %4587 = vmatpush1.msra.mxu0 0.0
        %4588 = vmatprep.subr.mxu0 0.0
        %4589 = vmatpush1.msra.mxu0 0.0
        %4590 = vmatprep.subr.mxu0 0.0
        %4591 = vmatpush1.msra.mxu0 0.0
        %4592 = vmatprep.subr.mxu0 0.0
        %4593 = vmatpush1.msra.mxu0 0.0
        %4594 = vmatprep.subr.mxu0 0.0
        %4595 = vmatpush1.msra.mxu0 0.0
        %4596 = vmatprep.subr.mxu0 0.0
        %4597 = vmatpush1.msra.mxu0 0.0
        %4598 = vmatprep.subr.mxu0 0.0
        %4599 = vmatpush1.msra.mxu0 0.0
        %4600 = vmatprep.subr.mxu0 0.0
        %4601 = vmatpush1.msra.mxu0 0.0
        %4602 = vmatprep.subr.mxu0 0.0
        %4603 = vmatpush1.msra.mxu0 0.0
        %4604 = vmatprep.subr.mxu0 0.0
        %4605 = vmatpush1.msra.mxu0 0.0
        %4606 = vmatprep.subr.mxu0 0.0
        %4607 = vmatpush1.msra.mxu0 0.0
        %4608 = vmatprep.subr.mxu0 0.0
        %4609 = vmatpush1.msra.mxu0 0.0
        %4610 = vmatprep.subr.mxu0 0.0
        %4611 = vmatpush1.msra.mxu0 0.0
        %4612 = vmatprep.mubr.f32.mxu0 0.0
        %v4613 = vand.u32 %v4319, 4294901760
        %v4614 = vsub.f32 %v4319, %v4613
        %v4615 = vand.u32 %v4614, 4294901760
        %4616 = vmatmul.mubr.f32.gmra.mrb[0].mxu0 %v4615
        %v4617 = vpop.f32.mrb[0].mxu0
        %v4618 = vadd.f32 %v4544, %v4617
        %v4619 = vpop.f32.mrb[0].mxu0
        %4620 = vdwg.mxu0
        %4621 = vmatprep.subr.mxu0 0.0
        %v4622 = vand.u32 %v4317, 4294901760
        %v4623 = vsub.f32 %v4317, %v4622
        %v4624 = vand.u32 %v4623, 4294901760
        %4625 = vmatpush1.msra.mxu0 %v4624
        %4626 = vmatprep.subr.mxu0 0.0
        %4627 = vmatpush1.msra.mxu0 0.0
        %4628 = vmatprep.subr.mxu0 0.0
        %4629 = vmatpush1.msra.mxu0 0.0
        %4630 = vmatprep.subr.mxu0 0.0
        %4631 = vmatpush1.msra.mxu0 0.0
        %4632 = vmatprep.subr.mxu0 0.0
        %4633 = vmatpush1.msra.mxu0 0.0
        %4634 = vmatprep.subr.mxu0 0.0
        %4635 = vmatpush1.msra.mxu0 0.0
        %4636 = vmatprep.subr.mxu0 0.0
        %4637 = vmatpush1.msra.mxu0 0.0
        %4638 = vmatprep.subr.mxu0 0.0
        %4639 = vmatpush1.msra.mxu0 0.0
        %4640 = vmatprep.subr.mxu0 0.0
        %4641 = vmatpush1.msra.mxu0 0.0
        %4642 = vmatprep.subr.mxu0 0.0
        %4643 = vmatpush1.msra.mxu0 0.0
        %4644 = vmatprep.subr.mxu0 0.0
        %4645 = vmatpush1.msra.mxu0 0.0
        %4646 = vmatprep.subr.mxu0 0.0
        %4647 = vmatpush1.msra.mxu0 0.0
        %4648 = vmatprep.subr.mxu0 0.0
        %4649 = vmatpush1.msra.mxu0 0.0
        %4650 = vmatprep.subr.mxu0 0.0
        %4651 = vmatpush1.msra.mxu0 0.0
        %4652 = vmatprep.subr.mxu0 0.0
        %4653 = vmatpush1.msra.mxu0 0.0
        %4654 = vmatprep.subr.mxu0 0.0
        %4655 = vmatpush1.msra.mxu0 0.0
        %4656 = vmatprep.subr.mxu0 0.0
        %4657 = vmatpush1.msra.mxu0 0.0
        %4658 = vmatprep.subr.mxu0 0.0
        %4659 = vmatpush1.msra.mxu0 0.0
        %4660 = vmatprep.subr.mxu0 0.0
        %4661 = vmatpush1.msra.mxu0 0.0
        %4662 = vmatprep.subr.mxu0 0.0
        %4663 = vmatpush1.msra.mxu0 0.0
        %4664 = vmatprep.subr.mxu0 0.0
        %4665 = vmatpush1.msra.mxu0 0.0
        %4666 = vmatprep.subr.mxu0 0.0
        %4667 = vmatpush1.msra.mxu0 0.0
        %4668 = vmatprep.subr.mxu0 0.0
        %4669 = vmatpush1.msra.mxu0 0.0
        %4670 = vmatprep.subr.mxu0 0.0
        %4671 = vmatpush1.msra.mxu0 0.0
        %4672 = vmatprep.subr.mxu0 0.0
        %4673 = vmatpush1.msra.mxu0 0.0
        %4674 = vmatprep.subr.mxu0 0.0
        %4675 = vmatpush1.msra.mxu0 0.0
        %4676 = vmatprep.subr.mxu0 0.0
        %4677 = vmatpush1.msra.mxu0 0.0
        %4678 = vmatprep.subr.mxu0 0.0
        %4679 = vmatpush1.msra.mxu0 0.0
        %4680 = vmatprep.subr.mxu0 0.0
        %4681 = vmatpush1.msra.mxu0 0.0
        %4682 = vmatprep.subr.mxu0 0.0
        %4683 = vmatpush1.msra.mxu0 0.0
        %4684 = vmatprep.subr.mxu0 0.0
        %4685 = vmatpush1.msra.mxu0 0.0
        %4686 = vmatprep.subr.mxu0 0.0
        %4687 = vmatpush1.msra.mxu0 0.0
        %4688 = vmatprep.mubr.f32.mxu0 0.0
        %v4689 = vand.u32 %v4319, 4294901760
        %4690 = vmatmul.mubr.f32.gmra.mrb[0].mxu0 %v4689
        %v4691 = vpop.f32.mrb[0].mxu0
        %v4692 = vadd.f32 %v4618, %v4691
        %v4693 = vpop.f32.mrb[0].mxu0
        %4694 = vdwg.mxu0
        %4695 = vmatprep.subr.mxu0 0.0
        %v4696 = vand.u32 %v4317, 4294901760
        %4697 = vmatpush1.msra.mxu0 %v4696
        %4698 = vmatprep.subr.mxu0 0.0
        %4699 = vmatpush1.msra.mxu0 0.0
        %4700 = vmatprep.subr.mxu0 0.0
        %4701 = vmatpush1.msra.mxu0 0.0
        %4702 = vmatprep.subr.mxu0 0.0
        %4703 = vmatpush1.msra.mxu0 0.0
        %4704 = vmatprep.subr.mxu0 0.0
        %4705 = vmatpush1.msra.mxu0 0.0
        %4706 = vmatprep.subr.mxu0 0.0
        %4707 = vmatpush1.msra.mxu0 0.0
        %4708 = vmatprep.subr.mxu0 0.0
        %4709 = vmatpush1.msra.mxu0 0.0
        %4710 = vmatprep.subr.mxu0 0.0
        %4711 = vmatpush1.msra.mxu0 0.0
        %4712 = vmatprep.subr.mxu0 0.0
        %4713 = vmatpush1.msra.mxu0 0.0
        %4714 = vmatprep.subr.mxu0 0.0
        %4715 = vmatpush1.msra.mxu0 0.0
        %4716 = vmatprep.subr.mxu0 0.0
        %4717 = vmatpush1.msra.mxu0 0.0
        %4718 = vmatprep.subr.mxu0 0.0
        %4719 = vmatpush1.msra.mxu0 0.0
        %4720 = vmatprep.subr.mxu0 0.0
        %4721 = vmatpush1.msra.mxu0 0.0
        %4722 = vmatprep.subr.mxu0 0.0
        %4723 = vmatpush1.msra.mxu0 0.0
        %4724 = vmatprep.subr.mxu0 0.0
        %4725 = vmatpush1.msra.mxu0 0.0
        %4726 = vmatprep.subr.mxu0 0.0
        %4727 = vmatpush1.msra.mxu0 0.0
        %4728 = vmatprep.subr.mxu0 0.0
        %4729 = vmatpush1.msra.mxu0 0.0
        %4730 = vmatprep.subr.mxu0 0.0
        %4731 = vmatpush1.msra.mxu0 0.0
        %4732 = vmatprep.subr.mxu0 0.0
        %4733 = vmatpush1.msra.mxu0 0.0
        %4734 = vmatprep.subr.mxu0 0.0
        %4735 = vmatpush1.msra.mxu0 0.0
        %4736 = vmatprep.subr.mxu0 0.0
        %4737 = vmatpush1.msra.mxu0 0.0
        %4738 = vmatprep.subr.mxu0 0.0
        %4739 = vmatpush1.msra.mxu0 0.0
        %4740 = vmatprep.subr.mxu0 0.0
        %4741 = vmatpush1.msra.mxu0 0.0
        %4742 = vmatprep.subr.mxu0 0.0
        %4743 = vmatpush1.msra.mxu0 0.0
        %4744 = vmatprep.subr.mxu0 0.0
        %4745 = vmatpush1.msra.mxu0 0.0
        %4746 = vmatprep.subr.mxu0 0.0
        %4747 = vmatpush1.msra.mxu0 0.0
        %4748 = vmatprep.subr.mxu0 0.0
        %4749 = vmatpush1.msra.mxu0 0.0
        %4750 = vmatprep.subr.mxu0 0.0
        %4751 = vmatpush1.msra.mxu0 0.0
        %4752 = vmatprep.subr.mxu0 0.0
        %4753 = vmatpush1.msra.mxu0 0.0
        %4754 = vmatprep.subr.mxu0 0.0
        %4755 = vmatpush1.msra.mxu0 0.0
        %4756 = vmatprep.subr.mxu0 0.0
        %4757 = vmatpush1.msra.mxu0 0.0
        %4758 = vmatprep.subr.mxu0 0.0
        %4759 = vmatpush1.msra.mxu0 0.0
        %4760 = vmatprep.mubr.f32.mxu0 0.0
        %v4761 = vand.u32 %v4319, 4294901760
        %4762 = vmatmul.mubr.f32.gmra.mrb[0].mxu0 %v4761
        %v4763 = vpop.f32.mrb[0].mxu0
        %v4764 = vadd.f32 %v4692, %v4763
        %v4765 = vpop.f32.mrb[0].mxu0
        %4766 = vdwg.mxu0
        %v4767 = vmul.f32 %v4764, 0.00048828125
        %4769 = vset.pattern.permute.xlu0 0
        %4770 = vperm.xlu0 %4769, %v4767
        %v4771 = vpop.permute.xlu0 %4770
        %v4773 = vsub.f32 %v4222, %v4771
        %v4774 = vsub.f32 %v4224, %v4771
        %v4775 = vsub.f32 %v4304, %v4771
        %v4776 = vsub.f32 %v4306, %v4771
        %v4777 = vmul.f32 %v4773, %v4773
        %v4778 = vmul.f32 %v4774, %v4774
        %v4779 = vmul.f32 %v4775, %v4775
        %v4780 = vmul.f32 %v4776, %v4776
        %v4781 = vadd.f32 %v4777, %v4778
        %v4782 = vadd.f32 %v4781, %v4779
        %v4783 = vadd.f32 %v4782, %v4780
        %4784 = vadd.xlane.f32.xlu0 %v4783
        %v4785 = vpop.xlane.xlu0 %4784
        %4786 = vmatprep.subr.mxu0 0.0
        %v4787 = vand.u32 %v4785, 4294901760
        %4788 = vmatpush1.msra.mxu0 %v4787
        %4789 = vmatprep.subr.mxu0 0.0
        %4790 = vmatpush1.msra.mxu0 0.0
        %4791 = vmatprep.subr.mxu0 0.0
        %4792 = vmatpush1.msra.mxu0 0.0
        %4793 = vmatprep.subr.mxu0 0.0
        %4794 = vmatpush1.msra.mxu0 0.0
        %4795 = vmatprep.subr.mxu0 0.0
        %4796 = vmatpush1.msra.mxu0 0.0
        %4797 = vmatprep.subr.mxu0 0.0
        %4798 = vmatpush1.msra.mxu0 0.0
        %4799 = vmatprep.subr.mxu0 0.0
        %4800 = vmatpush1.msra.mxu0 0.0
        %4801 = vmatprep.subr.mxu0 0.0
        %4802 = vmatpush1.msra.mxu0 0.0
        %4803 = vmatprep.subr.mxu0 0.0
        %4804 = vmatpush1.msra.mxu0 0.0
        %4805 = vmatprep.subr.mxu0 0.0
        %4806 = vmatpush1.msra.mxu0 0.0
        %4807 = vmatprep.subr.mxu0 0.0
        %4808 = vmatpush1.msra.mxu0 0.0
        %4809 = vmatprep.subr.mxu0 0.0
        %4810 = vmatpush1.msra.mxu0 0.0
        %4811 = vmatprep.subr.mxu0 0.0
        %4812 = vmatpush1.msra.mxu0 0.0
        %4813 = vmatprep.subr.mxu0 0.0
        %4814 = vmatpush1.msra.mxu0 0.0
        %4815 = vmatprep.subr.mxu0 0.0
        %4816 = vmatpush1.msra.mxu0 0.0
        %4817 = vmatprep.subr.mxu0 0.0
        %4818 = vmatpush1.msra.mxu0 0.0
        %4819 = vmatprep.subr.mxu0 0.0
        %4820 = vmatpush1.msra.mxu0 0.0
        %4821 = vmatprep.subr.mxu0 0.0
        %4822 = vmatpush1.msra.mxu0 0.0
        %4823 = vmatprep.subr.mxu0 0.0
        %4824 = vmatpush1.msra.mxu0 0.0
        %4825 = vmatprep.subr.mxu0 0.0
        %4826 = vmatpush1.msra.mxu0 0.0
        %4827 = vmatprep.subr.mxu0 0.0
        %4828 = vmatpush1.msra.mxu0 0.0
        %4829 = vmatprep.subr.mxu0 0.0
        %4830 = vmatpush1.msra.mxu0 0.0
        %4831 = vmatprep.subr.mxu0 0.0
        %4832 = vmatpush1.msra.mxu0 0.0
        %4833 = vmatprep.subr.mxu0 0.0
        %4834 = vmatpush1.msra.mxu0 0.0
        %4835 = vmatprep.subr.mxu0 0.0
        %4836 = vmatpush1.msra.mxu0 0.0
        %4837 = vmatprep.subr.mxu0 0.0
        %4838 = vmatpush1.msra.mxu0 0.0
        %4839 = vmatprep.subr.mxu0 0.0
        %4840 = vmatpush1.msra.mxu0 0.0
        %4841 = vmatprep.subr.mxu0 0.0
        %4842 = vmatpush1.msra.mxu0 0.0
        %4843 = vmatprep.subr.mxu0 0.0
        %4844 = vmatpush1.msra.mxu0 0.0
        %4845 = vmatprep.subr.mxu0 0.0
        %4846 = vmatpush1.msra.mxu0 0.0
        %4847 = vmatprep.subr.mxu0 0.0
        %4848 = vmatpush1.msra.mxu0 0.0
        %4849 = vmatprep.subr.mxu0 0.0
        %4850 = vmatpush1.msra.mxu0 0.0
        %4851 = vmatprep.mubr.f32.mxu0 0.0
        %v4852 = vand.u32 %v4319, 4294901760
        %v4853 = vsub.f32 %v4319, %v4852
        %v4854 = vand.u32 %v4853, 4294901760
        %v4855 = vsub.f32 %v4853, %v4854
        %v4856 = vand.u32 %v4855, 4294901760
        %4857 = vmatmul.mubr.f32.gmra.mrb[0].mxu0 %v4856
        %v4858 = vpop.f32.mrb[0].mxu0
        %v4859 = vadd.f32 0.0, %v4858
        %v4860 = vpop.f32.mrb[0].mxu0
        %4861 = vdwg.mxu0
        %4862 = vmatprep.subr.mxu0 0.0
        %v4863 = vand.u32 %v4785, 4294901760
        %v4864 = vsub.f32 %v4785, %v4863
        %v4865 = vand.u32 %v4864, 4294901760
        %v4866 = vsub.f32 %v4864, %v4865
        %v4867 = vand.u32 %v4866, 4294901760
        %4868 = vmatpush1.msra.mxu0 %v4867
        %4869 = vmatprep.subr.mxu0 0.0
        %4870 = vmatpush1.msra.mxu0 0.0
        %4871 = vmatprep.subr.mxu0 0.0
        %4872 = vmatpush1.msra.mxu0 0.0
        %4873 = vmatprep.subr.mxu0 0.0
        %4874 = vmatpush1.msra.mxu0 0.0
        %4875 = vmatprep.subr.mxu0 0.0
        %4876 = vmatpush1.msra.mxu0 0.0
        %4877 = vmatprep.subr.mxu0 0.0
        %4878 = vmatpush1.msra.mxu0 0.0
        %4879 = vmatprep.subr.mxu0 0.0
        %4880 = vmatpush1.msra.mxu0 0.0
        %4881 = vmatprep.subr.mxu0 0.0
        %4882 = vmatpush1.msra.mxu0 0.0
        %4883 = vmatprep.subr.mxu0 0.0
        %4884 = vmatpush1.msra.mxu0 0.0
        %4885 = vmatprep.subr.mxu0 0.0
        %4886 = vmatpush1.msra.mxu0 0.0
        %4887 = vmatprep.subr.mxu0 0.0
        %4888 = vmatpush1.msra.mxu0 0.0
        %4889 = vmatprep.subr.mxu0 0.0
        %4890 = vmatpush1.msra.mxu0 0.0
        %4891 = vmatprep.subr.mxu0 0.0
        %4892 = vmatpush1.msra.mxu0 0.0
        %4893 = vmatprep.subr.mxu0 0.0
        %4894 = vmatpush1.msra.mxu0 0.0
        %4895 = vmatprep.subr.mxu0 0.0
        %4896 = vmatpush1.msra.mxu0 0.0
        %4897 = vmatprep.subr.mxu0 0.0
        %4898 = vmatpush1.msra.mxu0 0.0
        %4899 = vmatprep.subr.mxu0 0.0
        %4900 = vmatpush1.msra.mxu0 0.0
        %4901 = vmatprep.subr.mxu0 0.0
        %4902 = vmatpush1.msra.mxu0 0.0
        %4903 = vmatprep.subr.mxu0 0.0
        %4904 = vmatpush1.msra.mxu0 0.0
        %4905 = vmatprep.subr.mxu0 0.0
        %4906 = vmatpush1.msra.mxu0 0.0
        %4907 = vmatprep.subr.mxu0 0.0
        %4908 = vmatpush1.msra.mxu0 0.0
        %4909 = vmatprep.subr.mxu0 0.0
        %4910 = vmatpush1.msra.mxu0 0.0
        %4911 = vmatprep.subr.mxu0 0.0
        %4912 = vmatpush1.msra.mxu0 0.0
        %4913 = vmatprep.subr.mxu0 0.0
        %4914 = vmatpush1.msra.mxu0 0.0
        %4915 = vmatprep.subr.mxu0 0.0
        %4916 = vmatpush1.msra.mxu0 0.0
        %4917 = vmatprep.subr.mxu0 0.0
        %4918 = vmatpush1.msra.mxu0 0.0
        %4919 = vmatprep.subr.mxu0 0.0
        %4920 = vmatpush1.msra.mxu0 0.0
        %4921 = vmatprep.subr.mxu0 0.0
        %4922 = vmatpush1.msra.mxu0 0.0
        %4923 = vmatprep.subr.mxu0 0.0
        %4924 = vmatpush1.msra.mxu0 0.0
        %4925 = vmatprep.subr.mxu0 0.0
        %4926 = vmatpush1.msra.mxu0 0.0
        %4927 = vmatprep.subr.mxu0 0.0
        %4928 = vmatpush1.msra.mxu0 0.0
        %4929 = vmatprep.subr.mxu0 0.0
        %4930 = vmatpush1.msra.mxu0 0.0
        %4931 = vmatprep.mubr.f32.mxu0 0.0
        %v4932 = vand.u32 %v4319, 4294901760
        %4933 = vmatmul.mubr.f32.gmra.mrb[0].mxu0 %v4932
        %v4934 = vpop.f32.mrb[0].mxu0
        %v4935 = vadd.f32 %v4859, %v4934
        %v4936 = vpop.f32.mrb[0].mxu0
        %4937 = vdwg.mxu0
        %4938 = vmatprep.subr.mxu0 0.0
        %v4939 = vand.u32 %v4785, 4294901760
        %v4940 = vsub.f32 %v4785, %v4939
        %4941 = vmatpush1.msra.mxu0 %v4940
        %4942 = vmatprep.subr.mxu0 0.0
        %4943 = vmatpush1.msra.mxu0 0.0
        %4944 = vmatprep.subr.mxu0 0.0
        %4945 = vmatpush1.msra.mxu0 0.0
        %4946 = vmatprep.subr.mxu0 0.0
        %4947 = vmatpush1.msra.mxu0 0.0
        %4948 = vmatprep.subr.mxu0 0.0
        %4949 = vmatpush1.msra.mxu0 0.0
        %4950 = vmatprep.subr.mxu0 0.0
        %4951 = vmatpush1.msra.mxu0 0.0
        %4952 = vmatprep.subr.mxu0 0.0
        %4953 = vmatpush1.msra.mxu0 0.0
        %4954 = vmatprep.subr.mxu0 0.0
        %4955 = vmatpush1.msra.mxu0 0.0
        %4956 = vmatprep.subr.mxu0 0.0
        %4957 = vmatpush1.msra.mxu0 0.0
        %4958 = vmatprep.subr.mxu0 0.0
        %4959 = vmatpush1.msra.mxu0 0.0
        %4960 = vmatprep.subr.mxu0 0.0
        %4961 = vmatpush1.msra.mxu0 0.0
        %4962 = vmatprep.subr.mxu0 0.0
        %4963 = vmatpush1.msra.mxu0 0.0
        %4964 = vmatprep.subr.mxu0 0.0
        %4965 = vmatpush1.msra.mxu0 0.0
        %4966 = vmatprep.subr.mxu0 0.0
        %4967 = vmatpush1.msra.mxu0 0.0
        %4968 = vmatprep.subr.mxu0 0.0
        %4969 = vmatpush1.msra.mxu0 0.0
        %4970 = vmatprep.subr.mxu0 0.0
        %4971 = vmatpush1.msra.mxu0 0.0
        %4972 = vmatprep.subr.mxu0 0.0
        %4973 = vmatpush1.msra.mxu0 0.0
        %4974 = vmatprep.subr.mxu0 0.0
        %4975 = vmatpush1.msra.mxu0 0.0
        %4976 = vmatprep.subr.mxu0 0.0
        %4977 = vmatpush1.msra.mxu0 0.0
        %4978 = vmatprep.subr.mxu0 0.0
        %4979 = vmatpush1.msra.mxu0 0.0
        %4980 = vmatprep.subr.mxu0 0.0
        %4981 = vmatpush1.msra.mxu0 0.0
        %4982 = vmatprep.subr.mxu0 0.0
        %4983 = vmatpush1.msra.mxu0 0.0
        %4984 = vmatprep.subr.mxu0 0.0
        %4985 = vmatpush1.msra.mxu0 0.0
        %4986 = vmatprep.subr.mxu0 0.0
        %4987 = vmatpush1.msra.mxu0 0.0
        %4988 = vmatprep.subr.mxu0 0.0
        %4989 = vmatpush1.msra.mxu0 0.0
        %4990 = vmatprep.subr.mxu0 0.0
        %4991 = vmatpush1.msra.mxu0 0.0
        %4992 = vmatprep.subr.mxu0 0.0
        %4993 = vmatpush1.msra.mxu0 0.0
        %4994 = vmatprep.subr.mxu0 0.0
        %4995 = vmatpush1.msra.mxu0 0.0
        %4996 = vmatprep.subr.mxu0 0.0
        %4997 = vmatpush1.msra.mxu0 0.0
        %4998 = vmatprep.subr.mxu0 0.0
        %4999 = vmatpush1.msra.mxu0 0.0
        %5000 = vmatprep.subr.mxu0 0.0
        %5001 = vmatpush1.msra.mxu0 0.0
        %5002 = vmatprep.subr.mxu0 0.0
        %5003 = vmatpush1.msra.mxu0 0.0
        %5004 = vmatprep.mubr.f32.mxu0 0.0
        %v5005 = vand.u32 %v4319, 4294901760
        %v5006 = vsub.f32 %v4319, %v5005
        %5007 = vmatmul.mubr.f32.gmra.mrb[0].mxu0 %v5006
        %v5008 = vpop.f32.mrb[0].mxu0
        %v5009 = vadd.f32 %v4935, %v5008
        %v5010 = vpop.f32.mrb[0].mxu0
        %5011 = vdwg.mxu0
        %5012 = vmatprep.subr.mxu0 0.0
        %v5013 = vand.u32 %v4785, 4294901760
        %5014 = vmatpush1.msra.mxu0 %v5013
        %5015 = vmatprep.subr.mxu0 0.0
        %5016 = vmatpush1.msra.mxu0 0.0
        %5017 = vmatprep.subr.mxu0 0.0
        %5018 = vmatpush1.msra.mxu0 0.0
        %5019 = vmatprep.subr.mxu0 0.0
        %5020 = vmatpush1.msra.mxu0 0.0
        %5021 = vmatprep.subr.mxu0 0.0
        %5022 = vmatpush1.msra.mxu0 0.0
        %5023 = vmatprep.subr.mxu0 0.0
        %5024 = vmatpush1.msra.mxu0 0.0
        %5025 = vmatprep.subr.mxu0 0.0
        %5026 = vmatpush1.msra.mxu0 0.0
        %5027 = vmatprep.subr.mxu0 0.0
        %5028 = vmatpush1.msra.mxu0 0.0
        %5029 = vmatprep.subr.mxu0 0.0
        %5030 = vmatpush1.msra.mxu0 0.0
        %5031 = vmatprep.subr.mxu0 0.0
        %5032 = vmatpush1.msra.mxu0 0.0
        %5033 = vmatprep.subr.mxu0 0.0
        %5034 = vmatpush1.msra.mxu0 0.0
        %5035 = vmatprep.subr.mxu0 0.0
        %5036 = vmatpush1.msra.mxu0 0.0
        %5037 = vmatprep.subr.mxu0 0.0
        %5038 = vmatpush1.msra.mxu0 0.0
        %5039 = vmatprep.subr.mxu0 0.0
        %5040 = vmatpush1.msra.mxu0 0.0
        %5041 = vmatprep.subr.mxu0 0.0
        %5042 = vmatpush1.msra.mxu0 0.0
        %5043 = vmatprep.subr.mxu0 0.0
        %5044 = vmatpush1.msra.mxu0 0.0
        %5045 = vmatprep.subr.mxu0 0.0
        %5046 = vmatpush1.msra.mxu0 0.0
        %5047 = vmatprep.subr.mxu0 0.0
        %5048 = vmatpush1.msra.mxu0 0.0
        %5049 = vmatprep.subr.mxu0 0.0
        %5050 = vmatpush1.msra.mxu0 0.0
        %5051 = vmatprep.subr.mxu0 0.0
        %5052 = vmatpush1.msra.mxu0 0.0
        %5053 = vmatprep.subr.mxu0 0.0
        %5054 = vmatpush1.msra.mxu0 0.0
        %5055 = vmatprep.subr.mxu0 0.0
        %5056 = vmatpush1.msra.mxu0 0.0
        %5057 = vmatprep.subr.mxu0 0.0
        %5058 = vmatpush1.msra.mxu0 0.0
        %5059 = vmatprep.subr.mxu0 0.0
        %5060 = vmatpush1.msra.mxu0 0.0
        %5061 = vmatprep.subr.mxu0 0.0
        %5062 = vmatpush1.msra.mxu0 0.0
        %5063 = vmatprep.subr.mxu0 0.0
        %5064 = vmatpush1.msra.mxu0 0.0
        %5065 = vmatprep.subr.mxu0 0.0
        %5066 = vmatpush1.msra.mxu0 0.0
        %5067 = vmatprep.subr.mxu0 0.0
        %5068 = vmatpush1.msra.mxu0 0.0
        %5069 = vmatprep.subr.mxu0 0.0
        %5070 = vmatpush1.msra.mxu0 0.0
        %5071 = vmatprep.subr.mxu0 0.0
        %5072 = vmatpush1.msra.mxu0 0.0
        %5073 = vmatprep.subr.mxu0 0.0
        %5074 = vmatpush1.msra.mxu0 0.0
        %5075 = vmatprep.subr.mxu0 0.0
        %5076 = vmatpush1.msra.mxu0 0.0
        %5077 = vmatprep.mubr.f32.mxu0 0.0
        %v5078 = vand.u32 %v4319, 4294901760
        %v5079 = vsub.f32 %v4319, %v5078
        %v5080 = vand.u32 %v5079, 4294901760
        %5081 = vmatmul.mubr.f32.gmra.mrb[0].mxu0 %v5080
        %v5082 = vpop.f32.mrb[0].mxu0
        %v5083 = vadd.f32 %v5009, %v5082
        %v5084 = vpop.f32.mrb[0].mxu0
        %5085 = vdwg.mxu0
        %5086 = vmatprep.subr.mxu0 0.0
        %v5087 = vand.u32 %v4785, 4294901760
        %v5088 = vsub.f32 %v4785, %v5087
        %v5089 = vand.u32 %v5088, 4294901760
        %5090 = vmatpush1.msra.mxu0 %v5089
        %5091 = vmatprep.subr.mxu0 0.0
        %5092 = vmatpush1.msra.mxu0 0.0
        %5093 = vmatprep.subr.mxu0 0.0
        %5094 = vmatpush1.msra.mxu0 0.0
        %5095 = vmatprep.subr.mxu0 0.0
        %5096 = vmatpush1.msra.mxu0 0.0
        %5097 = vmatprep.subr.mxu0 0.0
        %5098 = vmatpush1.msra.mxu0 0.0
        %5099 = vmatprep.subr.mxu0 0.0
        %5100 = vmatpush1.msra.mxu0 0.0
        %5101 = vmatprep.subr.mxu0 0.0
        %5102 = vmatpush1.msra.mxu0 0.0
        %5103 = vmatprep.subr.mxu0 0.0
        %5104 = vmatpush1.msra.mxu0 0.0
        %5105 = vmatprep.subr.mxu0 0.0
        %5106 = vmatpush1.msra.mxu0 0.0
        %5107 = vmatprep.subr.mxu0 0.0
        %5108 = vmatpush1.msra.mxu0 0.0
        %5109 = vmatprep.subr.mxu0 0.0
        %5110 = vmatpush1.msra.mxu0 0.0
        %5111 = vmatprep.subr.mxu0 0.0
        %5112 = vmatpush1.msra.mxu0 0.0
        %5113 = vmatprep.subr.mxu0 0.0
        %5114 = vmatpush1.msra.mxu0 0.0
        %5115 = vmatprep.subr.mxu0 0.0
        %5116 = vmatpush1.msra.mxu0 0.0
        %5117 = vmatprep.subr.mxu0 0.0
        %5118 = vmatpush1.msra.mxu0 0.0
        %5119 = vmatprep.subr.mxu0 0.0
        %5120 = vmatpush1.msra.mxu0 0.0
        %5121 = vmatprep.subr.mxu0 0.0
        %5122 = vmatpush1.msra.mxu0 0.0
        %5123 = vmatprep.subr.mxu0 0.0
        %5124 = vmatpush1.msra.mxu0 0.0
        %5125 = vmatprep.subr.mxu0 0.0
        %5126 = vmatpush1.msra.mxu0 0.0
        %5127 = vmatprep.subr.mxu0 0.0
        %5128 = vmatpush1.msra.mxu0 0.0
        %5129 = vmatprep.subr.mxu0 0.0
        %5130 = vmatpush1.msra.mxu0 0.0
        %5131 = vmatprep.subr.mxu0 0.0
        %5132 = vmatpush1.msra.mxu0 0.0
        %5133 = vmatprep.subr.mxu0 0.0
        %5134 = vmatpush1.msra.mxu0 0.0
        %5135 = vmatprep.subr.mxu0 0.0
        %5136 = vmatpush1.msra.mxu0 0.0
        %5137 = vmatprep.subr.mxu0 0.0
        %5138 = vmatpush1.msra.mxu0 0.0
        %5139 = vmatprep.subr.mxu0 0.0
        %5140 = vmatpush1.msra.mxu0 0.0
        %5141 = vmatprep.subr.mxu0 0.0
        %5142 = vmatpush1.msra.mxu0 0.0
        %5143 = vmatprep.subr.mxu0 0.0
        %5144 = vmatpush1.msra.mxu0 0.0
        %5145 = vmatprep.subr.mxu0 0.0
        %5146 = vmatpush1.msra.mxu0 0.0
        %5147 = vmatprep.subr.mxu0 0.0
        %5148 = vmatpush1.msra.mxu0 0.0
        %5149 = vmatprep.subr.mxu0 0.0
        %5150 = vmatpush1.msra.mxu0 0.0
        %5151 = vmatprep.subr.mxu0 0.0
        %5152 = vmatpush1.msra.mxu0 0.0
        %5153 = vmatprep.mubr.f32.mxu0 0.0
        %v5154 = vand.u32 %v4319, 4294901760
        %5155 = vmatmul.mubr.f32.gmra.mrb[0].mxu0 %v5154
        %v5156 = vpop.f32.mrb[0].mxu0
        %v5157 = vadd.f32 %v5083, %v5156
        %v5158 = vpop.f32.mrb[0].mxu0
        %5159 = vdwg.mxu0
        %5160 = vmatprep.subr.mxu0 0.0
        %v5161 = vand.u32 %v4785, 4294901760
        %5162 = vmatpush1.msra.mxu0 %v5161
        %5163 = vmatprep.subr.mxu0 0.0
        %5164 = vmatpush1.msra.mxu0 0.0
        %5165 = vmatprep.subr.mxu0 0.0
        %5166 = vmatpush1.msra.mxu0 0.0
        %5167 = vmatprep.subr.mxu0 0.0
        %5168 = vmatpush1.msra.mxu0 0.0
        %5169 = vmatprep.subr.mxu0 0.0
        %5170 = vmatpush1.msra.mxu0 0.0
        %5171 = vmatprep.subr.mxu0 0.0
        %5172 = vmatpush1.msra.mxu0 0.0
        %5173 = vmatprep.subr.mxu0 0.0
        %5174 = vmatpush1.msra.mxu0 0.0
        %5175 = vmatprep.subr.mxu0 0.0
        %5176 = vmatpush1.msra.mxu0 0.0
        %5177 = vmatprep.subr.mxu0 0.0
        %5178 = vmatpush1.msra.mxu0 0.0
        %5179 = vmatprep.subr.mxu0 0.0
        %5180 = vmatpush1.msra.mxu0 0.0
        %5181 = vmatprep.subr.mxu0 0.0
        %5182 = vmatpush1.msra.mxu0 0.0
        %5183 = vmatprep.subr.mxu0 0.0
        %5184 = vmatpush1.msra.mxu0 0.0
        %5185 = vmatprep.subr.mxu0 0.0
        %5186 = vmatpush1.msra.mxu0 0.0
        %5187 = vmatprep.subr.mxu0 0.0
        %5188 = vmatpush1.msra.mxu0 0.0
        %5189 = vmatprep.subr.mxu0 0.0
        %5190 = vmatpush1.msra.mxu0 0.0
        %5191 = vmatprep.subr.mxu0 0.0
        %5192 = vmatpush1.msra.mxu0 0.0
        %5193 = vmatprep.subr.mxu0 0.0
        %5194 = vmatpush1.msra.mxu0 0.0
        %5195 = vmatprep.subr.mxu0 0.0
        %5196 = vmatpush1.msra.mxu0 0.0
        %5197 = vmatprep.subr.mxu0 0.0
        %5198 = vmatpush1.msra.mxu0 0.0
        %5199 = vmatprep.subr.mxu0 0.0
        %5200 = vmatpush1.msra.mxu0 0.0
        %5201 = vmatprep.subr.mxu0 0.0
        %5202 = vmatpush1.msra.mxu0 0.0
        %5203 = vmatprep.subr.mxu0 0.0
        %5204 = vmatpush1.msra.mxu0 0.0
        %5205 = vmatprep.subr.mxu0 0.0
        %5206 = vmatpush1.msra.mxu0 0.0
        %5207 = vmatprep.subr.mxu0 0.0
        %5208 = vmatpush1.msra.mxu0 0.0
        %5209 = vmatprep.subr.mxu0 0.0
        %5210 = vmatpush1.msra.mxu0 0.0
        %5211 = vmatprep.subr.mxu0 0.0
        %5212 = vmatpush1.msra.mxu0 0.0
        %5213 = vmatprep.subr.mxu0 0.0
        %5214 = vmatpush1.msra.mxu0 0.0
        %5215 = vmatprep.subr.mxu0 0.0
        %5216 = vmatpush1.msra.mxu0 0.0
        %5217 = vmatprep.subr.mxu0 0.0
        %5218 = vmatpush1.msra.mxu0 0.0
        %5219 = vmatprep.subr.mxu0 0.0
        %5220 = vmatpush1.msra.mxu0 0.0
        %5221 = vmatprep.subr.mxu0 0.0
        %5222 = vmatpush1.msra.mxu0 0.0
        %5223 = vmatprep.subr.mxu0 0.0
        %5224 = vmatpush1.msra.mxu0 0.0
        %5225 = vmatprep.mubr.f32.mxu0 0.0
        %v5226 = vand.u32 %v4319, 4294901760
        %5227 = vmatmul.mubr.f32.gmra.mrb[0].mxu0 %v5226
        %v5228 = vpop.f32.mrb[0].mxu0
        %v5229 = vadd.f32 %v5157, %v5228
        %v5230 = vpop.f32.mrb[0].mxu0
        %5231 = vdwg.mxu0
        %v5232 = vmul.f32 %v5229, 0.00048828125
        %v5233 = vadd.f32 %v5232, 1e-05
        %v5234 = vrsqrt.pop %v5233
        %5236 = vset.pattern.permute.xlu0 0
        %5237 = vperm.xlu0 %5236, %v5234
        %v5238 = vpop.permute.xlu0 %5237
        %v5240 = vmul.f32 %v4773, %v5238
        %v5241 = vmul.f32 %v4774, %v5238
        %v5242 = vmul.f32 %v4775, %v5238
        %v5243 = vmul.f32 %v4776, %v5238
        %5245 = vset.pattern.permute.xlu0 0
        %5246 = vperm.xlu0 %5245, %v4311
        %v5247 = vpop.permute.xlu0 %5246
        %v5249 = vmul.f32 %v5240, %v5247
        %v5250 = vmul.f32 %v5241, %v5247
        %v5251 = vmul.f32 %v5242, %v5247
        %v5252 = vmul.f32 %v5243, %v5247
        %5254 = vset.pattern.permute.xlu0 0
        %5255 = vperm.xlu0 %5254, %v4312
        %v5256 = vpop.permute.xlu0 %5255
        %v5258 = vadd.f32 %v5249, %v5256
        %v5259 = vadd.f32 %v5250, %v5256
        %v5260 = vadd.f32 %v5251, %v5256
        %v5261 = vadd.f32 %v5252, %v5256
        %vm5262 = vcmp.gt.f32.partialorder %v5258, 0.0
        %vm5263 = vcmp.gt.f32.partialorder %v5259, 0.0
        %vm5264 = vcmp.gt.f32.partialorder %v5260, 0.0
        %vm5265 = vcmp.gt.f32.partialorder %v5261, 0.0
        %v5266 = vmul.f32 %v5258, 0.2
        %v5267 = vmul.f32 %v5259, 0.2
        %v5268 = vmul.f32 %v5260, 0.2
        %v5269 = vmul.f32 %v5261, 0.2
        %v5270 = vsel %vm5262, %v5258, %v5266
        %v5271 = vsel %vm5263, %v5259, %v5267
        %v5272 = vsel %vm5264, %v5260, %v5268
        %v5273 = vsel %vm5265, %v5261, %v5269
        %v5274 = vld [vmem:[%s13] sm:$0xf]
        %v5275 = vpack.c.bf16 %v5270, %v5270
        %v5276 = vpack.c.bf16 %v5271, %v5271
        %v5277 = vpack.c.bf16 %v5272, %v5272
        %v5278 = vpack.c.bf16 %v5273, %v5273
        %v5280 = vsel %vm537, %v5274, 0
        %v5283 = vsel %vm1508, %v5275, 0
        %v5286 = vsel %vm1508, %v5276, 0
        %v5289 = vsel %vm1508, %v5277, 0
        %v5292 = vsel %vm1508, %v5278, 0
        %5294 = vmatprep.subr.bf16.mxu0 %v5286
        %5295 = vmatpush1.bf16.msra.mxu0 %v5283
        %5296 = vmatprep.subr.bf16.mxu0 0
        %5297 = vmatpush1.bf16.msra.mxu0 0
        %5298 = vmatprep.subr.bf16.mxu0 0
        %5299 = vmatpush1.bf16.msra.mxu0 0
        %5300 = vmatprep.subr.bf16.mxu0 0
        %5301 = vmatpush1.bf16.msra.mxu0 0
        %5302 = vmatprep.subr.bf16.mxu0 0
        %5303 = vmatpush1.bf16.msra.mxu0 0
        %5304 = vmatprep.subr.bf16.mxu0 0
        %5305 = vmatpush1.bf16.msra.mxu0 0
        %5306 = vmatprep.subr.bf16.mxu0 0
        %5307 = vmatpush1.bf16.msra.mxu0 0
        %5308 = vmatprep.subr.bf16.mxu0 0
        %5309 = vmatpush1.bf16.msra.mxu0 0
        %5310 = vmatprep.subr.bf16.mxu0 0
        %5311 = vmatpush1.bf16.msra.mxu0 0
        %5312 = vmatprep.subr.bf16.mxu0 0
        %5313 = vmatpush1.bf16.msra.mxu0 0
        %5314 = vmatprep.subr.bf16.mxu0 0
        %5315 = vmatpush1.bf16.msra.mxu0 0
        %5316 = vmatprep.subr.bf16.mxu0 0
        %5317 = vmatpush1.bf16.msra.mxu0 0
        %5318 = vmatprep.subr.bf16.mxu0 0
        %5319 = vmatpush1.bf16.msra.mxu0 0
        %5320 = vmatprep.subr.bf16.mxu0 0
        %5321 = vmatpush1.bf16.msra.mxu0 0
        %5322 = vmatprep.subr.bf16.mxu0 0
        %5323 = vmatpush1.bf16.msra.mxu0 0
        %5324 = vmatprep.subr.bf16.mxu0 0
        %5325 = vmatpush1.bf16.msra.mxu0 0
        %5326 = vmatprep.mubr.bf16.mxu0 0
        %5327 = vmatmul.mubr.bf16.gmra.mrb[0].mxu0 %v5280
        %v5328 = vpop.f32.mrb[0].mxu0
        %v5329 = vadd.f32 0.0, %v5328
        %v5330 = vpop.f32.mrb[0].mxu0
        %v5331 = vadd.f32 0.0, %v5330
        %v5332 = vpop.f32.mrb[0].mxu0
        %v5333 = vpop.f32.mrb[0].mxu0
        %5334 = vdwg.mxu0
        %5335 = vmatprep.subr.bf16.mxu0 %v5292
        %5336 = vmatpush1.bf16.msra.mxu0 %v5289
        %5337 = vmatprep.subr.bf16.mxu0 0
        %5338 = vmatpush1.bf16.msra.mxu0 0
        %5339 = vmatprep.subr.bf16.mxu0 0
        %5340 = vmatpush1.bf16.msra.mxu0 0
        %5341 = vmatprep.subr.bf16.mxu0 0
        %5342 = vmatpush1.bf16.msra.mxu0 0
        %5343 = vmatprep.subr.bf16.mxu0 0
        %5344 = vmatpush1.bf16.msra.mxu0 0
        %5345 = vmatprep.subr.bf16.mxu0 0
        %5346 = vmatpush1.bf16.msra.mxu0 0
        %5347 = vmatprep.subr.bf16.mxu0 0
        %5348 = vmatpush1.bf16.msra.mxu0 0
        %5349 = vmatprep.subr.bf16.mxu0 0
        %5350 = vmatpush1.bf16.msra.mxu0 0
        %5351 = vmatprep.subr.bf16.mxu0 0
        %5352 = vmatpush1.bf16.msra.mxu0 0
        %5353 = vmatprep.subr.bf16.mxu0 0
        %5354 = vmatpush1.bf16.msra.mxu0 0
        %5355 = vmatprep.subr.bf16.mxu0 0
        %5356 = vmatpush1.bf16.msra.mxu0 0
        %5357 = vmatprep.subr.bf16.mxu0 0
        %5358 = vmatpush1.bf16.msra.mxu0 0
        %5359 = vmatprep.subr.bf16.mxu0 0
        %5360 = vmatpush1.bf16.msra.mxu0 0
        %5361 = vmatprep.subr.bf16.mxu0 0
        %5362 = vmatpush1.bf16.msra.mxu0 0
        %5363 = vmatprep.subr.bf16.mxu0 0
        %5364 = vmatpush1.bf16.msra.mxu0 0
        %5365 = vmatprep.subr.bf16.mxu0 0
        %5366 = vmatpush1.bf16.msra.mxu0 0
        %5367 = vmatprep.mubr.bf16.mxu0 0
        %5368 = vmatmul.mubr.bf16.gmra.mrb[0].mxu0 %v5280
        %v5369 = vpop.f32.mrb[0].mxu0
        %v5370 = vadd.f32 0.0, %v5369
        %v5371 = vpop.f32.mrb[0].mxu0
        %v5372 = vadd.f32 0.0, %v5371
        %v5373 = vpop.f32.mrb[0].mxu0
        %v5374 = vpop.f32.mrb[0].mxu0
        %5375 = vdwg.mxu0
        %v5376 = vadd.f32 %v525, %v5329
        %v5377 = vadd.f32 %v526, %v5331
        %v5378 = vadd.f32 %v527, %v5370
        %v5379 = vadd.f32 %v528, %v5372
        %5380 = vst [vmem:[%s523] sm:$0xff] %v5376
        %5381 = vst [vmem:[%s523 + $0x8] sm:$0xff] %v5377
        %5382 = vst [vmem:[%s523 + $0x10] sm:$0xff] %v5378
        %5383 = vst [vmem:[%s523 + $0x18] sm:$0xff] %v5379
        %s5384 = sand.u32 %s340, 1
        %s5385 = scalar_lea.sflag [#allocation4], %s5384
        %s5386 = sand.u32 %s340, 1
        %s5387 = smul.addr %s5386, 32
        %s5388 = scalar_lea.vmem [#allocation10], %s5387
        // Predicated region
        $region93: #{tpu_custom_call.1} parent=75 // pred_check
          %p5389 = pneg %p350
        $region94: #{tpu_custom_call.1} parent=75 // pred_check_branch
          %5391 = sbr.rel (%p5389) target = $region96
        $region95: #{tpu_custom_call.1} parent=75 // pred_region
          %s5393 = ssub.s32 512, 512
          %5394 = vsyncadd %s5385, %s5393
          %s5395 = smul.addr %s33, 4
          %s5396 = smul.addr %s5395, 128
          %s5397 = scalar_lea.hbm %s14, %s5396
          %s5399 = sshll.u32 %s5388, 4
          %s5400 = int_to_ptr.vmem [resolvable:$true] %s5399
          %5402 = dma.vmem_to_hbm [thread:$0]  %s5400, 512, %s5397, %s5385
        $region96: #{tpu_custom_call.1} parent=75 // pred_fallthru
          _
      $region76: #{tpu_custom_call.1} parent=5 // pred_fallthru
        _
      %p5403 = scmp.le.s32.totalorder 2, %s28
      // Predicated region
      $region97: #{tpu_custom_call.1} parent=5 // pred_check
        %p5404 = pneg %p5403
      $region98: #{tpu_custom_call.1} parent=5 // pred_check_branch
        %5406 = sbr.rel (%p5404) target = $region100
      $region99: #{tpu_custom_call.1} parent=5 // pred_region
        %s5407 = ssub.s32 %s28, 2
        // Predicated region
        $region101: #{tpu_custom_call.1} parent=99 // pred_check
          %p5408 = pneg %p356
        $region102: #{tpu_custom_call.1} parent=99 // pred_check_branch
          %5410 = sbr.rel (%p5408) target = $region104
        $region103: #{tpu_custom_call.1} parent=99 // pred_region
          %s5411 = sand.u32 %s341, 1
          %s5412 = scalar_lea.sflag [#allocation4], %s5411
          %s5413 = sand.u32 %s341, 1
          %s5414 = smul.addr %s5413, 32
          %s5415 = scalar_lea.vmem [#allocation10], %s5414
          %5416 = dma.done %s5412, 512
        $region104: #{tpu_custom_call.1} parent=99 // pred_fallthru
          _
      $region100: #{tpu_custom_call.1} parent=5 // pred_fallthru
        _
    $region6: #{tpu_custom_call.1} parent=1 // loop_footer
      %s32 = sadd.s32 1, %s28
    $region7: #{tpu_custom_call.1} parent=1 // loop_footer_branch
      %27 = sbr.rel target = $region3
    $region8: #{tpu_custom_call.1} parent=1 // loop_exit
      _
    %5417 = vsyncpa [#allocation3], 1
    %s5418 = scalar_lea.sflag [#allocation3], 1
    %5419 = vsyncpa %s5418, 1
    %5420 = vsyncpa [#allocation6], 1
    %5421 = vsyncpa [#allocation9], 1
    %5422 = vsyncpa [#allocation4], 1
    %s5423 = scalar_lea.sflag [#allocation4], 1
    %5424 = vsyncpa %s5423, 1

</llo_original>
